<compile_context>
chip_gen: v5e
topology: v5e:2x2
jax: 0.10.0
libtpu: 0.0.40
codegen_flags: <defaults>
</compile_context>

<pallas_src>
import functools
import math

import jax
import jax.numpy as jnp
from jax import lax
from jax.experimental import pallas as pl
from jax.experimental.pallas import tpu as pltpu


def _round_up(x, m):
    return ((x + m - 1) // m) * m


# ----------------------------- in-kernel layers ---------------------------- #

def _conv3x3_s2_lrelu_layer(src_ref, dst_ref, w_ref, b_ref, *, h, w,
                            negative_slope, n_tile):
    """3x3 / stride-2 / pad-1 conv + bias + LeakyReLU between flattened,
    zero-ring-padded VMEM buffers.

    src_ref: ((h+2)*(w+2), cin)        flattened padded input activation
    dst_ref: ((h//2+2)*(w//2+2), cout) flattened padded output activation
    w_ref:   (3, 3, cin, cout)         conv weight (channels lane-padded)
    b_ref:   (1, cout)                 bias (f32)
    """
    ho, wo = h // 2, w // 2
    wp = w + 2                      # source row pitch
    wpo = wo + 2                    # destination row pitch
    cout = dst_ref.shape[-1]
    act_dtype = dst_ref.dtype

    # ---- zero only the 1-pixel ring; the interior is fully rewritten below ----
    dst_ref[pl.ds(0, wpo + 1), :] = jnp.zeros((wpo + 1, cout), act_dtype)
    for r in range(1, ho):          # adjacent right-pad(row r) / left-pad(row r+1)
        dst_ref[pl.ds((r + 1) * wpo - 1, 2), :] = jnp.zeros((2, cout), act_dtype)
    dst_ref[pl.ds((ho + 1) * wpo - 1, wpo + 1), :] = (
        jnp.zeros((wpo + 1, cout), act_dtype))

    bias = b_ref[...]               # (1, cout) f32, hoisted out of all loops

    # ---- row-blocked tap matmuls: M = rcur * wo ~ 128 output pixels ----
    rblk = max(1, min(ho, (128 + wo - 1) // wo))
    n_tiles = (cout + n_tile - 1) // n_tile

    for r0 in range(0, ho, rblk):               # static, Python-unrolled
        rcur = min(rblk, ho - r0)
        for nt in range(n_tiles):               # 1 tile unless cout > 256
            n0 = nt * n_tile
            acc = jnp.zeros((rcur * wo, n_tile), jnp.float32)
            for kh in range(3):
                for kw in range(3):
                    rows = []
                    for r in range(rcur):
                        start = (2 * (r0 + r) + kh) * wp + kw
                        if wo == 1:
                            rows.append(src_ref[pl.ds(start, 1), :])
                        else:
                            # stride-2 column gather as a strided VMEM load
                            rows.append(src_ref[pl.ds(start, wo, stride=2), :])
                    tap = rows[0] if rcur == 1 else jnp.concatenate(rows, axis=0)
                    if n_tiles == 1:
                        wtap = w_ref[kh, kw]
                    else:
                        wtap = w_ref[kh, kw, :, pl.ds(n0, n_tile)]
                    acc = acc + jnp.dot(tap, wtap,
                                        preferred_element_type=jnp.float32)
            b_nt = bias if n_tiles == 1 else bias[:, n0:n0 + n_tile]
            y = acc + b_nt
            y = jnp.where(y >= 0.0, y, negative_slope * y)        # LeakyReLU
            y = y.astype(act_dtype)
            for r in range(rcur):               # store each output row's interior
                off = (r0 + r + 1) * wpo + 1
                if n_tiles == 1:
                    dst_ref[pl.ds(off, wo), :] = y[r * wo:(r + 1) * wo, :]
                else:
                    dst_ref[pl.ds(off, wo), pl.ds(n0, n_tile)] = (
                        y[r * wo:(r + 1) * wo, :])


def _gsb_fused_kernel(*refs, layer_hw, negative_slope, n_tile):
    """Fused GradualStyleBlock forward for ONE image (grid = batch)."""
    nl = len(layer_hw)
    x_ref = refs[0]
    conv_w = [refs[1 + 2 * l] for l in range(nl)]
    conv_b = [refs[2 + 2 * l] for l in range(nl)]
    wlin_ref = refs[1 + 2 * nl]
    blin_ref = refs[2 + 2 * nl]
    out_ref = refs[3 + 2 * nl]
    act = list(refs[4 + 2 * nl:])               # per-layer activation scratch

    src = x_ref
    for l in range(nl):
        h, w = layer_hw[l]
        _conv3x3_s2_lrelu_layer(src, act[l], conv_w[l], conv_b[l],
                                h=h, w=w, negative_slope=negative_slope,
                                n_tile=n_tile)
        src = act[l]

    # Final spatial is 1x1: feature vector sits at padded flat position 1*3+1=4.
    feat = src[pl.ds(4, 1), :]                                   # (1, cp)
    out = jnp.dot(feat, wlin_ref[...],
                  preferred_element_type=jnp.float32) + blin_ref[...]
    out_ref[...] = out.astype(out_ref.dtype)


# ------------------------- params: init & preparation ---------------------- #

def init_gradual_style_block(key, in_c, out_c, spatial):
    """Deterministic init matching the PyTorch module's parameter shapes."""
    num_pools = int(math.log2(spatial))
    convs = []
    cin = in_c
    for _ in range(num_pools):
        key, kw_, kb_ = jax.random.split(key, 3)
        bound = 1.0 / math.sqrt(cin * 9)
        w = jax.random.uniform(kw_, (3, 3, cin, out_c), jnp.float32, -bound, bound)
        b = jax.random.uniform(kb_, (out_c,), jnp.float32, -bound, bound)
        convs.append((w, b))
        cin = out_c
    key, kw_, kb_ = jax.random.split(key, 3)
    bound = 1.0 / math.sqrt(out_c)
    lw = jax.random.uniform(kw_, (out_c, out_c), jnp.float32, -bound, bound)  # torch (out, in)
    lb = jax.random.uniform(kb_, (out_c,), jnp.float32, -bound, bound)
    return {"convs": convs, "linear": (lw, lb)}


def prepare_params(params, in_c, out_c, matmul_dtype=jnp.float32):
    """One-time prep: lane-pad all channel dims to multiples of 128 and
    pre-transpose the linear weight.  Use matmul_dtype=jnp.bfloat16 for
    production 512-channel shapes (accumulation stays f32 in-kernel)."""
    cp = _round_up(out_c, 128)
    cin0_p = _round_up(in_c, 128)
    conv_w, conv_b = [], []
    for li, (w, b) in enumerate(params["convs"]):
        cin = w.shape[2]
        cin_p = cin0_p if li == 0 else cp
        wpad = jnp.zeros((3, 3, cin_p, cp), matmul_dtype)
        wpad = wpad.at[:, :, :cin, :out_c].set(w.astype(matmul_dtype))
        bpad = jnp.zeros((1, cp), jnp.float32).at[0, :out_c].set(b)
        conv_w.append(wpad)
        conv_b.append(bpad)
    lw, lb = params["linear"]
    wlin = jnp.zeros((cp, cp), matmul_dtype).at[:out_c, :out_c].set(
        lw.T.astype(matmul_dtype))               # precomputed transpose (x @ W.T)
    blin = jnp.zeros((1, cp), jnp.float32).at[0, :out_c].set(lb)
    return {"conv_w": conv_w, "conv_b": conv_b, "wlin": wlin, "blin": blin}


# --------------------------------- forward --------------------------------- #

def _pick_vmem_limit_bytes():
    """Generation-gated scoped-VMEM limit (review: raise it on v5e/v6e)."""
    try:
        kind = jax.devices()[0].device_kind.lower()
    except Exception:
        kind = ""
    if "v5" in kind or "v6" in kind:
        return 100 * 1024 * 1024       # 128 MiB physical VMEM on v5e/v6e
    return 48 * 1024 * 1024            # conservative for v7x (64 MiB physical)


@functools.partial(jax.jit, static_argnames=("out_c",))
def gradual_style_block_forward(prepped, x_nchw, *, out_c):
    conv_w, conv_b = prepped["conv_w"], prepped["conv_b"]
    wlin, blin = prepped["wlin"], prepped["blin"]
    num_layers = len(conv_w)

    n, cin, h, w = x_nchw.shape
    assert h == w and h == 2 ** num_layers, "spatial must equal 2**num_convs"
    cp = wlin.shape[0]
    cin_p = conv_w[0].shape[2]
    cdtype = conv_w[0].dtype
    n_tile = cp if cp <= 256 else 256

    # NCHW -> NHWC, cast, zero-pad spatial ring + channel lanes, flatten spatial.
    x = jnp.transpose(x_nchw, (0, 2, 3, 1)).astype(cdtype)
    x = jnp.pad(x, ((0, 0), (1, 1), (1, 1), (0, cin_p - cin)))
    hp = h + 2
    x = x.reshape(n, hp * hp, cin_p)

    layer_hw = []
    hh = h
    for _ in range(num_layers):
        layer_hw.append((hh, hh))
        hh //= 2

    # Input: one flattened padded image per grid step (batch dim squeezed).
    in_specs = [pl.BlockSpec((None, hp * hp, cin_p), lambda i: (i, 0, 0))]
    flat_params = []
    for l in range(num_layers):
        flat_params += [conv_w[l], conv_b[l]]
    flat_params += [wlin, blin]
    for arr in flat_params:            # weights/biases resident across the grid
        in_specs.append(pl.BlockSpec(arr.shape, lambda i, _nd=arr.ndim: (0,) * _nd))

    # Per-layer flattened padded activation scratch, stored in compute dtype.
    scratch_shapes = []
    for (hh_l, _) in layer_hw:
        so = hh_l // 2 + 2
        scratch_shapes.append(pltpu.VMEM((so * so, cp), cdtype))

    # Advisory cost estimate for XLA's scheduler.
    flops = 0
    for l, (hh_l, _) in enumerate(layer_hw):
        cin_l = cin_p if l == 0 else cp
        flops += 2 * n * (hh_l // 2) ** 2 * 9 * cin_l * cp
    flops += 2 * n * cp * cp
    bytes_accessed = (x.size * x.dtype.itemsize
                      + sum(a.size * a.dtype.itemsize for a in flat_params)
                      + n * cp * 4)

    kernel = functools.partial(
        _gsb_fused_kernel,
        layer_hw=tuple(layer_hw),
        negative_slope=0.01,                 # nn.LeakyReLU() default
        n_tile=n_tile,
    )

    out = pl.pallas_call(
        kernel,
        out_shape=jax.ShapeDtypeStruct((n, 1, cp), jnp.float32),
        grid_spec=pltpu.PrefetchScalarGridSpec(
            num_scalar_prefetch=0,
            grid=(n,),
            in_specs=in_specs,
            out_specs=pl.BlockSpec((None, 1, cp), lambda i: (i, 0, 0)),
            scratch_shapes=scratch_shapes,
        ),
        compiler_params=pltpu.CompilerParams(
            dimension_semantics=("parallel",),      # batch across v7x's 2 TCs
            vmem_limit_bytes=_pick_vmem_limit_bytes(),
        ),
        cost_estimate=pl.CostEstimate(flops=int(flops), transcendentals=0,
                                      bytes_accessed=int(bytes_accessed)),
    )(x, *flat_params)

    # One slice at the very end removes the lane padding.
    return out.reshape(n, cp)[:, :out_c]


# ----------------------------- pure-JAX reference -------------------------- #

def _reference_forward(params, x_nchw, out_c):
    x = jnp.transpose(x_nchw, (0, 2, 3, 1))
    for w, b in params["convs"]:
        x = lax.conv_general_dilated(
            x, w, window_strides=(2, 2), padding=((1, 1), (1, 1)),
            dimension_numbers=("NHWC", "HWIO", "NHWC"))
        x = x + b
        x = jnp.where(x >= 0, x, 0.01 * x)
    x = x.reshape(-1, out_c)
    lw, lb = params["linear"]
    return x @ lw.T + lb


# ----------------------------------- main ----------------------------------- #

if __name__ == "__main__":
    key = jax.random.PRNGKey(0)
    batch, in_c, out_c, spatial = 2, 4, 32, 16   # 4 convs: 16 -> 8 -> 4 -> 2 -> 1

    key, kp, kx = jax.random.split(key, 3)
    params = init_gradual_style_block(kp, in_c, out_c, spatial)
    x = jax.random.normal(kx, (batch, in_c, spatial, spatial), jnp.float32)  # NCHW

    # float32 matmuls here for an exact check; use jnp.bfloat16 for production
    # 512-channel shapes on v6e/v7x (epilogue / accumulation stays f32).
    prepped = prepare_params(params, in_c, out_c, matmul_dtype=jnp.float32)

    out = gradual_style_block_forward(prepped, x, out_c=out_c)
    out = jax.block_until_ready(out)
    assert out.shape == (batch, out_c), out.shape

    ref = jax.block_until_ready(_reference_forward(params, x, out_c))
    err = float(jnp.max(jnp.abs(out - ref)))
    assert jnp.allclose(out, ref, atol=1e-4, rtol=1e-4), err

    print("KERNEL_OK")
</pallas_src>

<mosaic_0001>
module attributes {stable_mosaic.version = 11 : i64} {
  func.func @_gsb_fused_kernel(%arg0: i32, %arg1: memref<1x324x128xf32, #tpu.memory_space<vmem>>, %arg2: memref<3x3x128x128xf32, #tpu.memory_space<vmem>>, %arg3: memref<1x128xf32, #tpu.memory_space<vmem>>, %arg4: memref<3x3x128x128xf32, #tpu.memory_space<vmem>>, %arg5: memref<1x128xf32, #tpu.memory_space<vmem>>, %arg6: memref<3x3x128x128xf32, #tpu.memory_space<vmem>>, %arg7: memref<1x128xf32, #tpu.memory_space<vmem>>, %arg8: memref<3x3x128x128xf32, #tpu.memory_space<vmem>>, %arg9: memref<1x128xf32, #tpu.memory_space<vmem>>, %arg10: memref<128x128xf32, #tpu.memory_space<vmem>>, %arg11: memref<1x128xf32, #tpu.memory_space<vmem>>, %arg12: memref<1x1x128xf32, #tpu.memory_space<vmem>>, %arg13: memref<100x128xf32, #tpu.memory_space<vmem>>, %arg14: memref<36x128xf32, #tpu.memory_space<vmem>>, %arg15: memref<16x128xf32, #tpu.memory_space<vmem>>, %arg16: memref<9x128xf32, #tpu.memory_space<vmem>>) attributes {dimension_semantics = [#tpu.dimension_semantics<parallel>], iteration_bounds = array<i64: 2>, scalar_prefetch = 0 : i64, scratch_operands = 4 : i64, tpu.core_type = #tpu.core_type<tc>, window_params = [{transform_indices = @transform_0, window_bounds = array<i64: 1, 324, 128>}, {pipeline_mode = #tpu.pipeline_mode<synchronous>, transform_indices = @transform_1, window_bounds = array<i64: 3, 3, 128, 128>}, {pipeline_mode = #tpu.pipeline_mode<synchronous>, transform_indices = @transform_2, window_bounds = array<i64: 1, 128>}, {pipeline_mode = #tpu.pipeline_mode<synchronous>, transform_indices = @transform_3, window_bounds = array<i64: 3, 3, 128, 128>}, {pipeline_mode = #tpu.pipeline_mode<synchronous>, transform_indices = @transform_4, window_bounds = array<i64: 1, 128>}, {pipeline_mode = #tpu.pipeline_mode<synchronous>, transform_indices = @transform_5, window_bounds = array<i64: 3, 3, 128, 128>}, {pipeline_mode = #tpu.pipeline_mode<synchronous>, transform_indices = @transform_6, window_bounds = array<i64: 1, 128>}, {pipeline_mode = #tpu.pipeline_mode<synchronous>, transform_indices = @transform_7, window_bounds = array<i64: 3, 3, 128, 128>}, {pipeline_mode = #tpu.pipeline_mode<synchronous>, transform_indices = @transform_8, window_bounds = array<i64: 1, 128>}, {pipeline_mode = #tpu.pipeline_mode<synchronous>, transform_indices = @transform_9, window_bounds = array<i64: 128, 128>}, {pipeline_mode = #tpu.pipeline_mode<synchronous>, transform_indices = @transform_10, window_bounds = array<i64: 1, 128>}, {transform_indices = @transform_11, window_bounds = array<i64: 1, 1, 128>}]} {
    %cst = arith.constant 0.000000e+00 : f32
    %0 = vector.broadcast %cst : f32 to vector<11x128xf32>
    %c0 = arith.constant 0 : index
    %c0_0 = arith.constant 0 : index
    %1 = vector.load %arg13[%c0, %c0_0] : memref<100x128xf32, #tpu.memory_space<vmem>>, vector<11x128xf32>
    tpu.vector_store %arg13[%c0, %c0_0], %0 {strides = array<i32>} : memref<100x128xf32, #tpu.memory_space<vmem>>, vector<11x128xf32>,
    %cst_1 = arith.constant 0.000000e+00 : f32
    %2 = vector.broadcast %cst_1 : f32 to vector<2x128xf32>
    %c19 = arith.constant 19 : index
    %c0_2 = arith.constant 0 : index
    %3 = vector.load %arg13[%c19, %c0_2] : memref<100x128xf32, #tpu.memory_space<vmem>>, vector<2x128xf32>
    tpu.vector_store %arg13[%c19, %c0_2], %2 {strides = array<i32>} : memref<100x128xf32, #tpu.memory_space<vmem>>, vector<2x128xf32>,
    %cst_3 = arith.constant 0.000000e+00 : f32
    %4 = vector.broadcast %cst_3 : f32 to vector<2x128xf32>
    %c29 = arith.constant 29 : index
    %c0_4 = arith.constant 0 : index
    %5 = vector.load %arg13[%c29, %c0_4] : memref<100x128xf32, #tpu.memory_space<vmem>>, vector<2x128xf32>
    tpu.vector_store %arg13[%c29, %c0_4], %4 {strides = array<i32>} : memref<100x128xf32, #tpu.memory_space<vmem>>, vector<2x128xf32>,
    %cst_5 = arith.constant 0.000000e+00 : f32
    %6 = vector.broadcast %cst_5 : f32 to vector<2x128xf32>
    %c39 = arith.constant 39 : index
    %c0_6 = arith.constant 0 : index
    %7 = vector.load %arg13[%c39, %c0_6] : memref<100x128xf32, #tpu.memory_space<vmem>>, vector<2x128xf32>
    tpu.vector_store %arg13[%c39, %c0_6], %6 {strides = array<i32>} : memref<100x128xf32, #tpu.memory_space<vmem>>, vector<2x128xf32>,
    %cst_7 = arith.constant 0.000000e+00 : f32
    %8 = vector.broadcast %cst_7 : f32 to vector<2x128xf32>
    %c49 = arith.constant 49 : index
    %c0_8 = arith.constant 0 : index
    %9 = vector.load %arg13[%c49, %c0_8] : memref<100x128xf32, #tpu.memory_space<vmem>>, vector<2x128xf32>
    tpu.vector_store %arg13[%c49, %c0_8], %8 {strides = array<i32>} : memref<100x128xf32, #tpu.memory_space<vmem>>, vector<2x128xf32>,
    %cst_9 = arith.constant 0.000000e+00 : f32
    %10 = vector.broadcast %cst_9 : f32 to vector<2x128xf32>
    %c59 = arith.constant 59 : index
    %c0_10 = arith.constant 0 : index
    %11 = vector.load %arg13[%c59, %c0_10] : memref<100x128xf32, #tpu.memory_space<vmem>>, vector<2x128xf32>
    tpu.vector_store %arg13[%c59, %c0_10], %10 {strides = array<i32>} : memref<100x128xf32, #tpu.memory_space<vmem>>, vector<2x128xf32>,
    %cst_11 = arith.constant 0.000000e+00 : f32
    %12 = vector.broadcast %cst_11 : f32 to vector<2x128xf32>
    %c69 = arith.constant 69 : index
    %c0_12 = arith.constant 0 : index
    %13 = vector.load %arg13[%c69, %c0_12] : memref<100x128xf32, #tpu.memory_space<vmem>>, vector<2x128xf32>
    tpu.vector_store %arg13[%c69, %c0_12], %12 {strides = array<i32>} : memref<100x128xf32, #tpu.memory_space<vmem>>, vector<2x128xf32>,
    %cst_13 = arith.constant 0.000000e+00 : f32
    %14 = vector.broadcast %cst_13 : f32 to vector<2x128xf32>
    %c79 = arith.constant 79 : index
    %c0_14 = arith.constant 0 : index
    %15 = vector.load %arg13[%c79, %c0_14] : memref<100x128xf32, #tpu.memory_space<vmem>>, vector<2x128xf32>
    tpu.vector_store %arg13[%c79, %c0_14], %14 {strides = array<i32>} : memref<100x128xf32, #tpu.memory_space<vmem>>, vector<2x128xf32>,
    %cst_15 = arith.constant 0.000000e+00 : f32
    %16 = vector.broadcast %cst_15 : f32 to vector<11x128xf32>
    %c89 = arith.constant 89 : index
    %c0_16 = arith.constant 0 : index
    %17 = vector.load %arg13[%c89, %c0_16] : memref<100x128xf32, #tpu.memory_space<vmem>>, vector<11x128xf32>
    tpu.vector_store %arg13[%c89, %c0_16], %16 {strides = array<i32>} : memref<100x128xf32, #tpu.memory_space<vmem>>, vector<11x128xf32>,
    %c0_17 = arith.constant 0 : index
    %c0_18 = arith.constant 0 : index
    %18 = vector.load %arg3[%c0_17, %c0_18] : memref<1x128xf32, #tpu.memory_space<vmem>>, vector<1x128xf32>
    %cst_19 = arith.constant 0.000000e+00 : f32
    %19 = vector.broadcast %cst_19 : f32 to vector<64x128xf32>
    %c0_20 = arith.constant 0 : index
    %c0_21 = arith.constant 0 : index
    %c0_22 = arith.constant 0 : index
    %20 = tpu.strided_load %arg1[%c0_20, %c0_21, %c0_22] {strides = array<i32: 1, 2, 1>} : memref<1x324x128xf32, #tpu.memory_space<vmem>>, vector<1x8x128xf32>
    %21 = vector.shape_cast %20 : vector<1x8x128xf32> to vector<8x128xf32>
    %c0_23 = arith.constant 0 : index
    %c36 = arith.constant 36 : index
    %c0_24 = arith.constant 0 : index
    %22 = tpu.strided_load %arg1[%c0_23, %c36, %c0_24] {strides = array<i32: 1, 2, 1>} : memref<1x324x128xf32, #tpu.memory_space<vmem>>, vector<1x8x128xf32>
    %23 = vector.shape_cast %22 : vector<1x8x128xf32> to vector<8x128xf32>
    %c0_25 = arith.constant 0 : index
    %c72 = arith.constant 72 : index
    %c0_26 = arith.constant 0 : index
    %24 = tpu.strided_load %arg1[%c0_25, %c72, %c0_26] {strides = array<i32: 1, 2, 1>} : memref<1x324x128xf32, #tpu.memory_space<vmem>>, vector<1x8x128xf32>
    %25 = vector.shape_cast %24 : vector<1x8x128xf32> to vector<8x128xf32>
    %c0_27 = arith.constant 0 : index
    %c108 = arith.constant 108 : index
    %c0_28 = arith.constant 0 : index
    %26 = tpu.strided_load %arg1[%c0_27, %c108, %c0_28] {strides = array<i32: 1, 2, 1>} : memref<1x324x128xf32, #tpu.memory_space<vmem>>, vector<1x8x128xf32>
    %27 = vector.shape_cast %26 : vector<1x8x128xf32> to vector<8x128xf32>
    %c0_29 = arith.constant 0 : index
    %c144 = arith.constant 144 : index
    %c0_30 = arith.constant 0 : index
    %28 = tpu.strided_load %arg1[%c0_29, %c144, %c0_30] {strides = array<i32: 1, 2, 1>} : memref<1x324x128xf32, #tpu.memory_space<vmem>>, vector<1x8x128xf32>
    %29 = vector.shape_cast %28 : vector<1x8x128xf32> to vector<8x128xf32>
    %c0_31 = arith.constant 0 : index
    %c180 = arith.constant 180 : index
    %c0_32 = arith.constant 0 : index
    %30 = tpu.strided_load %arg1[%c0_31, %c180, %c0_32] {strides = array<i32: 1, 2, 1>} : memref<1x324x128xf32, #tpu.memory_space<vmem>>, vector<1x8x128xf32>
    %31 = vector.shape_cast %30 : vector<1x8x128xf32> to vector<8x128xf32>
    %c0_33 = arith.constant 0 : index
    %c216 = arith.constant 216 : index
    %c0_34 = arith.constant 0 : index
    %32 = tpu.strided_load %arg1[%c0_33, %c216, %c0_34] {strides = array<i32: 1, 2, 1>} : memref<1x324x128xf32, #tpu.memory_space<vmem>>, vector<1x8x128xf32>
    %33 = vector.shape_cast %32 : vector<1x8x128xf32> to vector<8x128xf32>
    %c0_35 = arith.constant 0 : index
    %c252 = arith.constant 252 : index
    %c0_36 = arith.constant 0 : index
    %34 = tpu.strided_load %arg1[%c0_35, %c252, %c0_36] {strides = array<i32: 1, 2, 1>} : memref<1x324x128xf32, #tpu.memory_space<vmem>>, vector<1x8x128xf32>
    %35 = vector.shape_cast %34 : vector<1x8x128xf32> to vector<8x128xf32>
    %36 = tpu.concatenate %21, %23, %25, %27, %29, %31, %33, %35 in 0 : vector<8x128xf32>, vector<8x128xf32>, vector<8x128xf32>, vector<8x128xf32>, vector<8x128xf32>, vector<8x128xf32>, vector<8x128xf32>, vector<8x128xf32> -> vector<64x128xf32>
    %c0_37 = arith.constant 0 : index
    %c0_38 = arith.constant 0 : index
    %c0_39 = arith.constant 0 : index
    %c0_40 = arith.constant 0 : index
    %37 = vector.load %arg2[%c0_37, %c0_38, %c0_39, %c0_40] : memref<3x3x128x128xf32, #tpu.memory_space<vmem>>, vector<1x1x128x128xf32>
    %38 = vector.shape_cast %37 : vector<1x1x128x128xf32> to vector<128x128xf32>
    %cst_41 = arith.constant dense<0.000000e+00> : vector<64x128xf32>
    %39 = tpu.matmul %36, %38, %cst_41 {dimension_numbers = #tpu.dot_dimension_numbers<[1], [0], [0], [1], [0, 0, 1, 1], [], []>} : vector<64x128xf32>, vector<128x128xf32>, vector<64x128xf32> -> vector<64x128xf32>
    %40 = arith.addf %19, %39 : vector<64x128xf32>
    %c0_42 = arith.constant 0 : index
    %c1 = arith.constant 1 : index
    %c0_43 = arith.constant 0 : index
    %41 = tpu.strided_load %arg1[%c0_42, %c1, %c0_43] {strides = array<i32: 1, 2, 1>} : memref<1x324x128xf32, #tpu.memory_space<vmem>>, vector<1x8x128xf32>
    %42 = vector.shape_cast %41 : vector<1x8x128xf32> to vector<8x128xf32>
    %c0_44 = arith.constant 0 : index
    %c37 = arith.constant 37 : index
    %c0_45 = arith.constant 0 : index
    %43 = tpu.strided_load %arg1[%c0_44, %c37, %c0_45] {strides = array<i32: 1, 2, 1>} : memref<1x324x128xf32, #tpu.memory_space<vmem>>, vector<1x8x128xf32>
    %44 = vector.shape_cast %43 : vector<1x8x128xf32> to vector<8x128xf32>
    %c0_46 = arith.constant 0 : index
    %c73 = arith.constant 73 : index
    %c0_47 = arith.constant 0 : index
    %45 = tpu.strided_load %arg1[%c0_46, %c73, %c0_47] {strides = array<i32: 1, 2, 1>} : memref<1x324x128xf32, #tpu.memory_space<vmem>>, vector<1x8x128xf32>
    %46 = vector.shape_cast %45 : vector<1x8x128xf32> to vector<8x128xf32>
    %c0_48 = arith.constant 0 : index
    %c109 = arith.constant 109 : index
    %c0_49 = arith.constant 0 : index
    %47 = tpu.strided_load %arg1[%c0_48, %c109, %c0_49] {strides = array<i32: 1, 2, 1>} : memref<1x324x128xf32, #tpu.memory_space<vmem>>, vector<1x8x128xf32>
    %48 = vector.shape_cast %47 : vector<1x8x128xf32> to vector<8x128xf32>
    %c0_50 = arith.constant 0 : index
    %c145 = arith.constant 145 : index
    %c0_51 = arith.constant 0 : index
    %49 = tpu.strided_load %arg1[%c0_50, %c145, %c0_51] {strides = array<i32: 1, 2, 1>} : memref<1x324x128xf32, #tpu.memory_space<vmem>>, vector<1x8x128xf32>
    %50 = vector.shape_cast %49 : vector<1x8x128xf32> to vector<8x128xf32>
    %c0_52 = arith.constant 0 : index
    %c181 = arith.constant 181 : index
    %c0_53 = arith.constant 0 : index
    %51 = tpu.strided_load %arg1[%c0_52, %c181, %c0_53] {strides = array<i32: 1, 2, 1>} : memref<1x324x128xf32, #tpu.memory_space<vmem>>, vector<1x8x128xf32>
    %52 = vector.shape_cast %51 : vector<1x8x128xf32> to vector<8x128xf32>
    %c0_54 = arith.constant 0 : index
    %c217 = arith.constant 217 : index
    %c0_55 = arith.constant 0 : index
    %53 = tpu.strided_load %arg1[%c0_54, %c217, %c0_55] {strides = array<i32: 1, 2, 1>} : memref<1x324x128xf32, #tpu.memory_space<vmem>>, vector<1x8x128xf32>
    %54 = vector.shape_cast %53 : vector<1x8x128xf32> to vector<8x128xf32>
    %c0_56 = arith.constant 0 : index
    %c253 = arith.constant 253 : index
    %c0_57 = arith.constant 0 : index
    %55 = tpu.strided_load %arg1[%c0_56, %c253, %c0_57] {strides = array<i32: 1, 2, 1>} : memref<1x324x128xf32, #tpu.memory_space<vmem>>, vector<1x8x128xf32>
    %56 = vector.shape_cast %55 : vector<1x8x128xf32> to vector<8x128xf32>
    %57 = tpu.concatenate %42, %44, %46, %48, %50, %52, %54, %56 in 0 : vector<8x128xf32>, vector<8x128xf32>, vector<8x128xf32>, vector<8x128xf32>, vector<8x128xf32>, vector<8x128xf32>, vector<8x128xf32>, vector<8x128xf32> -> vector<64x128xf32>
    %c0_58 = arith.constant 0 : index
    %c1_59 = arith.constant 1 : index
    %c0_60 = arith.constant 0 : index
    %c0_61 = arith.constant 0 : index
    %58 = vector.load %arg2[%c0_58, %c1_59, %c0_60, %c0_61] : memref<3x3x128x128xf32, #tpu.memory_space<vmem>>, vector<1x1x128x128xf32>
    %59 = vector.shape_cast %58 : vector<1x1x128x128xf32> to vector<128x128xf32>
    %cst_62 = arith.constant dense<0.000000e+00> : vector<64x128xf32>
    %60 = tpu.matmul %57, %59, %cst_62 {dimension_numbers = #tpu.dot_dimension_numbers<[1], [0], [0], [1], [0, 0, 1, 1], [], []>} : vector<64x128xf32>, vector<128x128xf32>, vector<64x128xf32> -> vector<64x128xf32>
    %61 = arith.addf %40, %60 : vector<64x128xf32>
    %c0_63 = arith.constant 0 : index
    %c2 = arith.constant 2 : index
    %c0_64 = arith.constant 0 : index
    %62 = tpu.strided_load %arg1[%c0_63, %c2, %c0_64] {strides = array<i32: 1, 2, 1>} : memref<1x324x128xf32, #tpu.memory_space<vmem>>, vector<1x8x128xf32>
    %63 = vector.shape_cast %62 : vector<1x8x128xf32> to vector<8x128xf32>
    %c0_65 = arith.constant 0 : index
    %c38 = arith.constant 38 : index
    %c0_66 = arith.constant 0 : index
    %64 = tpu.strided_load %arg1[%c0_65, %c38, %c0_66] {strides = array<i32: 1, 2, 1>} : memref<1x324x128xf32, #tpu.memory_space<vmem>>, vector<1x8x128xf32>
    %65 = vector.shape_cast %64 : vector<1x8x128xf32> to vector<8x128xf32>
    %c0_67 = arith.constant 0 : index
    %c74 = arith.constant 74 : index
    %c0_68 = arith.constant 0 : index
    %66 = tpu.strided_load %arg1[%c0_67, %c74, %c0_68] {strides = array<i32: 1, 2, 1>} : memref<1x324x128xf32, #tpu.memory_space<vmem>>, vector<1x8x128xf32>
    %67 = vector.shape_cast %66 : vector<1x8x128xf32> to vector<8x128xf32>
    %c0_69 = arith.constant 0 : index
    %c110 = arith.constant 110 : index
    %c0_70 = arith.constant 0 : index
    %68 = tpu.strided_load %arg1[%c0_69, %c110, %c0_70] {strides = array<i32: 1, 2, 1>} : memref<1x324x128xf32, #tpu.memory_space<vmem>>, vector<1x8x128xf32>
    %69 = vector.shape_cast %68 : vector<1x8x128xf32> to vector<8x128xf32>
    %c0_71 = arith.constant 0 : index
    %c146 = arith.constant 146 : index
    %c0_72 = arith.constant 0 : index
    %70 = tpu.strided_load %arg1[%c0_71, %c146, %c0_72] {strides = array<i32: 1, 2, 1>} : memref<1x324x128xf32, #tpu.memory_space<vmem>>, vector<1x8x128xf32>
    %71 = vector.shape_cast %70 : vector<1x8x128xf32> to vector<8x128xf32>
    %c0_73 = arith.constant 0 : index
    %c182 = arith.constant 182 : index
    %c0_74 = arith.constant 0 : index
    %72 = tpu.strided_load %arg1[%c0_73, %c182, %c0_74] {strides = array<i32: 1, 2, 1>} : memref<1x324x128xf32, #tpu.memory_space<vmem>>, vector<1x8x128xf32>
    %73 = vector.shape_cast %72 : vector<1x8x128xf32> to vector<8x128xf32>
    %c0_75 = arith.constant 0 : index
    %c218 = arith.constant 218 : index
    %c0_76 = arith.constant 0 : index
    %74 = tpu.strided_load %arg1[%c0_75, %c218, %c0_76] {strides = array<i32: 1, 2, 1>} : memref<1x324x128xf32, #tpu.memory_space<vmem>>, vector<1x8x128xf32>
    %75 = vector.shape_cast %74 : vector<1x8x128xf32> to vector<8x128xf32>
    %c0_77 = arith.constant 0 : index
    %c254 = arith.constant 254 : index
    %c0_78 = arith.constant 0 : index
    %76 = tpu.strided_load %arg1[%c0_77, %c254, %c0_78] {strides = array<i32: 1, 2, 1>} : memref<1x324x128xf32, #tpu.memory_space<vmem>>, vector<1x8x128xf32>
    %77 = vector.shape_cast %76 : vector<1x8x128xf32> to vector<8x128xf32>
    %78 = tpu.concatenate %63, %65, %67, %69, %71, %73, %75, %77 in 0 : vector<8x128xf32>, vector<8x128xf32>, vector<8x128xf32>, vector<8x128xf32>, vector<8x128xf32>, vector<8x128xf32>, vector<8x128xf32>, vector<8x128xf32> -> vector<64x128xf32>
    %c0_79 = arith.constant 0 : index
    %c2_80 = arith.constant 2 : index
    %c0_81 = arith.constant 0 : index
    %c0_82 = arith.constant 0 : index
    %79 = vector.load %arg2[%c0_79, %c2_80, %c0_81, %c0_82] : memref<3x3x128x128xf32, #tpu.memory_space<vmem>>, vector<1x1x128x128xf32>
    %80 = vector.shape_cast %79 : vector<1x1x128x128xf32> to vector<128x128xf32>
    %cst_83 = arith.constant dense<0.000000e+00> : vector<64x128xf32>
    %81 = tpu.matmul %78, %80, %cst_83 {dimension_numbers = #tpu.dot_dimension_numbers<[1], [0], [0], [1], [0, 0, 1, 1], [], []>} : vector<64x128xf32>, vector<128x128xf32>, vector<64x128xf32> -> vector<64x128xf32>
    %82 = arith.addf %61, %81 : vector<64x128xf32>
    %c0_84 = arith.constant 0 : index
    %c18 = arith.constant 18 : index
    %c0_85 = arith.constant 0 : index
    %83 = tpu.strided_load %arg1[%c0_84, %c18, %c0_85] {strides = array<i32: 1, 2, 1>} : memref<1x324x128xf32, #tpu.memory_space<vmem>>, vector<1x8x128xf32>
    %84 = vector.shape_cast %83 : vector<1x8x128xf32> to vector<8x128xf32>
    %c0_86 = arith.constant 0 : index
    %c54 = arith.constant 54 : index
    %c0_87 = arith.constant 0 : index
    %85 = tpu.strided_load %arg1[%c0_86, %c54, %c0_87] {strides = array<i32: 1, 2, 1>} : memref<1x324x128xf32, #tpu.memory_space<vmem>>, vector<1x8x128xf32>
    %86 = vector.shape_cast %85 : vector<1x8x128xf32> to vector<8x128xf32>
    %c0_88 = arith.constant 0 : index
    %c90 = arith.constant 90 : index
    %c0_89 = arith.constant 0 : index
    %87 = tpu.strided_load %arg1[%c0_88, %c90, %c0_89] {strides = array<i32: 1, 2, 1>} : memref<1x324x128xf32, #tpu.memory_space<vmem>>, vector<1x8x128xf32>
    %88 = vector.shape_cast %87 : vector<1x8x128xf32> to vector<8x128xf32>
    %c0_90 = arith.constant 0 : index
    %c126 = arith.constant 126 : index
    %c0_91 = arith.constant 0 : index
    %89 = tpu.strided_load %arg1[%c0_90, %c126, %c0_91] {strides = array<i32: 1, 2, 1>} : memref<1x324x128xf32, #tpu.memory_space<vmem>>, vector<1x8x128xf32>
    %90 = vector.shape_cast %89 : vector<1x8x128xf32> to vector<8x128xf32>
    %c0_92 = arith.constant 0 : index
    %c162 = arith.constant 162 : index
    %c0_93 = arith.constant 0 : index
    %91 = tpu.strided_load %arg1[%c0_92, %c162, %c0_93] {strides = array<i32: 1, 2, 1>} : memref<1x324x128xf32, #tpu.memory_space<vmem>>, vector<1x8x128xf32>
    %92 = vector.shape_cast %91 : vector<1x8x128xf32> to vector<8x128xf32>
    %c0_94 = arith.constant 0 : index
    %c198 = arith.constant 198 : index
    %c0_95 = arith.constant 0 : index
    %93 = tpu.strided_load %arg1[%c0_94, %c198, %c0_95] {strides = array<i32: 1, 2, 1>} : memref<1x324x128xf32, #tpu.memory_space<vmem>>, vector<1x8x128xf32>
    %94 = vector.shape_cast %93 : vector<1x8x128xf32> to vector<8x128xf32>
    %c0_96 = arith.constant 0 : index
    %c234 = arith.constant 234 : index
    %c0_97 = arith.constant 0 : index
    %95 = tpu.strided_load %arg1[%c0_96, %c234, %c0_97] {strides = array<i32: 1, 2, 1>} : memref<1x324x128xf32, #tpu.memory_space<vmem>>, vector<1x8x128xf32>
    %96 = vector.shape_cast %95 : vector<1x8x128xf32> to vector<8x128xf32>
    %c0_98 = arith.constant 0 : index
    %c270 = arith.constant 270 : index
    %c0_99 = arith.constant 0 : index
    %97 = tpu.strided_load %arg1[%c0_98, %c270, %c0_99] {strides = array<i32: 1, 2, 1>} : memref<1x324x128xf32, #tpu.memory_space<vmem>>, vector<1x8x128xf32>
    %98 = vector.shape_cast %97 : vector<1x8x128xf32> to vector<8x128xf32>
    %99 = tpu.concatenate %84, %86, %88, %90, %92, %94, %96, %98 in 0 : vector<8x128xf32>, vector<8x128xf32>, vector<8x128xf32>, vector<8x128xf32>, vector<8x128xf32>, vector<8x128xf32>, vector<8x128xf32>, vector<8x128xf32> -> vector<64x128xf32>
    %c1_100 = arith.constant 1 : index
    %c0_101 = arith.constant 0 : index
    %c0_102 = arith.constant 0 : index
    %c0_103 = arith.constant 0 : index
    %100 = vector.load %arg2[%c1_100, %c0_101, %c0_102, %c0_103] : memref<3x3x128x128xf32, #tpu.memory_space<vmem>>, vector<1x1x128x128xf32>
    %101 = vector.shape_cast %100 : vector<1x1x128x128xf32> to vector<128x128xf32>
    %cst_104 = arith.constant dense<0.000000e+00> : vector<64x128xf32>
    %102 = tpu.matmul %99, %101, %cst_104 {dimension_numbers = #tpu.dot_dimension_numbers<[1], [0], [0], [1], [0, 0, 1, 1], [], []>} : vector<64x128xf32>, vector<128x128xf32>, vector<64x128xf32> -> vector<64x128xf32>
    %103 = arith.addf %82, %102 : vector<64x128xf32>
    %c0_105 = arith.constant 0 : index
    %c19_106 = arith.constant 19 : index
    %c0_107 = arith.constant 0 : index
    %104 = tpu.strided_load %arg1[%c0_105, %c19_106, %c0_107] {strides = array<i32: 1, 2, 1>} : memref<1x324x128xf32, #tpu.memory_space<vmem>>, vector<1x8x128xf32>
    %105 = vector.shape_cast %104 : vector<1x8x128xf32> to vector<8x128xf32>
    %c0_108 = arith.constant 0 : index
    %c55 = arith.constant 55 : index
    %c0_109 = arith.constant 0 : index
    %106 = tpu.strided_load %arg1[%c0_108, %c55, %c0_109] {strides = array<i32: 1, 2, 1>} : memref<1x324x128xf32, #tpu.memory_space<vmem>>, vector<1x8x128xf32>
    %107 = vector.shape_cast %106 : vector<1x8x128xf32> to vector<8x128xf32>
    %c0_110 = arith.constant 0 : index
    %c91 = arith.constant 91 : index
    %c0_111 = arith.constant 0 : index
    %108 = tpu.strided_load %arg1[%c0_110, %c91, %c0_111] {strides = array<i32: 1, 2, 1>} : memref<1x324x128xf32, #tpu.memory_space<vmem>>, vector<1x8x128xf32>
    %109 = vector.shape_cast %108 : vector<1x8x128xf32> to vector<8x128xf32>
    %c0_112 = arith.constant 0 : index
    %c127 = arith.constant 127 : index
    %c0_113 = arith.constant 0 : index
    %110 = tpu.strided_load %arg1[%c0_112, %c127, %c0_113] {strides = array<i32: 1, 2, 1>} : memref<1x324x128xf32, #tpu.memory_space<vmem>>, vector<1x8x128xf32>
    %111 = vector.shape_cast %110 : vector<1x8x128xf32> to vector<8x128xf32>
    %c0_114 = arith.constant 0 : index
    %c163 = arith.constant 163 : index
    %c0_115 = arith.constant 0 : index
    %112 = tpu.strided_load %arg1[%c0_114, %c163, %c0_115] {strides = array<i32: 1, 2, 1>} : memref<1x324x128xf32, #tpu.memory_space<vmem>>, vector<1x8x128xf32>
    %113 = vector.shape_cast %112 : vector<1x8x128xf32> to vector<8x128xf32>
    %c0_116 = arith.constant 0 : index
    %c199 = arith.constant 199 : index
    %c0_117 = arith.constant 0 : index
    %114 = tpu.strided_load %arg1[%c0_116, %c199, %c0_117] {strides = array<i32: 1, 2, 1>} : memref<1x324x128xf32, #tpu.memory_space<vmem>>, vector<1x8x128xf32>
    %115 = vector.shape_cast %114 : vector<1x8x128xf32> to vector<8x128xf32>
    %c0_118 = arith.constant 0 : index
    %c235 = arith.constant 235 : index
    %c0_119 = arith.constant 0 : index
    %116 = tpu.strided_load %arg1[%c0_118, %c235, %c0_119] {strides = array<i32: 1, 2, 1>} : memref<1x324x128xf32, #tpu.memory_space<vmem>>, vector<1x8x128xf32>
    %117 = vector.shape_cast %116 : vector<1x8x128xf32> to vector<8x128xf32>
    %c0_120 = arith.constant 0 : index
    %c271 = arith.constant 271 : index
    %c0_121 = arith.constant 0 : index
    %118 = tpu.strided_load %arg1[%c0_120, %c271, %c0_121] {strides = array<i32: 1, 2, 1>} : memref<1x324x128xf32, #tpu.memory_space<vmem>>, vector<1x8x128xf32>
    %119 = vector.shape_cast %118 : vector<1x8x128xf32> to vector<8x128xf32>
    %120 = tpu.concatenate %105, %107, %109, %111, %113, %115, %117, %119 in 0 : vector<8x128xf32>, vector<8x128xf32>, vector<8x128xf32>, vector<8x128xf32>, vector<8x128xf32>, vector<8x128xf32>, vector<8x128xf32>, vector<8x128xf32> -> vector<64x128xf32>
    %c1_122 = arith.constant 1 : index
    %c1_123 = arith.constant 1 : index
    %c0_124 = arith.constant 0 : index
    %c0_125 = arith.constant 0 : index
    %121 = vector.load %arg2[%c1_122, %c1_123, %c0_124, %c0_125] : memref<3x3x128x128xf32, #tpu.memory_space<vmem>>, vector<1x1x128x128xf32>
    %122 = vector.shape_cast %121 : vector<1x1x128x128xf32> to vector<128x128xf32>
    %cst_126 = arith.constant dense<0.000000e+00> : vector<64x128xf32>
    %123 = tpu.matmul %120, %122, %cst_126 {dimension_numbers = #tpu.dot_dimension_numbers<[1], [0], [0], [1], [0, 0, 1, 1], [], []>} : vector<64x128xf32>, vector<128x128xf32>, vector<64x128xf32> -> vector<64x128xf32>
    %124 = arith.addf %103, %123 : vector<64x128xf32>
    %c0_127 = arith.constant 0 : index
    %c20 = arith.constant 20 : index
    %c0_128 = arith.constant 0 : index
    %125 = tpu.strided_load %arg1[%c0_127, %c20, %c0_128] {strides = array<i32: 1, 2, 1>} : memref<1x324x128xf32, #tpu.memory_space<vmem>>, vector<1x8x128xf32>
    %126 = vector.shape_cast %125 : vector<1x8x128xf32> to vector<8x128xf32>
    %c0_129 = arith.constant 0 : index
    %c56 = arith.constant 56 : index
    %c0_130 = arith.constant 0 : index
    %127 = tpu.strided_load %arg1[%c0_129, %c56, %c0_130] {strides = array<i32: 1, 2, 1>} : memref<1x324x128xf32, #tpu.memory_space<vmem>>, vector<1x8x128xf32>
    %128 = vector.shape_cast %127 : vector<1x8x128xf32> to vector<8x128xf32>
    %c0_131 = arith.constant 0 : index
    %c92 = arith.constant 92 : index
    %c0_132 = arith.constant 0 : index
    %129 = tpu.strided_load %arg1[%c0_131, %c92, %c0_132] {strides = array<i32: 1, 2, 1>} : memref<1x324x128xf32, #tpu.memory_space<vmem>>, vector<1x8x128xf32>
    %130 = vector.shape_cast %129 : vector<1x8x128xf32> to vector<8x128xf32>
    %c0_133 = arith.constant 0 : index
    %c128 = arith.constant 128 : index
    %c0_134 = arith.constant 0 : index
    %131 = tpu.strided_load %arg1[%c0_133, %c128, %c0_134] {strides = array<i32: 1, 2, 1>} : memref<1x324x128xf32, #tpu.memory_space<vmem>>, vector<1x8x128xf32>
    %132 = vector.shape_cast %131 : vector<1x8x128xf32> to vector<8x128xf32>
    %c0_135 = arith.constant 0 : index
    %c164 = arith.constant 164 : index
    %c0_136 = arith.constant 0 : index
    %133 = tpu.strided_load %arg1[%c0_135, %c164, %c0_136] {strides = array<i32: 1, 2, 1>} : memref<1x324x128xf32, #tpu.memory_space<vmem>>, vector<1x8x128xf32>
    %134 = vector.shape_cast %133 : vector<1x8x128xf32> to vector<8x128xf32>
    %c0_137 = arith.constant 0 : index
    %c200 = arith.constant 200 : index
    %c0_138 = arith.constant 0 : index
    %135 = tpu.strided_load %arg1[%c0_137, %c200, %c0_138] {strides = array<i32: 1, 2, 1>} : memref<1x324x128xf32, #tpu.memory_space<vmem>>, vector<1x8x128xf32>
    %136 = vector.shape_cast %135 : vector<1x8x128xf32> to vector<8x128xf32>
    %c0_139 = arith.constant 0 : index
    %c236 = arith.constant 236 : index
    %c0_140 = arith.constant 0 : index
    %137 = tpu.strided_load %arg1[%c0_139, %c236, %c0_140] {strides = array<i32: 1, 2, 1>} : memref<1x324x128xf32, #tpu.memory_space<vmem>>, vector<1x8x128xf32>
    %138 = vector.shape_cast %137 : vector<1x8x128xf32> to vector<8x128xf32>
    %c0_141 = arith.constant 0 : index
    %c272 = arith.constant 272 : index
    %c0_142 = arith.constant 0 : index
    %139 = tpu.strided_load %arg1[%c0_141, %c272, %c0_142] {strides = array<i32: 1, 2, 1>} : memref<1x324x128xf32, #tpu.memory_space<vmem>>, vector<1x8x128xf32>
    %140 = vector.shape_cast %139 : vector<1x8x128xf32> to vector<8x128xf32>
    %141 = tpu.concatenate %126, %128, %130, %132, %134, %136, %138, %140 in 0 : vector<8x128xf32>, vector<8x128xf32>, vector<8x128xf32>, vector<8x128xf32>, vector<8x128xf32>, vector<8x128xf32>, vector<8x128xf32>, vector<8x128xf32> -> vector<64x128xf32>
    %c1_143 = arith.constant 1 : index
    %c2_144 = arith.constant 2 : index
    %c0_145 = arith.constant 0 : index
    %c0_146 = arith.constant 0 : index
    %142 = vector.load %arg2[%c1_143, %c2_144, %c0_145, %c0_146] : memref<3x3x128x128xf32, #tpu.memory_space<vmem>>, vector<1x1x128x128xf32>
    %143 = vector.shape_cast %142 : vector<1x1x128x128xf32> to vector<128x128xf32>
    %cst_147 = arith.constant dense<0.000000e+00> : vector<64x128xf32>
    %144 = tpu.matmul %141, %143, %cst_147 {dimension_numbers = #tpu.dot_dimension_numbers<[1], [0], [0], [1], [0, 0, 1, 1], [], []>} : vector<64x128xf32>, vector<128x128xf32>, vector<64x128xf32> -> vector<64x128xf32>
    %145 = arith.addf %124, %144 : vector<64x128xf32>
    %c0_148 = arith.constant 0 : index
    %c36_149 = arith.constant 36 : index
    %c0_150 = arith.constant 0 : index
    %146 = tpu.strided_load %arg1[%c0_148, %c36_149, %c0_150] {strides = array<i32: 1, 2, 1>} : memref<1x324x128xf32, #tpu.memory_space<vmem>>, vector<1x8x128xf32>
    %147 = vector.shape_cast %146 : vector<1x8x128xf32> to vector<8x128xf32>
    %c0_151 = arith.constant 0 : index
    %c72_152 = arith.constant 72 : index
    %c0_153 = arith.constant 0 : index
    %148 = tpu.strided_load %arg1[%c0_151, %c72_152, %c0_153] {strides = array<i32: 1, 2, 1>} : memref<1x324x128xf32, #tpu.memory_space<vmem>>, vector<1x8x128xf32>
    %149 = vector.shape_cast %148 : vector<1x8x128xf32> to vector<8x128xf32>
    %c0_154 = arith.constant 0 : index
    %c108_155 = arith.constant 108 : index
    %c0_156 = arith.constant 0 : index
    %150 = tpu.strided_load %arg1[%c0_154, %c108_155, %c0_156] {strides = array<i32: 1, 2, 1>} : memref<1x324x128xf32, #tpu.memory_space<vmem>>, vector<1x8x128xf32>
    %151 = vector.shape_cast %150 : vector<1x8x128xf32> to vector<8x128xf32>
    %c0_157 = arith.constant 0 : index
    %c144_158 = arith.constant 144 : index
    %c0_159 = arith.constant 0 : index
    %152 = tpu.strided_load %arg1[%c0_157, %c144_158, %c0_159] {strides = array<i32: 1, 2, 1>} : memref<1x324x128xf32, #tpu.memory_space<vmem>>, vector<1x8x128xf32>
    %153 = vector.shape_cast %152 : vector<1x8x128xf32> to vector<8x128xf32>
    %c0_160 = arith.constant 0 : index
    %c180_161 = arith.constant 180 : index
    %c0_162 = arith.constant 0 : index
    %154 = tpu.strided_load %arg1[%c0_160, %c180_161, %c0_162] {strides = array<i32: 1, 2, 1>} : memref<1x324x128xf32, #tpu.memory_space<vmem>>, vector<1x8x128xf32>
    %155 = vector.shape_cast %154 : vector<1x8x128xf32> to vector<8x128xf32>
    %c0_163 = arith.constant 0 : index
    %c216_164 = arith.constant 216 : index
    %c0_165 = arith.constant 0 : index
    %156 = tpu.strided_load %arg1[%c0_163, %c216_164, %c0_165] {strides = array<i32: 1, 2, 1>} : memref<1x324x128xf32, #tpu.memory_space<vmem>>, vector<1x8x128xf32>
    %157 = vector.shape_cast %156 : vector<1x8x128xf32> to vector<8x128xf32>
    %c0_166 = arith.constant 0 : index
    %c252_167 = arith.constant 252 : index
    %c0_168 = arith.constant 0 : index
    %158 = tpu.strided_load %arg1[%c0_166, %c252_167, %c0_168] {strides = array<i32: 1, 2, 1>} : memref<1x324x128xf32, #tpu.memory_space<vmem>>, vector<1x8x128xf32>
    %159 = vector.shape_cast %158 : vector<1x8x128xf32> to vector<8x128xf32>
    %c0_169 = arith.constant 0 : index
    %c288 = arith.constant 288 : index
    %c0_170 = arith.constant 0 : index
    %160 = tpu.strided_load %arg1[%c0_169, %c288, %c0_170] {strides = array<i32: 1, 2, 1>} : memref<1x324x128xf32, #tpu.memory_space<vmem>>, vector<1x8x128xf32>
    %161 = vector.shape_cast %160 : vector<1x8x128xf32> to vector<8x128xf32>
    %162 = tpu.concatenate %147, %149, %151, %153, %155, %157, %159, %161 in 0 : vector<8x128xf32>, vector<8x128xf32>, vector<8x128xf32>, vector<8x128xf32>, vector<8x128xf32>, vector<8x128xf32>, vector<8x128xf32>, vector<8x128xf32> -> vector<64x128xf32>
    %c2_171 = arith.constant 2 : index
    %c0_172 = arith.constant 0 : index
    %c0_173 = arith.constant 0 : index
    %c0_174 = arith.constant 0 : index
    %163 = vector.load %arg2[%c2_171, %c0_172, %c0_173, %c0_174] : memref<3x3x128x128xf32, #tpu.memory_space<vmem>>, vector<1x1x128x128xf32>
    %164 = vector.shape_cast %163 : vector<1x1x128x128xf32> to vector<128x128xf32>
    %cst_175 = arith.constant dense<0.000000e+00> : vector<64x128xf32>
    %165 = tpu.matmul %162, %164, %cst_175 {dimension_numbers = #tpu.dot_dimension_numbers<[1], [0], [0], [1], [0, 0, 1, 1], [], []>} : vector<64x128xf32>, vector<128x128xf32>, vector<64x128xf32> -> vector<64x128xf32>
    %166 = arith.addf %145, %165 : vector<64x128xf32>
    %c0_176 = arith.constant 0 : index
    %c37_177 = arith.constant 37 : index
    %c0_178 = arith.constant 0 : index
    %167 = tpu.strided_load %arg1[%c0_176, %c37_177, %c0_178] {strides = array<i32: 1, 2, 1>} : memref<1x324x128xf32, #tpu.memory_space<vmem>>, vector<1x8x128xf32>
    %168 = vector.shape_cast %167 : vector<1x8x128xf32> to vector<8x128xf32>
    %c0_179 = arith.constant 0 : index
    %c73_180 = arith.constant 73 : index
    %c0_181 = arith.constant 0 : index
    %169 = tpu.strided_load %arg1[%c0_179, %c73_180, %c0_181] {strides = array<i32: 1, 2, 1>} : memref<1x324x128xf32, #tpu.memory_space<vmem>>, vector<1x8x128xf32>
    %170 = vector.shape_cast %169 : vector<1x8x128xf32> to vector<8x128xf32>
    %c0_182 = arith.constant 0 : index
    %c109_183 = arith.constant 109 : index
    %c0_184 = arith.constant 0 : index
    %171 = tpu.strided_load %arg1[%c0_182, %c109_183, %c0_184] {strides = array<i32: 1, 2, 1>} : memref<1x324x128xf32, #tpu.memory_space<vmem>>, vector<1x8x128xf32>
    %172 = vector.shape_cast %171 : vector<1x8x128xf32> to vector<8x128xf32>
    %c0_185 = arith.constant 0 : index
    %c145_186 = arith.constant 145 : index
    %c0_187 = arith.constant 0 : index
    %173 = tpu.strided_load %arg1[%c0_185, %c145_186, %c0_187] {strides = array<i32: 1, 2, 1>} : memref<1x324x128xf32, #tpu.memory_space<vmem>>, vector<1x8x128xf32>
    %174 = vector.shape_cast %173 : vector<1x8x128xf32> to vector<8x128xf32>
    %c0_188 = arith.constant 0 : index
    %c181_189 = arith.constant 181 : index
    %c0_190 = arith.constant 0 : index
    %175 = tpu.strided_load %arg1[%c0_188, %c181_189, %c0_190] {strides = array<i32: 1, 2, 1>} : memref<1x324x128xf32, #tpu.memory_space<vmem>>, vector<1x8x128xf32>
    %176 = vector.shape_cast %175 : vector<1x8x128xf32> to vector<8x128xf32>
    %c0_191 = arith.constant 0 : index
    %c217_192 = arith.constant 217 : index
    %c0_193 = arith.constant 0 : index
    %177 = tpu.strided_load %arg1[%c0_191, %c217_192, %c0_193] {strides = array<i32: 1, 2, 1>} : memref<1x324x128xf32, #tpu.memory_space<vmem>>, vector<1x8x128xf32>
    %178 = vector.shape_cast %177 : vector<1x8x128xf32> to vector<8x128xf32>
    %c0_194 = arith.constant 0 : index
    %c253_195 = arith.constant 253 : index
    %c0_196 = arith.constant 0 : index
    %179 = tpu.strided_load %arg1[%c0_194, %c253_195, %c0_196] {strides = array<i32: 1, 2, 1>} : memref<1x324x128xf32, #tpu.memory_space<vmem>>, vector<1x8x128xf32>
    %180 = vector.shape_cast %179 : vector<1x8x128xf32> to vector<8x128xf32>
    %c0_197 = arith.constant 0 : index
    %c289 = arith.constant 289 : index
    %c0_198 = arith.constant 0 : index
    %181 = tpu.strided_load %arg1[%c0_197, %c289, %c0_198] {strides = array<i32: 1, 2, 1>} : memref<1x324x128xf32, #tpu.memory_space<vmem>>, vector<1x8x128xf32>
    %182 = vector.shape_cast %181 : vector<1x8x128xf32> to vector<8x128xf32>
    %183 = tpu.concatenate %168, %170, %172, %174, %176, %178, %180, %182 in 0 : vector<8x128xf32>, vector<8x128xf32>, vector<8x128xf32>, vector<8x128xf32>, vector<8x128xf32>, vector<8x128xf32>, vector<8x128xf32>, vector<8x128xf32> -> vector<64x128xf32>
    %c2_199 = arith.constant 2 : index
    %c1_200 = arith.constant 1 : index
    %c0_201 = arith.constant 0 : index
    %c0_202 = arith.constant 0 : index
    %184 = vector.load %arg2[%c2_199, %c1_200, %c0_201, %c0_202] : memref<3x3x128x128xf32, #tpu.memory_space<vmem>>, vector<1x1x128x128xf32>
    %185 = vector.shape_cast %184 : vector<1x1x128x128xf32> to vector<128x128xf32>
    %cst_203 = arith.constant dense<0.000000e+00> : vector<64x128xf32>
    %186 = tpu.matmul %183, %185, %cst_203 {dimension_numbers = #tpu.dot_dimension_numbers<[1], [0], [0], [1], [0, 0, 1, 1], [], []>} : vector<64x128xf32>, vector<128x128xf32>, vector<64x128xf32> -> vector<64x128xf32>
    %187 = arith.addf %166, %186 : vector<64x128xf32>
    %c0_204 = arith.constant 0 : index
    %c38_205 = arith.constant 38 : index
    %c0_206 = arith.constant 0 : index
    %188 = tpu.strided_load %arg1[%c0_204, %c38_205, %c0_206] {strides = array<i32: 1, 2, 1>} : memref<1x324x128xf32, #tpu.memory_space<vmem>>, vector<1x8x128xf32>
    %189 = vector.shape_cast %188 : vector<1x8x128xf32> to vector<8x128xf32>
    %c0_207 = arith.constant 0 : index
    %c74_208 = arith.constant 74 : index
    %c0_209 = arith.constant 0 : index
    %190 = tpu.strided_load %arg1[%c0_207, %c74_208, %c0_209] {strides = array<i32: 1, 2, 1>} : memref<1x324x128xf32, #tpu.memory_space<vmem>>, vector<1x8x128xf32>
    %191 = vector.shape_cast %190 : vector<1x8x128xf32> to vector<8x128xf32>
    %c0_210 = arith.constant 0 : index
    %c110_211 = arith.constant 110 : index
    %c0_212 = arith.constant 0 : index
    %192 = tpu.strided_load %arg1[%c0_210, %c110_211, %c0_212] {strides = array<i32: 1, 2, 1>} : memref<1x324x128xf32, #tpu.memory_space<vmem>>, vector<1x8x128xf32>
    %193 = vector.shape_cast %192 : vector<1x8x128xf32> to vector<8x128xf32>
    %c0_213 = arith.constant 0 : index
    %c146_214 = arith.constant 146 : index
    %c0_215 = arith.constant 0 : index
    %194 = tpu.strided_load %arg1[%c0_213, %c146_214, %c0_215] {strides = array<i32: 1, 2, 1>} : memref<1x324x128xf32, #tpu.memory_space<vmem>>, vector<1x8x128xf32>
    %195 = vector.shape_cast %194 : vector<1x8x128xf32> to vector<8x128xf32>
    %c0_216 = arith.constant 0 : index
    %c182_217 = arith.constant 182 : index
    %c0_218 = arith.constant 0 : index
    %196 = tpu.strided_load %arg1[%c0_216, %c182_217, %c0_218] {strides = array<i32: 1, 2, 1>} : memref<1x324x128xf32, #tpu.memory_space<vmem>>, vector<1x8x128xf32>
    %197 = vector.shape_cast %196 : vector<1x8x128xf32> to vector<8x128xf32>
    %c0_219 = arith.constant 0 : index
    %c218_220 = arith.constant 218 : index
    %c0_221 = arith.constant 0 : index
    %198 = tpu.strided_load %arg1[%c0_219, %c218_220, %c0_221] {strides = array<i32: 1, 2, 1>} : memref<1x324x128xf32, #tpu.memory_space<vmem>>, vector<1x8x128xf32>
    %199 = vector.shape_cast %198 : vector<1x8x128xf32> to vector<8x128xf32>
    %c0_222 = arith.constant 0 : index
    %c254_223 = arith.constant 254 : index
    %c0_224 = arith.constant 0 : index
    %200 = tpu.strided_load %arg1[%c0_222, %c254_223, %c0_224] {strides = array<i32: 1, 2, 1>} : memref<1x324x128xf32, #tpu.memory_space<vmem>>, vector<1x8x128xf32>
    %201 = vector.shape_cast %200 : vector<1x8x128xf32> to vector<8x128xf32>
    %c0_225 = arith.constant 0 : index
    %c290 = arith.constant 290 : index
    %c0_226 = arith.constant 0 : index
    %202 = tpu.strided_load %arg1[%c0_225, %c290, %c0_226] {strides = array<i32: 1, 2, 1>} : memref<1x324x128xf32, #tpu.memory_space<vmem>>, vector<1x8x128xf32>
    %203 = vector.shape_cast %202 : vector<1x8x128xf32> to vector<8x128xf32>
    %204 = tpu.concatenate %189, %191, %193, %195, %197, %199, %201, %203 in 0 : vector<8x128xf32>, vector<8x128xf32>, vector<8x128xf32>, vector<8x128xf32>, vector<8x128xf32>, vector<8x128xf32>, vector<8x128xf32>, vector<8x128xf32> -> vector<64x128xf32>
    %c2_227 = arith.constant 2 : index
    %c2_228 = arith.constant 2 : index
    %c0_229 = arith.constant 0 : index
    %c0_230 = arith.constant 0 : index
    %205 = vector.load %arg2[%c2_227, %c2_228, %c0_229, %c0_230] : memref<3x3x128x128xf32, #tpu.memory_space<vmem>>, vector<1x1x128x128xf32>
    %206 = vector.shape_cast %205 : vector<1x1x128x128xf32> to vector<128x128xf32>
    %cst_231 = arith.constant dense<0.000000e+00> : vector<64x128xf32>
    %207 = tpu.matmul %204, %206, %cst_231 {dimension_numbers = #tpu.dot_dimension_numbers<[1], [0], [0], [1], [0, 0, 1, 1], [], []>} : vector<64x128xf32>, vector<128x128xf32>, vector<64x128xf32> -> vector<64x128xf32>
    %208 = arith.addf %187, %207 : vector<64x128xf32>
    %209 = vector.broadcast %18 : vector<1x128xf32> to vector<64x128xf32>
    %210 = arith.addf %208, %209 : vector<64x128xf32>
    %cst_232 = arith.constant 0.000000e+00 : f32
    %211 = vector.broadcast %cst_232 : f32 to vector<64x128xf32>
    %212 = arith.cmpf oge, %210, %211 : vector<64x128xf32>
    %cst_233 = arith.constant 0.00999999977 : f32
    %213 = vector.broadcast %cst_233 : f32 to vector<64x128xf32>
    %214 = arith.mulf %213, %210 : vector<64x128xf32>
    %215 = arith.select %212, %210, %214 : vector<64x128xi1>, vector<64x128xf32>
    %216 = vector.extract_strided_slice %215 {offsets = [0, 0], sizes = [8, 128], strides = [1, 1]} : vector<64x128xf32> to vector<8x128xf32>
    %c11 = arith.constant 11 : index
    %c0_234 = arith.constant 0 : index
    %217 = vector.load %arg13[%c11, %c0_234] : memref<100x128xf32, #tpu.memory_space<vmem>>, vector<8x128xf32>
    tpu.vector_store %arg13[%c11, %c0_234], %216 {strides = array<i32>} : memref<100x128xf32, #tpu.memory_space<vmem>>, vector<8x128xf32>,
    %218 = vector.extract_strided_slice %215 {offsets = [8, 0], sizes = [8, 128], strides = [1, 1]} : vector<64x128xf32> to vector<8x128xf32>
    %c21 = arith.constant 21 : index
    %c0_235 = arith.constant 0 : index
    %219 = vector.load %arg13[%c21, %c0_235] : memref<100x128xf32, #tpu.memory_space<vmem>>, vector<8x128xf32>
    tpu.vector_store %arg13[%c21, %c0_235], %218 {strides = array<i32>} : memref<100x128xf32, #tpu.memory_space<vmem>>, vector<8x128xf32>,
    %220 = vector.extract_strided_slice %215 {offsets = [16, 0], sizes = [8, 128], strides = [1, 1]} : vector<64x128xf32> to vector<8x128xf32>
    %c31 = arith.constant 31 : index
    %c0_236 = arith.constant 0 : index
    %221 = vector.load %arg13[%c31, %c0_236] : memref<100x128xf32, #tpu.memory_space<vmem>>, vector<8x128xf32>
    tpu.vector_store %arg13[%c31, %c0_236], %220 {strides = array<i32>} : memref<100x128xf32, #tpu.memory_space<vmem>>, vector<8x128xf32>,
    %222 = vector.extract_strided_slice %215 {offsets = [24, 0], sizes = [8, 128], strides = [1, 1]} : vector<64x128xf32> to vector<8x128xf32>
    %c41 = arith.constant 41 : index
    %c0_237 = arith.constant 0 : index
    %223 = vector.load %arg13[%c41, %c0_237] : memref<100x128xf32, #tpu.memory_space<vmem>>, vector<8x128xf32>
    tpu.vector_store %arg13[%c41, %c0_237], %222 {strides = array<i32>} : memref<100x128xf32, #tpu.memory_space<vmem>>, vector<8x128xf32>,
    %224 = vector.extract_strided_slice %215 {offsets = [32, 0], sizes = [8, 128], strides = [1, 1]} : vector<64x128xf32> to vector<8x128xf32>
    %c51 = arith.constant 51 : index
    %c0_238 = arith.constant 0 : index
    %225 = vector.load %arg13[%c51, %c0_238] : memref<100x128xf32, #tpu.memory_space<vmem>>, vector<8x128xf32>
    tpu.vector_store %arg13[%c51, %c0_238], %224 {strides = array<i32>} : memref<100x128xf32, #tpu.memory_space<vmem>>, vector<8x128xf32>,
    %226 = vector.extract_strided_slice %215 {offsets = [40, 0], sizes = [8, 128], strides = [1, 1]} : vector<64x128xf32> to vector<8x128xf32>
    %c61 = arith.constant 61 : index
    %c0_239 = arith.constant 0 : index
    %227 = vector.load %arg13[%c61, %c0_239] : memref<100x128xf32, #tpu.memory_space<vmem>>, vector<8x128xf32>
    tpu.vector_store %arg13[%c61, %c0_239], %226 {strides = array<i32>} : memref<100x128xf32, #tpu.memory_space<vmem>>, vector<8x128xf32>,
    %228 = vector.extract_strided_slice %215 {offsets = [48, 0], sizes = [8, 128], strides = [1, 1]} : vector<64x128xf32> to vector<8x128xf32>
    %c71 = arith.constant 71 : index
    %c0_240 = arith.constant 0 : index
    %229 = vector.load %arg13[%c71, %c0_240] : memref<100x128xf32, #tpu.memory_space<vmem>>, vector<8x128xf32>
    tpu.vector_store %arg13[%c71, %c0_240], %228 {strides = array<i32>} : memref<100x128xf32, #tpu.memory_space<vmem>>, vector<8x128xf32>,
    %230 = vector.extract_strided_slice %215 {offsets = [56, 0], sizes = [8, 128], strides = [1, 1]} : vector<64x128xf32> to vector<8x128xf32>
    %c81 = arith.constant 81 : index
    %c0_241 = arith.constant 0 : index
    %231 = vector.load %arg13[%c81, %c0_241] : memref<100x128xf32, #tpu.memory_space<vmem>>, vector<8x128xf32>
    tpu.vector_store %arg13[%c81, %c0_241], %230 {strides = array<i32>} : memref<100x128xf32, #tpu.memory_space<vmem>>, vector<8x128xf32>,
    %cst_242 = arith.constant 0.000000e+00 : f32
    %232 = vector.broadcast %cst_242 : f32 to vector<7x128xf32>
    %c0_243 = arith.constant 0 : index
    %c0_244 = arith.constant 0 : index
    %233 = vector.load %arg14[%c0_243, %c0_244] : memref<36x128xf32, #tpu.memory_space<vmem>>, vector<7x128xf32>
    tpu.vector_store %arg14[%c0_243, %c0_244], %232 {strides = array<i32>} : memref<36x128xf32, #tpu.memory_space<vmem>>, vector<7x128xf32>,
    %cst_245 = arith.constant 0.000000e+00 : f32
    %234 = vector.broadcast %cst_245 : f32 to vector<2x128xf32>
    %c11_246 = arith.constant 11 : index
    %c0_247 = arith.constant 0 : index
    %235 = vector.load %arg14[%c11_246, %c0_247] : memref<36x128xf32, #tpu.memory_space<vmem>>, vector<2x128xf32>
    tpu.vector_store %arg14[%c11_246, %c0_247], %234 {strides = array<i32>} : memref<36x128xf32, #tpu.memory_space<vmem>>, vector<2x128xf32>,
    %cst_248 = arith.constant 0.000000e+00 : f32
    %236 = vector.broadcast %cst_248 : f32 to vector<2x128xf32>
    %c17 = arith.constant 17 : index
    %c0_249 = arith.constant 0 : index
    %237 = vector.load %arg14[%c17, %c0_249] : memref<36x128xf32, #tpu.memory_space<vmem>>, vector<2x128xf32>
    tpu.vector_store %arg14[%c17, %c0_249], %236 {strides = array<i32>} : memref<36x128xf32, #tpu.memory_space<vmem>>, vector<2x128xf32>,
    %cst_250 = arith.constant 0.000000e+00 : f32
    %238 = vector.broadcast %cst_250 : f32 to vector<2x128xf32>
    %c23 = arith.constant 23 : index
    %c0_251 = arith.constant 0 : index
    %239 = vector.load %arg14[%c23, %c0_251] : memref<36x128xf32, #tpu.memory_space<vmem>>, vector<2x128xf32>
    tpu.vector_store %arg14[%c23, %c0_251], %238 {strides = array<i32>} : memref<36x128xf32, #tpu.memory_space<vmem>>, vector<2x128xf32>,
    %cst_252 = arith.constant 0.000000e+00 : f32
    %240 = vector.broadcast %cst_252 : f32 to vector<7x128xf32>
    %c29_253 = arith.constant 29 : index
    %c0_254 = arith.constant 0 : index
    %241 = vector.load %arg14[%c29_253, %c0_254] : memref<36x128xf32, #tpu.memory_space<vmem>>, vector<7x128xf32>
    tpu.vector_store %arg14[%c29_253, %c0_254], %240 {strides = array<i32>} : memref<36x128xf32, #tpu.memory_space<vmem>>, vector<7x128xf32>,
    %c0_255 = arith.constant 0 : index
    %c0_256 = arith.constant 0 : index
    %242 = vector.load %arg5[%c0_255, %c0_256] : memref<1x128xf32, #tpu.memory_space<vmem>>, vector<1x128xf32>
    %cst_257 = arith.constant 0.000000e+00 : f32
    %243 = vector.broadcast %cst_257 : f32 to vector<16x128xf32>
    %c0_258 = arith.constant 0 : index
    %c0_259 = arith.constant 0 : index
    %244 = tpu.strided_load %arg13[%c0_258, %c0_259] {strides = array<i32: 2, 1>} : memref<100x128xf32, #tpu.memory_space<vmem>>, vector<4x128xf32>
    %c20_260 = arith.constant 20 : index
    %c0_261 = arith.constant 0 : index
    %245 = tpu.strided_load %arg13[%c20_260, %c0_261] {strides = array<i32: 2, 1>} : memref<100x128xf32, #tpu.memory_space<vmem>>, vector<4x128xf32>
    %c40 = arith.constant 40 : index
    %c0_262 = arith.constant 0 : index
    %246 = tpu.strided_load %arg13[%c40, %c0_262] {strides = array<i32: 2, 1>} : memref<100x128xf32, #tpu.memory_space<vmem>>, vector<4x128xf32>
    %c60 = arith.constant 60 : index
    %c0_263 = arith.constant 0 : index
    %247 = tpu.strided_load %arg13[%c60, %c0_263] {strides = array<i32: 2, 1>} : memref<100x128xf32, #tpu.memory_space<vmem>>, vector<4x128xf32>
    %248 = tpu.concatenate %244, %245, %246, %247 in 0 : vector<4x128xf32>, vector<4x128xf32>, vector<4x128xf32>, vector<4x128xf32> -> vector<16x128xf32>
    %c0_264 = arith.constant 0 : index
    %c0_265 = arith.constant 0 : index
    %c0_266 = arith.constant 0 : index
    %c0_267 = arith.constant 0 : index
    %249 = vector.load %arg4[%c0_264, %c0_265, %c0_266, %c0_267] : memref<3x3x128x128xf32, #tpu.memory_space<vmem>>, vector<1x1x128x128xf32>
    %250 = vector.shape_cast %249 : vector<1x1x128x128xf32> to vector<128x128xf32>
    %cst_268 = arith.constant dense<0.000000e+00> : vector<16x128xf32>
    %251 = tpu.matmul %248, %250, %cst_268 {dimension_numbers = #tpu.dot_dimension_numbers<[1], [0], [0], [1], [0, 0, 1, 1], [], []>} : vector<16x128xf32>, vector<128x128xf32>, vector<16x128xf32> -> vector<16x128xf32>
    %252 = arith.addf %243, %251 : vector<16x128xf32>
    %c1_269 = arith.constant 1 : index
    %c0_270 = arith.constant 0 : index
    %253 = tpu.strided_load %arg13[%c1_269, %c0_270] {strides = array<i32: 2, 1>} : memref<100x128xf32, #tpu.memory_space<vmem>>, vector<4x128xf32>
    %c21_271 = arith.constant 21 : index
    %c0_272 = arith.constant 0 : index
    %254 = tpu.strided_load %arg13[%c21_271, %c0_272] {strides = array<i32: 2, 1>} : memref<100x128xf32, #tpu.memory_space<vmem>>, vector<4x128xf32>
    %c41_273 = arith.constant 41 : index
    %c0_274 = arith.constant 0 : index
    %255 = tpu.strided_load %arg13[%c41_273, %c0_274] {strides = array<i32: 2, 1>} : memref<100x128xf32, #tpu.memory_space<vmem>>, vector<4x128xf32>
    %c61_275 = arith.constant 61 : index
    %c0_276 = arith.constant 0 : index
    %256 = tpu.strided_load %arg13[%c61_275, %c0_276] {strides = array<i32: 2, 1>} : memref<100x128xf32, #tpu.memory_space<vmem>>, vector<4x128xf32>
    %257 = tpu.concatenate %253, %254, %255, %256 in 0 : vector<4x128xf32>, vector<4x128xf32>, vector<4x128xf32>, vector<4x128xf32> -> vector<16x128xf32>
    %c0_277 = arith.constant 0 : index
    %c1_278 = arith.constant 1 : index
    %c0_279 = arith.constant 0 : index
    %c0_280 = arith.constant 0 : index
    %258 = vector.load %arg4[%c0_277, %c1_278, %c0_279, %c0_280] : memref<3x3x128x128xf32, #tpu.memory_space<vmem>>, vector<1x1x128x128xf32>
    %259 = vector.shape_cast %258 : vector<1x1x128x128xf32> to vector<128x128xf32>
    %cst_281 = arith.constant dense<0.000000e+00> : vector<16x128xf32>
    %260 = tpu.matmul %257, %259, %cst_281 {dimension_numbers = #tpu.dot_dimension_numbers<[1], [0], [0], [1], [0, 0, 1, 1], [], []>} : vector<16x128xf32>, vector<128x128xf32>, vector<16x128xf32> -> vector<16x128xf32>
    %261 = arith.addf %252, %260 : vector<16x128xf32>
    %c2_282 = arith.constant 2 : index
    %c0_283 = arith.constant 0 : index
    %262 = tpu.strided_load %arg13[%c2_282, %c0_283] {strides = array<i32: 2, 1>} : memref<100x128xf32, #tpu.memory_space<vmem>>, vector<4x128xf32>
    %c22 = arith.constant 22 : index
    %c0_284 = arith.constant 0 : index
    %263 = tpu.strided_load %arg13[%c22, %c0_284] {strides = array<i32: 2, 1>} : memref<100x128xf32, #tpu.memory_space<vmem>>, vector<4x128xf32>
    %c42 = arith.constant 42 : index
    %c0_285 = arith.constant 0 : index
    %264 = tpu.strided_load %arg13[%c42, %c0_285] {strides = array<i32: 2, 1>} : memref<100x128xf32, #tpu.memory_space<vmem>>, vector<4x128xf32>
    %c62 = arith.constant 62 : index
    %c0_286 = arith.constant 0 : index
    %265 = tpu.strided_load %arg13[%c62, %c0_286] {strides = array<i32: 2, 1>} : memref<100x128xf32, #tpu.memory_space<vmem>>, vector<4x128xf32>
    %266 = tpu.concatenate %262, %263, %264, %265 in 0 : vector<4x128xf32>, vector<4x128xf32>, vector<4x128xf32>, vector<4x128xf32> -> vector<16x128xf32>
    %c0_287 = arith.constant 0 : index
    %c2_288 = arith.constant 2 : index
    %c0_289 = arith.constant 0 : index
    %c0_290 = arith.constant 0 : index
    %267 = vector.load %arg4[%c0_287, %c2_288, %c0_289, %c0_290] : memref<3x3x128x128xf32, #tpu.memory_space<vmem>>, vector<1x1x128x128xf32>
    %268 = vector.shape_cast %267 : vector<1x1x128x128xf32> to vector<128x128xf32>
    %cst_291 = arith.constant dense<0.000000e+00> : vector<16x128xf32>
    %269 = tpu.matmul %266, %268, %cst_291 {dimension_numbers = #tpu.dot_dimension_numbers<[1], [0], [0], [1], [0, 0, 1, 1], [], []>} : vector<16x128xf32>, vector<128x128xf32>, vector<16x128xf32> -> vector<16x128xf32>
    %270 = arith.addf %261, %269 : vector<16x128xf32>
    %c10 = arith.constant 10 : index
    %c0_292 = arith.constant 0 : index
    %271 = tpu.strided_load %arg13[%c10, %c0_292] {strides = array<i32: 2, 1>} : memref<100x128xf32, #tpu.memory_space<vmem>>, vector<4x128xf32>
    %c30 = arith.constant 30 : index
    %c0_293 = arith.constant 0 : index
    %272 = tpu.strided_load %arg13[%c30, %c0_293] {strides = array<i32: 2, 1>} : memref<100x128xf32, #tpu.memory_space<vmem>>, vector<4x128xf32>
    %c50 = arith.constant 50 : index
    %c0_294 = arith.constant 0 : index
    %273 = tpu.strided_load %arg13[%c50, %c0_294] {strides = array<i32: 2, 1>} : memref<100x128xf32, #tpu.memory_space<vmem>>, vector<4x128xf32>
    %c70 = arith.constant 70 : index
    %c0_295 = arith.constant 0 : index
    %274 = tpu.strided_load %arg13[%c70, %c0_295] {strides = array<i32: 2, 1>} : memref<100x128xf32, #tpu.memory_space<vmem>>, vector<4x128xf32>
    %275 = tpu.concatenate %271, %272, %273, %274 in 0 : vector<4x128xf32>, vector<4x128xf32>, vector<4x128xf32>, vector<4x128xf32> -> vector<16x128xf32>
    %c1_296 = arith.constant 1 : index
    %c0_297 = arith.constant 0 : index
    %c0_298 = arith.constant 0 : index
    %c0_299 = arith.constant 0 : index
    %276 = vector.load %arg4[%c1_296, %c0_297, %c0_298, %c0_299] : memref<3x3x128x128xf32, #tpu.memory_space<vmem>>, vector<1x1x128x128xf32>
    %277 = vector.shape_cast %276 : vector<1x1x128x128xf32> to vector<128x128xf32>
    %cst_300 = arith.constant dense<0.000000e+00> : vector<16x128xf32>
    %278 = tpu.matmul %275, %277, %cst_300 {dimension_numbers = #tpu.dot_dimension_numbers<[1], [0], [0], [1], [0, 0, 1, 1], [], []>} : vector<16x128xf32>, vector<128x128xf32>, vector<16x128xf32> -> vector<16x128xf32>
    %279 = arith.addf %270, %278 : vector<16x128xf32>
    %c11_301 = arith.constant 11 : index
    %c0_302 = arith.constant 0 : index
    %280 = tpu.strided_load %arg13[%c11_301, %c0_302] {strides = array<i32: 2, 1>} : memref<100x128xf32, #tpu.memory_space<vmem>>, vector<4x128xf32>
    %c31_303 = arith.constant 31 : index
    %c0_304 = arith.constant 0 : index
    %281 = tpu.strided_load %arg13[%c31_303, %c0_304] {strides = array<i32: 2, 1>} : memref<100x128xf32, #tpu.memory_space<vmem>>, vector<4x128xf32>
    %c51_305 = arith.constant 51 : index
    %c0_306 = arith.constant 0 : index
    %282 = tpu.strided_load %arg13[%c51_305, %c0_306] {strides = array<i32: 2, 1>} : memref<100x128xf32, #tpu.memory_space<vmem>>, vector<4x128xf32>
    %c71_307 = arith.constant 71 : index
    %c0_308 = arith.constant 0 : index
    %283 = tpu.strided_load %arg13[%c71_307, %c0_308] {strides = array<i32: 2, 1>} : memref<100x128xf32, #tpu.memory_space<vmem>>, vector<4x128xf32>
    %284 = tpu.concatenate %280, %281, %282, %283 in 0 : vector<4x128xf32>, vector<4x128xf32>, vector<4x128xf32>, vector<4x128xf32> -> vector<16x128xf32>
    %c1_309 = arith.constant 1 : index
    %c1_310 = arith.constant 1 : index
    %c0_311 = arith.constant 0 : index
    %c0_312 = arith.constant 0 : index
    %285 = vector.load %arg4[%c1_309, %c1_310, %c0_311, %c0_312] : memref<3x3x128x128xf32, #tpu.memory_space<vmem>>, vector<1x1x128x128xf32>
    %286 = vector.shape_cast %285 : vector<1x1x128x128xf32> to vector<128x128xf32>
    %cst_313 = arith.constant dense<0.000000e+00> : vector<16x128xf32>
    %287 = tpu.matmul %284, %286, %cst_313 {dimension_numbers = #tpu.dot_dimension_numbers<[1], [0], [0], [1], [0, 0, 1, 1], [], []>} : vector<16x128xf32>, vector<128x128xf32>, vector<16x128xf32> -> vector<16x128xf32>
    %288 = arith.addf %279, %287 : vector<16x128xf32>
    %c12 = arith.constant 12 : index
    %c0_314 = arith.constant 0 : index
    %289 = tpu.strided_load %arg13[%c12, %c0_314] {strides = array<i32: 2, 1>} : memref<100x128xf32, #tpu.memory_space<vmem>>, vector<4x128xf32>
    %c32 = arith.constant 32 : index
    %c0_315 = arith.constant 0 : index
    %290 = tpu.strided_load %arg13[%c32, %c0_315] {strides = array<i32: 2, 1>} : memref<100x128xf32, #tpu.memory_space<vmem>>, vector<4x128xf32>
    %c52 = arith.constant 52 : index
    %c0_316 = arith.constant 0 : index
    %291 = tpu.strided_load %arg13[%c52, %c0_316] {strides = array<i32: 2, 1>} : memref<100x128xf32, #tpu.memory_space<vmem>>, vector<4x128xf32>
    %c72_317 = arith.constant 72 : index
    %c0_318 = arith.constant 0 : index
    %292 = tpu.strided_load %arg13[%c72_317, %c0_318] {strides = array<i32: 2, 1>} : memref<100x128xf32, #tpu.memory_space<vmem>>, vector<4x128xf32>
    %293 = tpu.concatenate %289, %290, %291, %292 in 0 : vector<4x128xf32>, vector<4x128xf32>, vector<4x128xf32>, vector<4x128xf32> -> vector<16x128xf32>
    %c1_319 = arith.constant 1 : index
    %c2_320 = arith.constant 2 : index
    %c0_321 = arith.constant 0 : index
    %c0_322 = arith.constant 0 : index
    %294 = vector.load %arg4[%c1_319, %c2_320, %c0_321, %c0_322] : memref<3x3x128x128xf32, #tpu.memory_space<vmem>>, vector<1x1x128x128xf32>
    %295 = vector.shape_cast %294 : vector<1x1x128x128xf32> to vector<128x128xf32>
    %cst_323 = arith.constant dense<0.000000e+00> : vector<16x128xf32>
    %296 = tpu.matmul %293, %295, %cst_323 {dimension_numbers = #tpu.dot_dimension_numbers<[1], [0], [0], [1], [0, 0, 1, 1], [], []>} : vector<16x128xf32>, vector<128x128xf32>, vector<16x128xf32> -> vector<16x128xf32>
    %297 = arith.addf %288, %296 : vector<16x128xf32>
    %c20_324 = arith.constant 20 : index
    %c0_325 = arith.constant 0 : index
    %298 = tpu.strided_load %arg13[%c20_324, %c0_325] {strides = array<i32: 2, 1>} : memref<100x128xf32, #tpu.memory_space<vmem>>, vector<4x128xf32>
    %c40_326 = arith.constant 40 : index
    %c0_327 = arith.constant 0 : index
    %299 = tpu.strided_load %arg13[%c40_326, %c0_327] {strides = array<i32: 2, 1>} : memref<100x128xf32, #tpu.memory_space<vmem>>, vector<4x128xf32>
    %c60_328 = arith.constant 60 : index
    %c0_329 = arith.constant 0 : index
    %300 = tpu.strided_load %arg13[%c60_328, %c0_329] {strides = array<i32: 2, 1>} : memref<100x128xf32, #tpu.memory_space<vmem>>, vector<4x128xf32>
    %c80 = arith.constant 80 : index
    %c0_330 = arith.constant 0 : index
    %301 = tpu.strided_load %arg13[%c80, %c0_330] {strides = array<i32: 2, 1>} : memref<100x128xf32, #tpu.memory_space<vmem>>, vector<4x128xf32>
    %302 = tpu.concatenate %298, %299, %300, %301 in 0 : vector<4x128xf32>, vector<4x128xf32>, vector<4x128xf32>, vector<4x128xf32> -> vector<16x128xf32>
    %c2_331 = arith.constant 2 : index
    %c0_332 = arith.constant 0 : index
    %c0_333 = arith.constant 0 : index
    %c0_334 = arith.constant 0 : index
    %303 = vector.load %arg4[%c2_331, %c0_332, %c0_333, %c0_334] : memref<3x3x128x128xf32, #tpu.memory_space<vmem>>, vector<1x1x128x128xf32>
    %304 = vector.shape_cast %303 : vector<1x1x128x128xf32> to vector<128x128xf32>
    %cst_335 = arith.constant dense<0.000000e+00> : vector<16x128xf32>
    %305 = tpu.matmul %302, %304, %cst_335 {dimension_numbers = #tpu.dot_dimension_numbers<[1], [0], [0], [1], [0, 0, 1, 1], [], []>} : vector<16x128xf32>, vector<128x128xf32>, vector<16x128xf32> -> vector<16x128xf32>
    %306 = arith.addf %297, %305 : vector<16x128xf32>
    %c21_336 = arith.constant 21 : index
    %c0_337 = arith.constant 0 : index
    %307 = tpu.strided_load %arg13[%c21_336, %c0_337] {strides = array<i32: 2, 1>} : memref<100x128xf32, #tpu.memory_space<vmem>>, vector<4x128xf32>
    %c41_338 = arith.constant 41 : index
    %c0_339 = arith.constant 0 : index
    %308 = tpu.strided_load %arg13[%c41_338, %c0_339] {strides = array<i32: 2, 1>} : memref<100x128xf32, #tpu.memory_space<vmem>>, vector<4x128xf32>
    %c61_340 = arith.constant 61 : index
    %c0_341 = arith.constant 0 : index
    %309 = tpu.strided_load %arg13[%c61_340, %c0_341] {strides = array<i32: 2, 1>} : memref<100x128xf32, #tpu.memory_space<vmem>>, vector<4x128xf32>
    %c81_342 = arith.constant 81 : index
    %c0_343 = arith.constant 0 : index
    %310 = tpu.strided_load %arg13[%c81_342, %c0_343] {strides = array<i32: 2, 1>} : memref<100x128xf32, #tpu.memory_space<vmem>>, vector<4x128xf32>
    %311 = tpu.concatenate %307, %308, %309, %310 in 0 : vector<4x128xf32>, vector<4x128xf32>, vector<4x128xf32>, vector<4x128xf32> -> vector<16x128xf32>
    %c2_344 = arith.constant 2 : index
    %c1_345 = arith.constant 1 : index
    %c0_346 = arith.constant 0 : index
    %c0_347 = arith.constant 0 : index
    %312 = vector.load %arg4[%c2_344, %c1_345, %c0_346, %c0_347] : memref<3x3x128x128xf32, #tpu.memory_space<vmem>>, vector<1x1x128x128xf32>
    %313 = vector.shape_cast %312 : vector<1x1x128x128xf32> to vector<128x128xf32>
    %cst_348 = arith.constant dense<0.000000e+00> : vector<16x128xf32>
    %314 = tpu.matmul %311, %313, %cst_348 {dimension_numbers = #tpu.dot_dimension_numbers<[1], [0], [0], [1], [0, 0, 1, 1], [], []>} : vector<16x128xf32>, vector<128x128xf32>, vector<16x128xf32> -> vector<16x128xf32>
    %315 = arith.addf %306, %314 : vector<16x128xf32>
    %c22_349 = arith.constant 22 : index
    %c0_350 = arith.constant 0 : index
    %316 = tpu.strided_load %arg13[%c22_349, %c0_350] {strides = array<i32: 2, 1>} : memref<100x128xf32, #tpu.memory_space<vmem>>, vector<4x128xf32>
    %c42_351 = arith.constant 42 : index
    %c0_352 = arith.constant 0 : index
    %317 = tpu.strided_load %arg13[%c42_351, %c0_352] {strides = array<i32: 2, 1>} : memref<100x128xf32, #tpu.memory_space<vmem>>, vector<4x128xf32>
    %c62_353 = arith.constant 62 : index
    %c0_354 = arith.constant 0 : index
    %318 = tpu.strided_load %arg13[%c62_353, %c0_354] {strides = array<i32: 2, 1>} : memref<100x128xf32, #tpu.memory_space<vmem>>, vector<4x128xf32>
    %c82 = arith.constant 82 : index
    %c0_355 = arith.constant 0 : index
    %319 = tpu.strided_load %arg13[%c82, %c0_355] {strides = array<i32: 2, 1>} : memref<100x128xf32, #tpu.memory_space<vmem>>, vector<4x128xf32>
    %320 = tpu.concatenate %316, %317, %318, %319 in 0 : vector<4x128xf32>, vector<4x128xf32>, vector<4x128xf32>, vector<4x128xf32> -> vector<16x128xf32>
    %c2_356 = arith.constant 2 : index
    %c2_357 = arith.constant 2 : index
    %c0_358 = arith.constant 0 : index
    %c0_359 = arith.constant 0 : index
    %321 = vector.load %arg4[%c2_356, %c2_357, %c0_358, %c0_359] : memref<3x3x128x128xf32, #tpu.memory_space<vmem>>, vector<1x1x128x128xf32>
    %322 = vector.shape_cast %321 : vector<1x1x128x128xf32> to vector<128x128xf32>
    %cst_360 = arith.constant dense<0.000000e+00> : vector<16x128xf32>
    %323 = tpu.matmul %320, %322, %cst_360 {dimension_numbers = #tpu.dot_dimension_numbers<[1], [0], [0], [1], [0, 0, 1, 1], [], []>} : vector<16x128xf32>, vector<128x128xf32>, vector<16x128xf32> -> vector<16x128xf32>
    %324 = arith.addf %315, %323 : vector<16x128xf32>
    %325 = vector.broadcast %242 : vector<1x128xf32> to vector<16x128xf32>
    %326 = arith.addf %324, %325 : vector<16x128xf32>
    %cst_361 = arith.constant 0.000000e+00 : f32
    %327 = vector.broadcast %cst_361 : f32 to vector<16x128xf32>
    %328 = arith.cmpf oge, %326, %327 : vector<16x128xf32>
    %cst_362 = arith.constant 0.00999999977 : f32
    %329 = vector.broadcast %cst_362 : f32 to vector<16x128xf32>
    %330 = arith.mulf %329, %326 : vector<16x128xf32>
    %331 = arith.select %328, %326, %330 : vector<16x128xi1>, vector<16x128xf32>
    %332 = vector.extract_strided_slice %331 {offsets = [0, 0], sizes = [4, 128], strides = [1, 1]} : vector<16x128xf32> to vector<4x128xf32>
    %c7 = arith.constant 7 : index
    %c0_363 = arith.constant 0 : index
    %333 = vector.load %arg14[%c7, %c0_363] : memref<36x128xf32, #tpu.memory_space<vmem>>, vector<4x128xf32>
    tpu.vector_store %arg14[%c7, %c0_363], %332 {strides = array<i32>} : memref<36x128xf32, #tpu.memory_space<vmem>>, vector<4x128xf32>,
    %334 = vector.extract_strided_slice %331 {offsets = [4, 0], sizes = [4, 128], strides = [1, 1]} : vector<16x128xf32> to vector<4x128xf32>
    %c13 = arith.constant 13 : index
    %c0_364 = arith.constant 0 : index
    %335 = vector.load %arg14[%c13, %c0_364] : memref<36x128xf32, #tpu.memory_space<vmem>>, vector<4x128xf32>
    tpu.vector_store %arg14[%c13, %c0_364], %334 {strides = array<i32>} : memref<36x128xf32, #tpu.memory_space<vmem>>, vector<4x128xf32>,
    %336 = vector.extract_strided_slice %331 {offsets = [8, 0], sizes = [4, 128], strides = [1, 1]} : vector<16x128xf32> to vector<4x128xf32>
    %c19_365 = arith.constant 19 : index
    %c0_366 = arith.constant 0 : index
    %337 = vector.load %arg14[%c19_365, %c0_366] : memref<36x128xf32, #tpu.memory_space<vmem>>, vector<4x128xf32>
    tpu.vector_store %arg14[%c19_365, %c0_366], %336 {strides = array<i32>} : memref<36x128xf32, #tpu.memory_space<vmem>>, vector<4x128xf32>,
    %338 = vector.extract_strided_slice %331 {offsets = [12, 0], sizes = [4, 128], strides = [1, 1]} : vector<16x128xf32> to vector<4x128xf32>
    %c25 = arith.constant 25 : index
    %c0_367 = arith.constant 0 : index
    %339 = vector.load %arg14[%c25, %c0_367] : memref<36x128xf32, #tpu.memory_space<vmem>>, vector<4x128xf32>
    tpu.vector_store %arg14[%c25, %c0_367], %338 {strides = array<i32>} : memref<36x128xf32, #tpu.memory_space<vmem>>, vector<4x128xf32>,
    %cst_368 = arith.constant 0.000000e+00 : f32
    %340 = vector.broadcast %cst_368 : f32 to vector<5x128xf32>
    %c0_369 = arith.constant 0 : index
    %c0_370 = arith.constant 0 : index
    %341 = vector.load %arg15[%c0_369, %c0_370] : memref<16x128xf32, #tpu.memory_space<vmem>>, vector<5x128xf32>
    tpu.vector_store %arg15[%c0_369, %c0_370], %340 {strides = array<i32>} : memref<16x128xf32, #tpu.memory_space<vmem>>, vector<5x128xf32>,
    %cst_371 = arith.constant 0.000000e+00 : f32
    %342 = vector.broadcast %cst_371 : f32 to vector<2x128xf32>
    %c7_372 = arith.constant 7 : index
    %c0_373 = arith.constant 0 : index
    %343 = vector.load %arg15[%c7_372, %c0_373] : memref<16x128xf32, #tpu.memory_space<vmem>>, vector<2x128xf32>
    tpu.vector_store %arg15[%c7_372, %c0_373], %342 {strides = array<i32>} : memref<16x128xf32, #tpu.memory_space<vmem>>, vector<2x128xf32>,
    %cst_374 = arith.constant 0.000000e+00 : f32
    %344 = vector.broadcast %cst_374 : f32 to vector<5x128xf32>
    %c11_375 = arith.constant 11 : index
    %c0_376 = arith.constant 0 : index
    %345 = vector.load %arg15[%c11_375, %c0_376] : memref<16x128xf32, #tpu.memory_space<vmem>>, vector<5x128xf32>
    tpu.vector_store %arg15[%c11_375, %c0_376], %344 {strides = array<i32>} : memref<16x128xf32, #tpu.memory_space<vmem>>, vector<5x128xf32>,
    %c0_377 = arith.constant 0 : index
    %c0_378 = arith.constant 0 : index
    %346 = vector.load %arg7[%c0_377, %c0_378] : memref<1x128xf32, #tpu.memory_space<vmem>>, vector<1x128xf32>
    %cst_379 = arith.constant 0.000000e+00 : f32
    %347 = vector.broadcast %cst_379 : f32 to vector<4x128xf32>
    %c0_380 = arith.constant 0 : index
    %c0_381 = arith.constant 0 : index
    %348 = tpu.strided_load %arg14[%c0_380, %c0_381] {strides = array<i32: 2, 1>} : memref<36x128xf32, #tpu.memory_space<vmem>>, vector<2x128xf32>
    %c12_382 = arith.constant 12 : index
    %c0_383 = arith.constant 0 : index
    %349 = tpu.strided_load %arg14[%c12_382, %c0_383] {strides = array<i32: 2, 1>} : memref<36x128xf32, #tpu.memory_space<vmem>>, vector<2x128xf32>
    %350 = tpu.concatenate %348, %349 in 0 : vector<2x128xf32>, vector<2x128xf32> -> vector<4x128xf32>
    %c0_384 = arith.constant 0 : index
    %c0_385 = arith.constant 0 : index
    %c0_386 = arith.constant 0 : index
    %c0_387 = arith.constant 0 : index
    %351 = vector.load %arg6[%c0_384, %c0_385, %c0_386, %c0_387] : memref<3x3x128x128xf32, #tpu.memory_space<vmem>>, vector<1x1x128x128xf32>
    %352 = vector.shape_cast %351 : vector<1x1x128x128xf32> to vector<128x128xf32>
    %cst_388 = arith.constant dense<0.000000e+00> : vector<4x128xf32>
    %353 = tpu.matmul %350, %352, %cst_388 {dimension_numbers = #tpu.dot_dimension_numbers<[1], [0], [0], [1], [0, 0, 1, 1], [], []>} : vector<4x128xf32>, vector<128x128xf32>, vector<4x128xf32> -> vector<4x128xf32>
    %354 = arith.addf %347, %353 : vector<4x128xf32>
    %c1_389 = arith.constant 1 : index
    %c0_390 = arith.constant 0 : index
    %355 = tpu.strided_load %arg14[%c1_389, %c0_390] {strides = array<i32: 2, 1>} : memref<36x128xf32, #tpu.memory_space<vmem>>, vector<2x128xf32>
    %c13_391 = arith.constant 13 : index
    %c0_392 = arith.constant 0 : index
    %356 = tpu.strided_load %arg14[%c13_391, %c0_392] {strides = array<i32: 2, 1>} : memref<36x128xf32, #tpu.memory_space<vmem>>, vector<2x128xf32>
    %357 = tpu.concatenate %355, %356 in 0 : vector<2x128xf32>, vector<2x128xf32> -> vector<4x128xf32>
    %c0_393 = arith.constant 0 : index
    %c1_394 = arith.constant 1 : index
    %c0_395 = arith.constant 0 : index
    %c0_396 = arith.constant 0 : index
    %358 = vector.load %arg6[%c0_393, %c1_394, %c0_395, %c0_396] : memref<3x3x128x128xf32, #tpu.memory_space<vmem>>, vector<1x1x128x128xf32>
    %359 = vector.shape_cast %358 : vector<1x1x128x128xf32> to vector<128x128xf32>
    %cst_397 = arith.constant dense<0.000000e+00> : vector<4x128xf32>
    %360 = tpu.matmul %357, %359, %cst_397 {dimension_numbers = #tpu.dot_dimension_numbers<[1], [0], [0], [1], [0, 0, 1, 1], [], []>} : vector<4x128xf32>, vector<128x128xf32>, vector<4x128xf32> -> vector<4x128xf32>
    %361 = arith.addf %354, %360 : vector<4x128xf32>
    %c2_398 = arith.constant 2 : index
    %c0_399 = arith.constant 0 : index
    %362 = tpu.strided_load %arg14[%c2_398, %c0_399] {strides = array<i32: 2, 1>} : memref<36x128xf32, #tpu.memory_space<vmem>>, vector<2x128xf32>
    %c14 = arith.constant 14 : index
    %c0_400 = arith.constant 0 : index
    %363 = tpu.strided_load %arg14[%c14, %c0_400] {strides = array<i32: 2, 1>} : memref<36x128xf32, #tpu.memory_space<vmem>>, vector<2x128xf32>
    %364 = tpu.concatenate %362, %363 in 0 : vector<2x128xf32>, vector<2x128xf32> -> vector<4x128xf32>
    %c0_401 = arith.constant 0 : index
    %c2_402 = arith.constant 2 : index
    %c0_403 = arith.constant 0 : index
    %c0_404 = arith.constant 0 : index
    %365 = vector.load %arg6[%c0_401, %c2_402, %c0_403, %c0_404] : memref<3x3x128x128xf32, #tpu.memory_space<vmem>>, vector<1x1x128x128xf32>
    %366 = vector.shape_cast %365 : vector<1x1x128x128xf32> to vector<128x128xf32>
    %cst_405 = arith.constant dense<0.000000e+00> : vector<4x128xf32>
    %367 = tpu.matmul %364, %366, %cst_405 {dimension_numbers = #tpu.dot_dimension_numbers<[1], [0], [0], [1], [0, 0, 1, 1], [], []>} : vector<4x128xf32>, vector<128x128xf32>, vector<4x128xf32> -> vector<4x128xf32>
    %368 = arith.addf %361, %367 : vector<4x128xf32>
    %c6 = arith.constant 6 : index
    %c0_406 = arith.constant 0 : index
    %369 = tpu.strided_load %arg14[%c6, %c0_406] {strides = array<i32: 2, 1>} : memref<36x128xf32, #tpu.memory_space<vmem>>, vector<2x128xf32>
    %c18_407 = arith.constant 18 : index
    %c0_408 = arith.constant 0 : index
    %370 = tpu.strided_load %arg14[%c18_407, %c0_408] {strides = array<i32: 2, 1>} : memref<36x128xf32, #tpu.memory_space<vmem>>, vector<2x128xf32>
    %371 = tpu.concatenate %369, %370 in 0 : vector<2x128xf32>, vector<2x128xf32> -> vector<4x128xf32>
    %c1_409 = arith.constant 1 : index
    %c0_410 = arith.constant 0 : index
    %c0_411 = arith.constant 0 : index
    %c0_412 = arith.constant 0 : index
    %372 = vector.load %arg6[%c1_409, %c0_410, %c0_411, %c0_412] : memref<3x3x128x128xf32, #tpu.memory_space<vmem>>, vector<1x1x128x128xf32>
    %373 = vector.shape_cast %372 : vector<1x1x128x128xf32> to vector<128x128xf32>
    %cst_413 = arith.constant dense<0.000000e+00> : vector<4x128xf32>
    %374 = tpu.matmul %371, %373, %cst_413 {dimension_numbers = #tpu.dot_dimension_numbers<[1], [0], [0], [1], [0, 0, 1, 1], [], []>} : vector<4x128xf32>, vector<128x128xf32>, vector<4x128xf32> -> vector<4x128xf32>
    %375 = arith.addf %368, %374 : vector<4x128xf32>
    %c7_414 = arith.constant 7 : index
    %c0_415 = arith.constant 0 : index
    %376 = tpu.strided_load %arg14[%c7_414, %c0_415] {strides = array<i32: 2, 1>} : memref<36x128xf32, #tpu.memory_space<vmem>>, vector<2x128xf32>
    %c19_416 = arith.constant 19 : index
    %c0_417 = arith.constant 0 : index
    %377 = tpu.strided_load %arg14[%c19_416, %c0_417] {strides = array<i32: 2, 1>} : memref<36x128xf32, #tpu.memory_space<vmem>>, vector<2x128xf32>
    %378 = tpu.concatenate %376, %377 in 0 : vector<2x128xf32>, vector<2x128xf32> -> vector<4x128xf32>
    %c1_418 = arith.constant 1 : index
    %c1_419 = arith.constant 1 : index
    %c0_420 = arith.constant 0 : index
    %c0_421 = arith.constant 0 : index
    %379 = vector.load %arg6[%c1_418, %c1_419, %c0_420, %c0_421] : memref<3x3x128x128xf32, #tpu.memory_space<vmem>>, vector<1x1x128x128xf32>
    %380 = vector.shape_cast %379 : vector<1x1x128x128xf32> to vector<128x128xf32>
    %cst_422 = arith.constant dense<0.000000e+00> : vector<4x128xf32>
    %381 = tpu.matmul %378, %380, %cst_422 {dimension_numbers = #tpu.dot_dimension_numbers<[1], [0], [0], [1], [0, 0, 1, 1], [], []>} : vector<4x128xf32>, vector<128x128xf32>, vector<4x128xf32> -> vector<4x128xf32>
    %382 = arith.addf %375, %381 : vector<4x128xf32>
    %c8 = arith.constant 8 : index
    %c0_423 = arith.constant 0 : index
    %383 = tpu.strided_load %arg14[%c8, %c0_423] {strides = array<i32: 2, 1>} : memref<36x128xf32, #tpu.memory_space<vmem>>, vector<2x128xf32>
    %c20_424 = arith.constant 20 : index
    %c0_425 = arith.constant 0 : index
    %384 = tpu.strided_load %arg14[%c20_424, %c0_425] {strides = array<i32: 2, 1>} : memref<36x128xf32, #tpu.memory_space<vmem>>, vector<2x128xf32>
    %385 = tpu.concatenate %383, %384 in 0 : vector<2x128xf32>, vector<2x128xf32> -> vector<4x128xf32>
    %c1_426 = arith.constant 1 : index
    %c2_427 = arith.constant 2 : index
    %c0_428 = arith.constant 0 : index
    %c0_429 = arith.constant 0 : index
    %386 = vector.load %arg6[%c1_426, %c2_427, %c0_428, %c0_429] : memref<3x3x128x128xf32, #tpu.memory_space<vmem>>, vector<1x1x128x128xf32>
    %387 = vector.shape_cast %386 : vector<1x1x128x128xf32> to vector<128x128xf32>
    %cst_430 = arith.constant dense<0.000000e+00> : vector<4x128xf32>
    %388 = tpu.matmul %385, %387, %cst_430 {dimension_numbers = #tpu.dot_dimension_numbers<[1], [0], [0], [1], [0, 0, 1, 1], [], []>} : vector<4x128xf32>, vector<128x128xf32>, vector<4x128xf32> -> vector<4x128xf32>
    %389 = arith.addf %382, %388 : vector<4x128xf32>
    %c12_431 = arith.constant 12 : index
    %c0_432 = arith.constant 0 : index
    %390 = tpu.strided_load %arg14[%c12_431, %c0_432] {strides = array<i32: 2, 1>} : memref<36x128xf32, #tpu.memory_space<vmem>>, vector<2x128xf32>
    %c24 = arith.constant 24 : index
    %c0_433 = arith.constant 0 : index
    %391 = tpu.strided_load %arg14[%c24, %c0_433] {strides = array<i32: 2, 1>} : memref<36x128xf32, #tpu.memory_space<vmem>>, vector<2x128xf32>
    %392 = tpu.concatenate %390, %391 in 0 : vector<2x128xf32>, vector<2x128xf32> -> vector<4x128xf32>
    %c2_434 = arith.constant 2 : index
    %c0_435 = arith.constant 0 : index
    %c0_436 = arith.constant 0 : index
    %c0_437 = arith.constant 0 : index
    %393 = vector.load %arg6[%c2_434, %c0_435, %c0_436, %c0_437] : memref<3x3x128x128xf32, #tpu.memory_space<vmem>>, vector<1x1x128x128xf32>
    %394 = vector.shape_cast %393 : vector<1x1x128x128xf32> to vector<128x128xf32>
    %cst_438 = arith.constant dense<0.000000e+00> : vector<4x128xf32>
    %395 = tpu.matmul %392, %394, %cst_438 {dimension_numbers = #tpu.dot_dimension_numbers<[1], [0], [0], [1], [0, 0, 1, 1], [], []>} : vector<4x128xf32>, vector<128x128xf32>, vector<4x128xf32> -> vector<4x128xf32>
    %396 = arith.addf %389, %395 : vector<4x128xf32>
    %c13_439 = arith.constant 13 : index
    %c0_440 = arith.constant 0 : index
    %397 = tpu.strided_load %arg14[%c13_439, %c0_440] {strides = array<i32: 2, 1>} : memref<36x128xf32, #tpu.memory_space<vmem>>, vector<2x128xf32>
    %c25_441 = arith.constant 25 : index
    %c0_442 = arith.constant 0 : index
    %398 = tpu.strided_load %arg14[%c25_441, %c0_442] {strides = array<i32: 2, 1>} : memref<36x128xf32, #tpu.memory_space<vmem>>, vector<2x128xf32>
    %399 = tpu.concatenate %397, %398 in 0 : vector<2x128xf32>, vector<2x128xf32> -> vector<4x128xf32>
    %c2_443 = arith.constant 2 : index
    %c1_444 = arith.constant 1 : index
    %c0_445 = arith.constant 0 : index
    %c0_446 = arith.constant 0 : index
    %400 = vector.load %arg6[%c2_443, %c1_444, %c0_445, %c0_446] : memref<3x3x128x128xf32, #tpu.memory_space<vmem>>, vector<1x1x128x128xf32>
    %401 = vector.shape_cast %400 : vector<1x1x128x128xf32> to vector<128x128xf32>
    %cst_447 = arith.constant dense<0.000000e+00> : vector<4x128xf32>
    %402 = tpu.matmul %399, %401, %cst_447 {dimension_numbers = #tpu.dot_dimension_numbers<[1], [0], [0], [1], [0, 0, 1, 1], [], []>} : vector<4x128xf32>, vector<128x128xf32>, vector<4x128xf32> -> vector<4x128xf32>
    %403 = arith.addf %396, %402 : vector<4x128xf32>
    %c14_448 = arith.constant 14 : index
    %c0_449 = arith.constant 0 : index
    %404 = tpu.strided_load %arg14[%c14_448, %c0_449] {strides = array<i32: 2, 1>} : memref<36x128xf32, #tpu.memory_space<vmem>>, vector<2x128xf32>
    %c26 = arith.constant 26 : index
    %c0_450 = arith.constant 0 : index
    %405 = tpu.strided_load %arg14[%c26, %c0_450] {strides = array<i32: 2, 1>} : memref<36x128xf32, #tpu.memory_space<vmem>>, vector<2x128xf32>
    %406 = tpu.concatenate %404, %405 in 0 : vector<2x128xf32>, vector<2x128xf32> -> vector<4x128xf32>
    %c2_451 = arith.constant 2 : index
    %c2_452 = arith.constant 2 : index
    %c0_453 = arith.constant 0 : index
    %c0_454 = arith.constant 0 : index
    %407 = vector.load %arg6[%c2_451, %c2_452, %c0_453, %c0_454] : memref<3x3x128x128xf32, #tpu.memory_space<vmem>>, vector<1x1x128x128xf32>
    %408 = vector.shape_cast %407 : vector<1x1x128x128xf32> to vector<128x128xf32>
    %cst_455 = arith.constant dense<0.000000e+00> : vector<4x128xf32>
    %409 = tpu.matmul %406, %408, %cst_455 {dimension_numbers = #tpu.dot_dimension_numbers<[1], [0], [0], [1], [0, 0, 1, 1], [], []>} : vector<4x128xf32>, vector<128x128xf32>, vector<4x128xf32> -> vector<4x128xf32>
    %410 = arith.addf %403, %409 : vector<4x128xf32>
    %411 = vector.broadcast %346 : vector<1x128xf32> to vector<4x128xf32>
    %412 = arith.addf %410, %411 : vector<4x128xf32>
    %cst_456 = arith.constant 0.000000e+00 : f32
    %413 = vector.broadcast %cst_456 : f32 to vector<4x128xf32>
    %414 = arith.cmpf oge, %412, %413 : vector<4x128xf32>
    %cst_457 = arith.constant 0.00999999977 : f32
    %415 = vector.broadcast %cst_457 : f32 to vector<4x128xf32>
    %416 = arith.mulf %415, %412 : vector<4x128xf32>
    %417 = arith.select %414, %412, %416 : vector<4x128xi1>, vector<4x128xf32>
    %418 = vector.extract_strided_slice %417 {offsets = [0, 0], sizes = [2, 128], strides = [1, 1]} : vector<4x128xf32> to vector<2x128xf32>
    %c5 = arith.constant 5 : index
    %c0_458 = arith.constant 0 : index
    %419 = vector.load %arg15[%c5, %c0_458] : memref<16x128xf32, #tpu.memory_space<vmem>>, vector<2x128xf32>
    tpu.vector_store %arg15[%c5, %c0_458], %418 {strides = array<i32>} : memref<16x128xf32, #tpu.memory_space<vmem>>, vector<2x128xf32>,
    %420 = vector.extract_strided_slice %417 {offsets = [2, 0], sizes = [2, 128], strides = [1, 1]} : vector<4x128xf32> to vector<2x128xf32>
    %c9 = arith.constant 9 : index
    %c0_459 = arith.constant 0 : index
    %421 = vector.load %arg15[%c9, %c0_459] : memref<16x128xf32, #tpu.memory_space<vmem>>, vector<2x128xf32>
    tpu.vector_store %arg15[%c9, %c0_459], %420 {strides = array<i32>} : memref<16x128xf32, #tpu.memory_space<vmem>>, vector<2x128xf32>,
    %cst_460 = arith.constant 0.000000e+00 : f32
    %422 = vector.broadcast %cst_460 : f32 to vector<4x128xf32>
    %c0_461 = arith.constant 0 : index
    %c0_462 = arith.constant 0 : index
    %423 = vector.load %arg16[%c0_461, %c0_462] : memref<9x128xf32, #tpu.memory_space<vmem>>, vector<4x128xf32>
    tpu.vector_store %arg16[%c0_461, %c0_462], %422 {strides = array<i32>} : memref<9x128xf32, #tpu.memory_space<vmem>>, vector<4x128xf32>,
    %cst_463 = arith.constant 0.000000e+00 : f32
    %424 = vector.broadcast %cst_463 : f32 to vector<4x128xf32>
    %c5_464 = arith.constant 5 : index
    %c0_465 = arith.constant 0 : index
    %425 = vector.load %arg16[%c5_464, %c0_465] : memref<9x128xf32, #tpu.memory_space<vmem>>, vector<4x128xf32>
    tpu.vector_store %arg16[%c5_464, %c0_465], %424 {strides = array<i32>} : memref<9x128xf32, #tpu.memory_space<vmem>>, vector<4x128xf32>,
    %c0_466 = arith.constant 0 : index
    %c0_467 = arith.constant 0 : index
    %426 = vector.load %arg9[%c0_466, %c0_467] : memref<1x128xf32, #tpu.memory_space<vmem>>, vector<1x128xf32>
    %cst_468 = arith.constant 0.000000e+00 : f32
    %427 = vector.broadcast %cst_468 : f32 to vector<1x128xf32>
    %c0_469 = arith.constant 0 : index
    %c0_470 = arith.constant 0 : index
    %428 = vector.load %arg15[%c0_469, %c0_470] : memref<16x128xf32, #tpu.memory_space<vmem>>, vector<1x128xf32>
    %c0_471 = arith.constant 0 : index
    %c0_472 = arith.constant 0 : index
    %c0_473 = arith.constant 0 : index
    %c0_474 = arith.constant 0 : index
    %429 = vector.load %arg8[%c0_471, %c0_472, %c0_473, %c0_474] : memref<3x3x128x128xf32, #tpu.memory_space<vmem>>, vector<1x1x128x128xf32>
    %430 = vector.shape_cast %429 : vector<1x1x128x128xf32> to vector<128x128xf32>
    %cst_475 = arith.constant dense<0.000000e+00> : vector<1x128xf32>
    %431 = tpu.matmul %428, %430, %cst_475 {dimension_numbers = #tpu.dot_dimension_numbers<[1], [0], [0], [1], [0, 0, 1, 1], [], []>} : vector<1x128xf32>, vector<128x128xf32>, vector<1x128xf32> -> vector<1x128xf32>
    %432 = arith.addf %427, %431 : vector<1x128xf32>
    %c1_476 = arith.constant 1 : index
    %c0_477 = arith.constant 0 : index
    %433 = vector.load %arg15[%c1_476, %c0_477] : memref<16x128xf32, #tpu.memory_space<vmem>>, vector<1x128xf32>
    %c0_478 = arith.constant 0 : index
    %c1_479 = arith.constant 1 : index
    %c0_480 = arith.constant 0 : index
    %c0_481 = arith.constant 0 : index
    %434 = vector.load %arg8[%c0_478, %c1_479, %c0_480, %c0_481] : memref<3x3x128x128xf32, #tpu.memory_space<vmem>>, vector<1x1x128x128xf32>
    %435 = vector.shape_cast %434 : vector<1x1x128x128xf32> to vector<128x128xf32>
    %cst_482 = arith.constant dense<0.000000e+00> : vector<1x128xf32>
    %436 = tpu.matmul %433, %435, %cst_482 {dimension_numbers = #tpu.dot_dimension_numbers<[1], [0], [0], [1], [0, 0, 1, 1], [], []>} : vector<1x128xf32>, vector<128x128xf32>, vector<1x128xf32> -> vector<1x128xf32>
    %437 = arith.addf %432, %436 : vector<1x128xf32>
    %c2_483 = arith.constant 2 : index
    %c0_484 = arith.constant 0 : index
    %438 = vector.load %arg15[%c2_483, %c0_484] : memref<16x128xf32, #tpu.memory_space<vmem>>, vector<1x128xf32>
    %c0_485 = arith.constant 0 : index
    %c2_486 = arith.constant 2 : index
    %c0_487 = arith.constant 0 : index
    %c0_488 = arith.constant 0 : index
    %439 = vector.load %arg8[%c0_485, %c2_486, %c0_487, %c0_488] : memref<3x3x128x128xf32, #tpu.memory_space<vmem>>, vector<1x1x128x128xf32>
    %440 = vector.shape_cast %439 : vector<1x1x128x128xf32> to vector<128x128xf32>
    %cst_489 = arith.constant dense<0.000000e+00> : vector<1x128xf32>
    %441 = tpu.matmul %438, %440, %cst_489 {dimension_numbers = #tpu.dot_dimension_numbers<[1], [0], [0], [1], [0, 0, 1, 1], [], []>} : vector<1x128xf32>, vector<128x128xf32>, vector<1x128xf32> -> vector<1x128xf32>
    %442 = arith.addf %437, %441 : vector<1x128xf32>
    %c4 = arith.constant 4 : index
    %c0_490 = arith.constant 0 : index
    %443 = vector.load %arg15[%c4, %c0_490] : memref<16x128xf32, #tpu.memory_space<vmem>>, vector<1x128xf32>
    %c1_491 = arith.constant 1 : index
    %c0_492 = arith.constant 0 : index
    %c0_493 = arith.constant 0 : index
    %c0_494 = arith.constant 0 : index
    %444 = vector.load %arg8[%c1_491, %c0_492, %c0_493, %c0_494] : memref<3x3x128x128xf32, #tpu.memory_space<vmem>>, vector<1x1x128x128xf32>
    %445 = vector.shape_cast %444 : vector<1x1x128x128xf32> to vector<128x128xf32>
    %cst_495 = arith.constant dense<0.000000e+00> : vector<1x128xf32>
    %446 = tpu.matmul %443, %445, %cst_495 {dimension_numbers = #tpu.dot_dimension_numbers<[1], [0], [0], [1], [0, 0, 1, 1], [], []>} : vector<1x128xf32>, vector<128x128xf32>, vector<1x128xf32> -> vector<1x128xf32>
    %447 = arith.addf %442, %446 : vector<1x128xf32>
    %c5_496 = arith.constant 5 : index
    %c0_497 = arith.constant 0 : index
    %448 = vector.load %arg15[%c5_496, %c0_497] : memref<16x128xf32, #tpu.memory_space<vmem>>, vector<1x128xf32>
    %c1_498 = arith.constant 1 : index
    %c1_499 = arith.constant 1 : index
    %c0_500 = arith.constant 0 : index
    %c0_501 = arith.constant 0 : index
    %449 = vector.load %arg8[%c1_498, %c1_499, %c0_500, %c0_501] : memref<3x3x128x128xf32, #tpu.memory_space<vmem>>, vector<1x1x128x128xf32>
    %450 = vector.shape_cast %449 : vector<1x1x128x128xf32> to vector<128x128xf32>
    %cst_502 = arith.constant dense<0.000000e+00> : vector<1x128xf32>
    %451 = tpu.matmul %448, %450, %cst_502 {dimension_numbers = #tpu.dot_dimension_numbers<[1], [0], [0], [1], [0, 0, 1, 1], [], []>} : vector<1x128xf32>, vector<128x128xf32>, vector<1x128xf32> -> vector<1x128xf32>
    %452 = arith.addf %447, %451 : vector<1x128xf32>
    %c6_503 = arith.constant 6 : index
    %c0_504 = arith.constant 0 : index
    %453 = vector.load %arg15[%c6_503, %c0_504] : memref<16x128xf32, #tpu.memory_space<vmem>>, vector<1x128xf32>
    %c1_505 = arith.constant 1 : index
    %c2_506 = arith.constant 2 : index
    %c0_507 = arith.constant 0 : index
    %c0_508 = arith.constant 0 : index
    %454 = vector.load %arg8[%c1_505, %c2_506, %c0_507, %c0_508] : memref<3x3x128x128xf32, #tpu.memory_space<vmem>>, vector<1x1x128x128xf32>
    %455 = vector.shape_cast %454 : vector<1x1x128x128xf32> to vector<128x128xf32>
    %cst_509 = arith.constant dense<0.000000e+00> : vector<1x128xf32>
    %456 = tpu.matmul %453, %455, %cst_509 {dimension_numbers = #tpu.dot_dimension_numbers<[1], [0], [0], [1], [0, 0, 1, 1], [], []>} : vector<1x128xf32>, vector<128x128xf32>, vector<1x128xf32> -> vector<1x128xf32>
    %457 = arith.addf %452, %456 : vector<1x128xf32>
    %c8_510 = arith.constant 8 : index
    %c0_511 = arith.constant 0 : index
    %458 = vector.load %arg15[%c8_510, %c0_511] : memref<16x128xf32, #tpu.memory_space<vmem>>, vector<1x128xf32>
    %c2_512 = arith.constant 2 : index
    %c0_513 = arith.constant 0 : index
    %c0_514 = arith.constant 0 : index
    %c0_515 = arith.constant 0 : index
    %459 = vector.load %arg8[%c2_512, %c0_513, %c0_514, %c0_515] : memref<3x3x128x128xf32, #tpu.memory_space<vmem>>, vector<1x1x128x128xf32>
    %460 = vector.shape_cast %459 : vector<1x1x128x128xf32> to vector<128x128xf32>
    %cst_516 = arith.constant dense<0.000000e+00> : vector<1x128xf32>
    %461 = tpu.matmul %458, %460, %cst_516 {dimension_numbers = #tpu.dot_dimension_numbers<[1], [0], [0], [1], [0, 0, 1, 1], [], []>} : vector<1x128xf32>, vector<128x128xf32>, vector<1x128xf32> -> vector<1x128xf32>
    %462 = arith.addf %457, %461 : vector<1x128xf32>
    %c9_517 = arith.constant 9 : index
    %c0_518 = arith.constant 0 : index
    %463 = vector.load %arg15[%c9_517, %c0_518] : memref<16x128xf32, #tpu.memory_space<vmem>>, vector<1x128xf32>
    %c2_519 = arith.constant 2 : index
    %c1_520 = arith.constant 1 : index
    %c0_521 = arith.constant 0 : index
    %c0_522 = arith.constant 0 : index
    %464 = vector.load %arg8[%c2_519, %c1_520, %c0_521, %c0_522] : memref<3x3x128x128xf32, #tpu.memory_space<vmem>>, vector<1x1x128x128xf32>
    %465 = vector.shape_cast %464 : vector<1x1x128x128xf32> to vector<128x128xf32>
    %cst_523 = arith.constant dense<0.000000e+00> : vector<1x128xf32>
    %466 = tpu.matmul %463, %465, %cst_523 {dimension_numbers = #tpu.dot_dimension_numbers<[1], [0], [0], [1], [0, 0, 1, 1], [], []>} : vector<1x128xf32>, vector<128x128xf32>, vector<1x128xf32> -> vector<1x128xf32>
    %467 = arith.addf %462, %466 : vector<1x128xf32>
    %c10_524 = arith.constant 10 : index
    %c0_525 = arith.constant 0 : index
    %468 = vector.load %arg15[%c10_524, %c0_525] : memref<16x128xf32, #tpu.memory_space<vmem>>, vector<1x128xf32>
    %c2_526 = arith.constant 2 : index
    %c2_527 = arith.constant 2 : index
    %c0_528 = arith.constant 0 : index
    %c0_529 = arith.constant 0 : index
    %469 = vector.load %arg8[%c2_526, %c2_527, %c0_528, %c0_529] : memref<3x3x128x128xf32, #tpu.memory_space<vmem>>, vector<1x1x128x128xf32>
    %470 = vector.shape_cast %469 : vector<1x1x128x128xf32> to vector<128x128xf32>
    %cst_530 = arith.constant dense<0.000000e+00> : vector<1x128xf32>
    %471 = tpu.matmul %468, %470, %cst_530 {dimension_numbers = #tpu.dot_dimension_numbers<[1], [0], [0], [1], [0, 0, 1, 1], [], []>} : vector<1x128xf32>, vector<128x128xf32>, vector<1x128xf32> -> vector<1x128xf32>
    %472 = arith.addf %467, %471 : vector<1x128xf32>
    %473 = arith.addf %472, %426 : vector<1x128xf32>
    %cst_531 = arith.constant 0.000000e+00 : f32
    %474 = vector.broadcast %cst_531 : f32 to vector<1x128xf32>
    %475 = arith.cmpf oge, %473, %474 : vector<1x128xf32>
    %cst_532 = arith.constant 0.00999999977 : f32
    %476 = vector.broadcast %cst_532 : f32 to vector<1x128xf32>
    %477 = arith.mulf %476, %473 : vector<1x128xf32>
    %478 = arith.select %475, %473, %477 : vector<1x128xi1>, vector<1x128xf32>
    %c4_533 = arith.constant 4 : index
    %c0_534 = arith.constant 0 : index
    %479 = vector.load %arg16[%c4_533, %c0_534] : memref<9x128xf32, #tpu.memory_space<vmem>>, vector<1x128xf32>
    tpu.vector_store %arg16[%c4_533, %c0_534], %478 {strides = array<i32>} : memref<9x128xf32, #tpu.memory_space<vmem>>, vector<1x128xf32>,
    %c4_535 = arith.constant 4 : index
    %c0_536 = arith.constant 0 : index
    %480 = vector.load %arg16[%c4_535, %c0_536] : memref<9x128xf32, #tpu.memory_space<vmem>>, vector<1x128xf32>
    %c0_537 = arith.constant 0 : index
    %c0_538 = arith.constant 0 : index
    %481 = vector.load %arg10[%c0_537, %c0_538] : memref<128x128xf32, #tpu.memory_space<vmem>>, vector<128x128xf32>
    %cst_539 = arith.constant dense<0.000000e+00> : vector<1x128xf32>
    %482 = tpu.matmul %480, %481, %cst_539 {dimension_numbers = #tpu.dot_dimension_numbers<[1], [0], [0], [1], [0, 0, 1, 1], [], []>} : vector<1x128xf32>, vector<128x128xf32>, vector<1x128xf32> -> vector<1x128xf32>
    %c0_540 = arith.constant 0 : index
    %c0_541 = arith.constant 0 : index
    %483 = vector.load %arg11[%c0_540, %c0_541] : memref<1x128xf32, #tpu.memory_space<vmem>>, vector<1x128xf32>
    %484 = arith.addf %482, %483 : vector<1x128xf32>
    %c0_542 = arith.constant 0 : index
    %c0_543 = arith.constant 0 : index
    %c0_544 = arith.constant 0 : index
    %485 = vector.load %arg12[%c0_542, %c0_543, %c0_544] : memref<1x1x128xf32, #tpu.memory_space<vmem>>, vector<1x1x128xf32>
    %486 = vector.shape_cast %485 : vector<1x1x128xf32> to vector<1x128xf32>
    %487 = vector.shape_cast %484 : vector<1x128xf32> to vector<1x1x128xf32>
    tpu.vector_store %arg12[%c0_542, %c0_543, %c0_544], %487 {strides = array<i32>} : memref<1x1x128xf32, #tpu.memory_space<vmem>>, vector<1x1x128xf32>,
    return
  }
  func.func @transform_0(%arg0: i32) -> (i32, i32, i32) {
    %c0_i32 = arith.constant 0 : i32
    %c0_i32_0 = arith.constant 0 : i32
    %c0_i32_1 = arith.constant 0 : i32
    return %arg0, %c0_i32, %c0_i32_0 : i32, i32, i32
  }
  func.func @transform_1(%arg0: i32) -> (i32, i32, i32, i32) {
    %c0_i32 = arith.constant 0 : i32
    %c0_i32_0 = arith.constant 0 : i32
    %c0_i32_1 = arith.constant 0 : i32
    %c0_i32_2 = arith.constant 0 : i32
    %c0_i32_3 = arith.constant 0 : i32
    return %c0_i32, %c0_i32_0, %c0_i32_1, %c0_i32_2 : i32, i32, i32, i32
  }
  func.func @transform_2(%arg0: i32) -> (i32, i32) {
    %c0_i32 = arith.constant 0 : i32
    %c0_i32_0 = arith.constant 0 : i32
    %c0_i32_1 = arith.constant 0 : i32
    return %c0_i32, %c0_i32_0 : i32, i32
  }
  func.func @transform_3(%arg0: i32) -> (i32, i32, i32, i32) {
    %c0_i32 = arith.constant 0 : i32
    %c0_i32_0 = arith.constant 0 : i32
    %c0_i32_1 = arith.constant 0 : i32
    %c0_i32_2 = arith.constant 0 : i32
    %c0_i32_3 = arith.constant 0 : i32
    return %c0_i32, %c0_i32_0, %c0_i32_1, %c0_i32_2 : i32, i32, i32, i32
  }
  func.func @transform_4(%arg0: i32) -> (i32, i32) {
    %c0_i32 = arith.constant 0 : i32
    %c0_i32_0 = arith.constant 0 : i32
    %c0_i32_1 = arith.constant 0 : i32
    return %c0_i32, %c0_i32_0 : i32, i32
  }
  func.func @transform_5(%arg0: i32) -> (i32, i32, i32, i32) {
    %c0_i32 = arith.constant 0 : i32
    %c0_i32_0 = arith.constant 0 : i32
    %c0_i32_1 = arith.constant 0 : i32
    %c0_i32_2 = arith.constant 0 : i32
    %c0_i32_3 = arith.constant 0 : i32
    return %c0_i32, %c0_i32_0, %c0_i32_1, %c0_i32_2 : i32, i32, i32, i32
  }
  func.func @transform_6(%arg0: i32) -> (i32, i32) {
    %c0_i32 = arith.constant 0 : i32
    %c0_i32_0 = arith.constant 0 : i32
    %c0_i32_1 = arith.constant 0 : i32
    return %c0_i32, %c0_i32_0 : i32, i32
  }
  func.func @transform_7(%arg0: i32) -> (i32, i32, i32, i32) {
    %c0_i32 = arith.constant 0 : i32
    %c0_i32_0 = arith.constant 0 : i32
    %c0_i32_1 = arith.constant 0 : i32
    %c0_i32_2 = arith.constant 0 : i32
    %c0_i32_3 = arith.constant 0 : i32
    return %c0_i32, %c0_i32_0, %c0_i32_1, %c0_i32_2 : i32, i32, i32, i32
  }
  func.func @transform_8(%arg0: i32) -> (i32, i32) {
    %c0_i32 = arith.constant 0 : i32
    %c0_i32_0 = arith.constant 0 : i32
    %c0_i32_1 = arith.constant 0 : i32
    return %c0_i32, %c0_i32_0 : i32, i32
  }
  func.func @transform_9(%arg0: i32) -> (i32, i32) {
    %c0_i32 = arith.constant 0 : i32
    %c0_i32_0 = arith.constant 0 : i32
    %c0_i32_1 = arith.constant 0 : i32
    return %c0_i32, %c0_i32_0 : i32, i32
  }
  func.func @transform_10(%arg0: i32) -> (i32, i32) {
    %c0_i32 = arith.constant 0 : i32
    %c0_i32_0 = arith.constant 0 : i32
    %c0_i32_1 = arith.constant 0 : i32
    return %c0_i32, %c0_i32_0 : i32, i32
  }
  func.func @transform_11(%arg0: i32) -> (i32, i32, i32) {
    %c0_i32 = arith.constant 0 : i32
    %c0_i32_0 = arith.constant 0 : i32
    %c0_i32_1 = arith.constant 0 : i32
    return %arg0, %c0_i32, %c0_i32_0 : i32, i32, i32
  }
}

</mosaic_0001>

<llo_original>
// kernel: gradual_style_block_forward.1
$region0: #{gradual_style_block_forward.1}
  #allocation0 [shape = 'u32[]', space=smem, size = 0x4, offset = 0x4, fixed_abs, tag = 'smem constant byte address 0x4 - core index']
  #allocation1 [shape = 'u32[72,128]{1,0:T(1,128)}', space=vmem, size = 0x9000, scoped, tag = 'internal scratch']
  #allocation2 [shape = 'f32[100,128]{1,0:T(8,128)}', space=vmem, size = 0xd000, scoped, tag = 'scratch operand']
  #allocation3 [shape = 'f32[36,128]{1,0:T(8,128)}', space=vmem, size = 0x5000, scoped, tag = 'scratch operand']
  #allocation4 [shape = 'f32[16,128]{1,0:T(8,128)}', space=vmem, size = 0x2000, scoped, tag = 'scratch operand']
  #allocation5 [shape = 'f32[9,128]{1,0:T(8,128)}', space=vmem, size = 0x2000, scoped, tag = 'scratch operand']
  %s0 = inlined_call_operand.vmem [shape: f32[2,324,128], index: 0, kind: input, shape index: {}]
  %s1 = inlined_call_operand.vmem [shape: f32[3,3,128,128], index: 1, kind: input, shape index: {}]
  %s2 = inlined_call_operand.vmem [shape: f32[1,128], index: 2, kind: input, shape index: {}]
  %s3 = inlined_call_operand.vmem [shape: f32[3,3,128,128], index: 3, kind: input, shape index: {}]
  %s4 = inlined_call_operand.vmem [shape: f32[1,128], index: 4, kind: input, shape index: {}]
  %s5 = inlined_call_operand.hbm [shape: f32[3,3,128,128], index: 5, kind: input, shape index: {}]
  %s6 = inlined_call_operand.vmem [shape: f32[1,128], index: 6, kind: input, shape index: {}]
  %s7 = inlined_call_operand.hbm [shape: f32[3,3,128,128], index: 7, kind: input, shape index: {}]
  %s8 = inlined_call_operand.vmem [shape: f32[1,128], index: 8, kind: input, shape index: {}]
  %s9 = inlined_call_operand.vmem [shape: f32[128,128], index: 9, kind: input, shape index: {}]
  %s10 = inlined_call_operand.vmem [shape: f32[1,128], index: 10, kind: input, shape index: {}]
  %s11 = inlined_call_operand.hbm [shape: f32[2,1,128], index: 11, kind: output, shape index: {}]
  %s12 = sld [smem:[#allocation0]]
  $region85: #{gradual_style_block_forward.1} parent=0
    _
  %s14 = ssub.s32 1, %s12
  %s15 = scalar_select 0, %s14, %s12
  $region1: #{gradual_style_block_forward.1} parent=0
    #allocation6 [shape = 'u8[589824]{0}', space=vmem, size = 0x90000, scoped, tag = 'input window, operand 5, single buffered']
    #allocation7 [shape = 's32[2]{0}', space=sflag, size = 0x8, scoped, tag = 'scoped memory for gradual_style_block_forward.1']
    #allocation8 [shape = 's32[2]{0}', space=sflag, size = 0x8, scoped, tag = 'scoped memory for gradual_style_block_forward.1']
    #allocation9 [shape = 'u8[589824]{0}', space=vmem, size = 0x90000, scoped, tag = 'input window, operand 7, single buffered']
    #allocation10 [shape = 's32[1]{0}', space=sflag, size = 0x4, scoped, tag = 'scoped memory for gradual_style_block_forward.1']
    #allocation11 [shape = 'u8[1024]{0}', space=vmem, size = 0x400, scoped, tag = 'output window, operand 0']
    %16 = vsyncpa [#allocation7], 0
    %17 = vsyncpa [#allocation10], 0
    %18 = vsyncpa [#allocation8], 0
    %s19 = scalar_lea.sflag [#allocation8], 1
    %20 = vsyncpa %s19, 0
    loop: start=0, step=1, limit=4
    $region2: #{gradual_style_block_forward.1} parent=1 // loop_pre_header
      _
    $region3: #{gradual_style_block_forward.1} parent=1 // loop_header
      %s22 = sphi 0, %s26
      %p23 = scmp.ge.s32.totalorder %s22, 4
      %s32 = sphi 0, %s34
      %s35 = sphi 0, %s32
      %s36 = sphi 0, %s35
      %s52 = sphi 0, %s36
      %s56 = sphi 0, %s56
      %s58 = sphi 0, %s56
      %s59 = sphi 0, %s58
      %s73 = sphi 0, %s59
      %s77 = sphi 0, %s77
      %s79 = sphi 0, %s77
      %s80 = sphi 0, %s79
      %s94 = sphi 0, %s80
      %s98 = sphi 0, %s98
      %s100 = sphi 0, %s98
      %s101 = sphi 0, %s100
      %s115 = sphi 0, %s101
      %s119 = sphi 0, %s119
      %s121 = sphi 0, %s119
      %s122 = sphi 0, %s121
      %s136 = sphi 0, %s122
      %s140 = sphi 0, %s140
      %s142 = sphi 0, %s140
      %s143 = sphi 0, %s142
      %s157 = sphi 0, %s143
      %s161 = sphi 0, %s161
      %s163 = sphi 0, %s161
      %s164 = sphi 0, %s163
      %s178 = sphi 0, %s164
      %s182 = sphi 0, %s182
      %s184 = sphi 0, %s182
      %s185 = sphi 0, %s184
      %s199 = sphi 0, %s185
      %s203 = sphi 0, %s203
      %s205 = sphi 0, %s203
      %s206 = sphi 0, %s205
      %s220 = sphi 0, %s206
      %s224 = sphi 0, %s224
      %s226 = sphi 0, %s224
      %s227 = sphi 0, %s226
      %s241 = sphi 0, %s227
      %s245 = sphi 0, %s245
      %s247 = sphi 0, %s245
      %s248 = sphi 0, %s247
      %s262 = sphi 0, %s248
      %s268 = sphi 0, %s270
      %s271 = sphi 0, %s268
      %s272 = sphi 0, %s271
      %s288 = sphi 0, %s272
    $region4: #{gradual_style_block_forward.1} parent=1 // loop_header_branch
      %25 = sbr.rel (%p23) target = $region8
    $region5: #{gradual_style_block_forward.1} parent=1 // loop_body
      %s27 = ssub.s32 %s22, 1
      %s28 = ssub.s32 %s22, 2
      %s29 = sadd.s32 %s22, 1
      %s30 = ssub.s32 %s22, %s29
      %p31 = scmp.eq.s32.totalorder %s30, 0
      %s33 = sadd.s32 %s32, 1
      %s34 = scalar_select %p31, %s32, %s33
      %p37 = pneg %p31
      %p38 = scmp.eq.s32.totalorder %s22, 1
      %p39 = por %p37, %p38
      %p40 = scmp.ne.s32.totalorder %s32, %s35
      %p41 = scmp.eq.s32.totalorder %s22, 0
      %p42 = por %p40, %p41
      %p43 = scmp.ne.s32.totalorder %s32, %s35
      %p44 = scmp.eq.s32.totalorder %s27, 1
      %p45 = por %p43, %p44
      %p46 = scmp.ne.s32.totalorder %s35, %s36
      %p47 = scmp.eq.s32.totalorder %s27, 0
      %p48 = por %p46, %p47
      %p49 = scmp.ne.s32.totalorder %s35, %s36
      %p50 = scmp.eq.s32.totalorder %s28, 1
      %p51 = por %p49, %p50
      %p53 = scmp.ne.s32.totalorder %s36, %s52
      %p54 = scmp.eq.s32.totalorder %s28, 0
      %p55 = por %p53, %p54
      %s57 = sadd.s32 %s56, 1
      %p60 = scmp.eq.s32.totalorder %s22, 1
      %p61 = scmp.ne.s32.totalorder %s56, %s58
      %p62 = scmp.eq.s32.totalorder %s22, 0
      %p63 = por %p61, %p62
      %p64 = scmp.ne.s32.totalorder %s56, %s58
      %p65 = scmp.eq.s32.totalorder %s27, 1
      %p66 = por %p64, %p65
      %p67 = scmp.ne.s32.totalorder %s58, %s59
      %p68 = scmp.eq.s32.totalorder %s27, 0
      %p69 = por %p67, %p68
      %p70 = scmp.ne.s32.totalorder %s58, %s59
      %p71 = scmp.eq.s32.totalorder %s28, 1
      %p72 = por %p70, %p71
      %p74 = scmp.ne.s32.totalorder %s59, %s73
      %p75 = scmp.eq.s32.totalorder %s28, 0
      %p76 = por %p74, %p75
      %s78 = sadd.s32 %s77, 1
      %p81 = scmp.eq.s32.totalorder %s22, 1
      %p82 = scmp.ne.s32.totalorder %s77, %s79
      %p83 = scmp.eq.s32.totalorder %s22, 0
      %p84 = por %p82, %p83
      %p85 = scmp.ne.s32.totalorder %s77, %s79
      %p86 = scmp.eq.s32.totalorder %s27, 1
      %p87 = por %p85, %p86
      %p88 = scmp.ne.s32.totalorder %s79, %s80
      %p89 = scmp.eq.s32.totalorder %s27, 0
      %p90 = por %p88, %p89
      %p91 = scmp.ne.s32.totalorder %s79, %s80
      %p92 = scmp.eq.s32.totalorder %s28, 1
      %p93 = por %p91, %p92
      %p95 = scmp.ne.s32.totalorder %s80, %s94
      %p96 = scmp.eq.s32.totalorder %s28, 0
      %p97 = por %p95, %p96
      %s99 = sadd.s32 %s98, 1
      %p102 = scmp.eq.s32.totalorder %s22, 1
      %p103 = scmp.ne.s32.totalorder %s98, %s100
      %p104 = scmp.eq.s32.totalorder %s22, 0
      %p105 = por %p103, %p104
      %p106 = scmp.ne.s32.totalorder %s98, %s100
      %p107 = scmp.eq.s32.totalorder %s27, 1
      %p108 = por %p106, %p107
      %p109 = scmp.ne.s32.totalorder %s100, %s101
      %p110 = scmp.eq.s32.totalorder %s27, 0
      %p111 = por %p109, %p110
      %p112 = scmp.ne.s32.totalorder %s100, %s101
      %p113 = scmp.eq.s32.totalorder %s28, 1
      %p114 = por %p112, %p113
      %p116 = scmp.ne.s32.totalorder %s101, %s115
      %p117 = scmp.eq.s32.totalorder %s28, 0
      %p118 = por %p116, %p117
      %s120 = sadd.s32 %s119, 1
      %p123 = scmp.eq.s32.totalorder %s22, 1
      %p124 = scmp.ne.s32.totalorder %s119, %s121
      %p125 = scmp.eq.s32.totalorder %s22, 0
      %p126 = por %p124, %p125
      %p127 = scmp.ne.s32.totalorder %s119, %s121
      %p128 = scmp.eq.s32.totalorder %s27, 1
      %p129 = por %p127, %p128
      %p130 = scmp.ne.s32.totalorder %s121, %s122
      %p131 = scmp.eq.s32.totalorder %s27, 0
      %p132 = por %p130, %p131
      %p133 = scmp.ne.s32.totalorder %s121, %s122
      %p134 = scmp.eq.s32.totalorder %s28, 1
      %p135 = por %p133, %p134
      %p137 = scmp.ne.s32.totalorder %s122, %s136
      %p138 = scmp.eq.s32.totalorder %s28, 0
      %p139 = por %p137, %p138
      %s141 = sadd.s32 %s140, 1
      %p144 = scmp.eq.s32.totalorder %s22, 1
      %p145 = scmp.ne.s32.totalorder %s140, %s142
      %p146 = scmp.eq.s32.totalorder %s22, 0
      %p147 = por %p145, %p146
      %p148 = scmp.ne.s32.totalorder %s140, %s142
      %p149 = scmp.eq.s32.totalorder %s27, 1
      %p150 = por %p148, %p149
      %p151 = scmp.ne.s32.totalorder %s142, %s143
      %p152 = scmp.eq.s32.totalorder %s27, 0
      %p153 = por %p151, %p152
      %p154 = scmp.ne.s32.totalorder %s142, %s143
      %p155 = scmp.eq.s32.totalorder %s28, 1
      %p156 = por %p154, %p155
      %p158 = scmp.ne.s32.totalorder %s143, %s157
      %p159 = scmp.eq.s32.totalorder %s28, 0
      %p160 = por %p158, %p159
      %s162 = sadd.s32 %s161, 1
      %p165 = scmp.eq.s32.totalorder %s22, 1
      %p166 = scmp.ne.s32.totalorder %s161, %s163
      %p167 = scmp.eq.s32.totalorder %s22, 0
      %p168 = por %p166, %p167
      %p169 = scmp.ne.s32.totalorder %s161, %s163
      %p170 = scmp.eq.s32.totalorder %s27, 1
      %p171 = por %p169, %p170
      %p172 = scmp.ne.s32.totalorder %s163, %s164
      %p173 = scmp.eq.s32.totalorder %s27, 0
      %p174 = por %p172, %p173
      %p175 = scmp.ne.s32.totalorder %s163, %s164
      %p176 = scmp.eq.s32.totalorder %s28, 1
      %p177 = por %p175, %p176
      %p179 = scmp.ne.s32.totalorder %s164, %s178
      %p180 = scmp.eq.s32.totalorder %s28, 0
      %p181 = por %p179, %p180
      %s183 = sadd.s32 %s182, 1
      %p186 = scmp.eq.s32.totalorder %s22, 1
      %p187 = scmp.ne.s32.totalorder %s182, %s184
      %p188 = scmp.eq.s32.totalorder %s22, 0
      %p189 = por %p187, %p188
      %p190 = scmp.ne.s32.totalorder %s182, %s184
      %p191 = scmp.eq.s32.totalorder %s27, 1
      %p192 = por %p190, %p191
      %p193 = scmp.ne.s32.totalorder %s184, %s185
      %p194 = scmp.eq.s32.totalorder %s27, 0
      %p195 = por %p193, %p194
      %p196 = scmp.ne.s32.totalorder %s184, %s185
      %p197 = scmp.eq.s32.totalorder %s28, 1
      %p198 = por %p196, %p197
      %p200 = scmp.ne.s32.totalorder %s185, %s199
      %p201 = scmp.eq.s32.totalorder %s28, 0
      %p202 = por %p200, %p201
      %s204 = sadd.s32 %s203, 1
      %p207 = scmp.eq.s32.totalorder %s22, 1
      %p208 = scmp.ne.s32.totalorder %s203, %s205
      %p209 = scmp.eq.s32.totalorder %s22, 0
      %p210 = por %p208, %p209
      %p211 = scmp.ne.s32.totalorder %s203, %s205
      %p212 = scmp.eq.s32.totalorder %s27, 1
      %p213 = por %p211, %p212
      %p214 = scmp.ne.s32.totalorder %s205, %s206
      %p215 = scmp.eq.s32.totalorder %s27, 0
      %p216 = por %p214, %p215
      %p217 = scmp.ne.s32.totalorder %s205, %s206
      %p218 = scmp.eq.s32.totalorder %s28, 1
      %p219 = por %p217, %p218
      %p221 = scmp.ne.s32.totalorder %s206, %s220
      %p222 = scmp.eq.s32.totalorder %s28, 0
      %p223 = por %p221, %p222
      %s225 = sadd.s32 %s224, 1
      %p228 = scmp.eq.s32.totalorder %s22, 1
      %p229 = scmp.ne.s32.totalorder %s224, %s226
      %p230 = scmp.eq.s32.totalorder %s22, 0
      %p231 = por %p229, %p230
      %p232 = scmp.ne.s32.totalorder %s224, %s226
      %p233 = scmp.eq.s32.totalorder %s27, 1
      %p234 = por %p232, %p233
      %p235 = scmp.ne.s32.totalorder %s226, %s227
      %p236 = scmp.eq.s32.totalorder %s27, 0
      %p237 = por %p235, %p236
      %p238 = scmp.ne.s32.totalorder %s226, %s227
      %p239 = scmp.eq.s32.totalorder %s28, 1
      %p240 = por %p238, %p239
      %p242 = scmp.ne.s32.totalorder %s227, %s241
      %p243 = scmp.eq.s32.totalorder %s28, 0
      %p244 = por %p242, %p243
      %s246 = sadd.s32 %s245, 1
      %p249 = scmp.eq.s32.totalorder %s22, 1
      %p250 = scmp.ne.s32.totalorder %s245, %s247
      %p251 = scmp.eq.s32.totalorder %s22, 0
      %p252 = por %p250, %p251
      %p253 = scmp.ne.s32.totalorder %s245, %s247
      %p254 = scmp.eq.s32.totalorder %s27, 1
      %p255 = por %p253, %p254
      %p256 = scmp.ne.s32.totalorder %s247, %s248
      %p257 = scmp.eq.s32.totalorder %s27, 0
      %p258 = por %p256, %p257
      %p259 = scmp.ne.s32.totalorder %s247, %s248
      %p260 = scmp.eq.s32.totalorder %s28, 1
      %p261 = por %p259, %p260
      %p263 = scmp.ne.s32.totalorder %s248, %s262
      %p264 = scmp.eq.s32.totalorder %s28, 0
      %p265 = por %p263, %p264
      %s266 = ssub.s32 %s22, %s29
      %p267 = scmp.eq.s32.totalorder %s266, 0
      %s269 = sadd.s32 %s268, 1
      %s270 = scalar_select %p267, %s268, %s269
      %p273 = pneg %p267
      %p274 = scmp.eq.s32.totalorder %s22, 1
      %p275 = por %p273, %p274
      %p276 = scmp.ne.s32.totalorder %s268, %s271
      %p277 = scmp.eq.s32.totalorder %s22, 0
      %p278 = por %p276, %p277
      %p279 = scmp.ne.s32.totalorder %s268, %s271
      %p280 = scmp.eq.s32.totalorder %s27, 1
      %p281 = por %p279, %p280
      %p282 = scmp.ne.s32.totalorder %s271, %s272
      %p283 = scmp.eq.s32.totalorder %s27, 0
      %p284 = por %p282, %p283
      %p285 = scmp.ne.s32.totalorder %s271, %s272
      %p286 = scmp.eq.s32.totalorder %s28, 1
      %p287 = por %p285, %p286
      %p289 = scmp.ne.s32.totalorder %s272, %s288
      %p290 = scmp.eq.s32.totalorder %s28, 0
      %p291 = por %p289, %p290
      %p292 = scmp.le.s32.totalorder 1, %s22
      %p293 = scmp.lt.s32.totalorder %s22, 3
      %p294 = pnand %p292, %p293
      %p295 = pneg %p294
      // Predicated region
      $region9: #{gradual_style_block_forward.1} parent=5 // pred_check
        _
      $region10: #{gradual_style_block_forward.1} parent=5 // pred_check_branch
        %297 = sbr.rel (%p294) target = $region12
      $region11: #{gradual_style_block_forward.1} parent=5 // pred_region
        %s298 = ssub.s32 %s22, 1
        // Predicated region
        $region13: #{gradual_style_block_forward.1} parent=11 // pred_check
          %p299 = pneg %p69
        $region14: #{gradual_style_block_forward.1} parent=11 // pred_check_branch
          %301 = sbr.rel (%p299) target = $region16
        $region15: #{gradual_style_block_forward.1} parent=11 // pred_region
          _
        $region16: #{gradual_style_block_forward.1} parent=11 // pred_fallthru
          _
        // Predicated region
        $region17: #{gradual_style_block_forward.1} parent=11 // pred_check
          %p302 = pneg %p90
        $region18: #{gradual_style_block_forward.1} parent=11 // pred_check_branch
          %304 = sbr.rel (%p302) target = $region20
        $region19: #{gradual_style_block_forward.1} parent=11 // pred_region
          _
        $region20: #{gradual_style_block_forward.1} parent=11 // pred_fallthru
          _
        // Predicated region
        $region21: #{gradual_style_block_forward.1} parent=11 // pred_check
          %p305 = pneg %p111
        $region22: #{gradual_style_block_forward.1} parent=11 // pred_check_branch
          %307 = sbr.rel (%p305) target = $region24
        $region23: #{gradual_style_block_forward.1} parent=11 // pred_region
          _
        $region24: #{gradual_style_block_forward.1} parent=11 // pred_fallthru
          _
        // Predicated region
        $region25: #{gradual_style_block_forward.1} parent=11 // pred_check
          %p308 = pneg %p132
        $region26: #{gradual_style_block_forward.1} parent=11 // pred_check_branch
          %310 = sbr.rel (%p308) target = $region28
        $region27: #{gradual_style_block_forward.1} parent=11 // pred_region
          _
        $region28: #{gradual_style_block_forward.1} parent=11 // pred_fallthru
          _
        // Predicated region
        $region29: #{gradual_style_block_forward.1} parent=11 // pred_check
          %p311 = pneg %p153
        $region30: #{gradual_style_block_forward.1} parent=11 // pred_check_branch
          %313 = sbr.rel (%p311) target = $region32
        $region31: #{gradual_style_block_forward.1} parent=11 // pred_region
          %315 = vsyncadd [#allocation7], 0
          %s316 = sshll.u32 %s5, 4
          %s317 = int_to_ptr.hbm [resolvable:$true] %s316
          %s318 = sshll.u32 [#allocation6], 4
          %s319 = int_to_ptr.vmem [resolvable:$true] %s318
          %324 = dma.hbm_to_vmem [thread:$0]  %s317, 18432, %s319, [#allocation7], 128, 128, 8
        $region32: #{gradual_style_block_forward.1} parent=11 // pred_fallthru
          _
        // Predicated region
        $region33: #{gradual_style_block_forward.1} parent=11 // pred_check
          %p325 = pneg %p174
        $region34: #{gradual_style_block_forward.1} parent=11 // pred_check_branch
          %327 = sbr.rel (%p325) target = $region36
        $region35: #{gradual_style_block_forward.1} parent=11 // pred_region
          _
        $region36: #{gradual_style_block_forward.1} parent=11 // pred_fallthru
          _
        // Predicated region
        $region37: #{gradual_style_block_forward.1} parent=11 // pred_check
          %p328 = pneg %p195
        $region38: #{gradual_style_block_forward.1} parent=11 // pred_check_branch
          %330 = sbr.rel (%p328) target = $region40
        $region39: #{gradual_style_block_forward.1} parent=11 // pred_region
          %332 = vsyncadd [#allocation10], 0
          %s333 = sshll.u32 %s7, 4
          %s334 = int_to_ptr.hbm [resolvable:$true] %s333
          %s335 = sshll.u32 [#allocation9], 4
          %s336 = int_to_ptr.vmem [resolvable:$true] %s335
          %341 = dma.hbm_to_vmem [thread:$0]  %s334, 18432, %s336, [#allocation10], 128, 128, 8
        $region40: #{gradual_style_block_forward.1} parent=11 // pred_fallthru
          _
        // Predicated region
        $region41: #{gradual_style_block_forward.1} parent=11 // pred_check
          %p342 = pneg %p216
        $region42: #{gradual_style_block_forward.1} parent=11 // pred_check_branch
          %344 = sbr.rel (%p342) target = $region44
        $region43: #{gradual_style_block_forward.1} parent=11 // pred_region
          _
        $region44: #{gradual_style_block_forward.1} parent=11 // pred_fallthru
          _
        // Predicated region
        $region45: #{gradual_style_block_forward.1} parent=11 // pred_check
          %p345 = pneg %p237
        $region46: #{gradual_style_block_forward.1} parent=11 // pred_check_branch
          %347 = sbr.rel (%p345) target = $region48
        $region47: #{gradual_style_block_forward.1} parent=11 // pred_region
          _
        $region48: #{gradual_style_block_forward.1} parent=11 // pred_fallthru
          _
        // Predicated region
        $region49: #{gradual_style_block_forward.1} parent=11 // pred_check
          %p348 = pneg %p258
        $region50: #{gradual_style_block_forward.1} parent=11 // pred_check_branch
          %350 = sbr.rel (%p348) target = $region52
        $region51: #{gradual_style_block_forward.1} parent=11 // pred_region
          _
        $region52: #{gradual_style_block_forward.1} parent=11 // pred_fallthru
          _
      $region12: #{gradual_style_block_forward.1} parent=5 // pred_fallthru
        _
      %p351 = scmp.lt.s32.totalorder %s22, 2
      // Predicated region
      $region53: #{gradual_style_block_forward.1} parent=5 // pred_check
        %p352 = pneg %p351
      $region54: #{gradual_style_block_forward.1} parent=5 // pred_check_branch
        %354 = sbr.rel (%p352) target = $region56
      $region55: #{gradual_style_block_forward.1} parent=5 // pred_region
        // Predicated region
        $region57: #{gradual_style_block_forward.1} parent=55 // pred_check
          %p355 = pneg %p42
        $region58: #{gradual_style_block_forward.1} parent=55 // pred_check_branch
          %357 = sbr.rel (%p355) target = $region60
        $region59: #{gradual_style_block_forward.1} parent=55 // pred_region
          %p358 = scmp.lt.s32.totalorder %s22, 1
          %s359 = scalar_select %p358, %s22, 1
          %s360 = smul.addr %s359, 41
          %s361 = smul.addr %s360, 8
          %s362 = scalar_lea.vmem %s0, %s361
        $region60: #{gradual_style_block_forward.1} parent=55 // pred_fallthru
          _
      $region56: #{gradual_style_block_forward.1} parent=5 // pred_fallthru
        _
      %p363 = scmp.le.s32.totalorder 1, %s22
      %p364 = scmp.lt.s32.totalorder %s22, 3
      %p365 = pnand %p363, %p364
      %p366 = pneg %p365
      // Predicated region
      $region61: #{gradual_style_block_forward.1} parent=5 // pred_check
        _
      $region62: #{gradual_style_block_forward.1} parent=5 // pred_check_branch
        %368 = sbr.rel (%p365) target = $region64
      $region63: #{gradual_style_block_forward.1} parent=5 // pred_region
        %s369 = ssub.s32 %s22, 1
        // Predicated region
        $region65: #{gradual_style_block_forward.1} parent=63 // pred_check
          %p370 = pneg %p153
        $region66: #{gradual_style_block_forward.1} parent=63 // pred_check_branch
          %372 = sbr.rel (%p370) target = $region68
        $region67: #{gradual_style_block_forward.1} parent=63 // pred_region
          %374 = dma.done [#allocation7], 18432
        $region68: #{gradual_style_block_forward.1} parent=63 // pred_fallthru
          _
        // Predicated region
        $region69: #{gradual_style_block_forward.1} parent=63 // pred_check
          %p375 = pneg %p195
        $region70: #{gradual_style_block_forward.1} parent=63 // pred_check_branch
          %377 = sbr.rel (%p375) target = $region72
        $region71: #{gradual_style_block_forward.1} parent=63 // pred_region
          %379 = dma.done [#allocation10], 18432
        $region72: #{gradual_style_block_forward.1} parent=63 // pred_fallthru
          _
        %p380 = scmp.lt.s32.totalorder %s27, 1
        %s381 = scalar_select %p380, %s27, 1
        %s382 = smul.addr %s381, 41
        %s383 = smul.addr %s382, 8
        %s384 = scalar_lea.vmem %s0, %s383
        %p385 = pneg %p48
        %p386 = pneg %p45
        %p387 = pneg %p69
        %p388 = pneg %p66
        %p389 = pneg %p90
        %p390 = pneg %p87
        %p391 = pneg %p111
        %p392 = pneg %p108
        %p393 = pneg %p132
        %p394 = pneg %p129
        %p395 = pneg %p153
        %p396 = pneg %p150
        %p397 = pneg %p174
        %p398 = pneg %p171
        %p399 = pneg %p195
        %p400 = pneg %p192
        %p401 = pneg %p216
        %p402 = pneg %p213
        %p403 = pneg %p237
        %p404 = pneg %p234
        %p405 = pneg %p258
        %p406 = pneg %p255
        %p407 = pneg %p284
        %p408 = pneg %p281
        %s409 = sand.u32 %s271, 1
        %s410 = scalar_lea.sflag [#allocation8], %s409
        %s411 = sand.u32 %s271, 1
        %s412 = scalar_lea.vmem [#allocation11], %s411
        %p413 = scmp.lt.s32.totalorder %s27, 1
        %s414 = scalar_select %p413, %s27, 1
        %s415 = smul.addr %s414, 41
        %s416 = smul.addr %s415, 8
        %s417 = scalar_lea.vmem %s0, %s416
        %418 = vst [vmem:[#allocation2] sm:$0xff] 0.0
        %419 = vst [vmem:[#allocation2 + $0x8] sm:$0x7] 0.0
        %420 = vst [vmem:[#allocation2 + $0x13] sm:$0x3] 0.0
        %421 = vst [vmem:[#allocation2 + $0x1d] sm:$0x3] 0.0
        %422 = vst [vmem:[#allocation2 + $0x27] sm:$0x3] 0.0
        %423 = vst [vmem:[#allocation2 + $0x31] sm:$0x3] 0.0
        %424 = vst [vmem:[#allocation2 + $0x3b] sm:$0x3] 0.0
        %425 = vst [vmem:[#allocation2 + $0x45] sm:$0x3] 0.0
        %426 = vst [vmem:[#allocation2 + $0x4f] sm:$0x3] 0.0
        %427 = vst [vmem:[#allocation2 + $0x59] sm:$0xff] 0.0
        %428 = vst [vmem:[#allocation2 + $0x61] sm:$0x7] 0.0
        %v429 = vld [vmem:[%s2] sm:$0x1]
        %v430 = vld [vmem:[%s417] ss:$2 sm:$0xff]
        %s431 = scalar_lea.vmem %s417, 36
        %v432 = vld [vmem:[%s431] ss:$2 sm:$0xff]
        %s433 = scalar_lea.vmem %s417, 72
        %v434 = vld [vmem:[%s433] ss:$2 sm:$0xff]
        %s435 = scalar_lea.vmem %s417, 108
        %v436 = vld [vmem:[%s435] ss:$2 sm:$0xff]
        %s437 = scalar_lea.vmem %s417, 144
        %v438 = vld [vmem:[%s437] ss:$2 sm:$0xff]
        %s439 = scalar_lea.vmem %s417, 180
        %v440 = vld [vmem:[%s439] ss:$2 sm:$0xff]
        %s441 = scalar_lea.vmem %s417, 216
        %v442 = vld [vmem:[%s441] ss:$2 sm:$0xff]
        %s443 = scalar_lea.vmem %s417, 252
        %v444 = vld [vmem:[%s443] ss:$2 sm:$0xff]
        %v445 = vld [vmem:[%s1] sm:$0xff]
        %v446 = vld [vmem:[%s1 + $0x8] sm:$0xff]
        %v447 = vld [vmem:[%s1 + $0x10] sm:$0xff]
        %v448 = vld [vmem:[%s1 + $0x18] sm:$0xff]
        %v449 = vld [vmem:[%s1 + $0x20] sm:$0xff]
        %v450 = vld [vmem:[%s1 + $0x28] sm:$0xff]
        %v451 = vld [vmem:[%s1 + $0x30] sm:$0xff]
        %v452 = vld [vmem:[%s1 + $0x38] sm:$0xff]
        %v453 = vld [vmem:[%s1 + $0x40] sm:$0xff]
        %v454 = vld [vmem:[%s1 + $0x48] sm:$0xff]
        %v455 = vld [vmem:[%s1 + $0x50] sm:$0xff]
        %v456 = vld [vmem:[%s1 + $0x58] sm:$0xff]
        %v457 = vld [vmem:[%s1 + $0x60] sm:$0xff]
        %v458 = vld [vmem:[%s1 + $0x68] sm:$0xff]
        %v459 = vld [vmem:[%s1 + $0x70] sm:$0xff]
        %v460 = vld [vmem:[%s1 + $0x78] sm:$0xff]
        %s461 = scalar_lea.vmem %s417, 1
        %v462 = vld [vmem:[%s461] ss:$2 sm:$0xff]
        %s463 = scalar_lea.vmem %s417, 37
        %v464 = vld [vmem:[%s463] ss:$2 sm:$0xff]
        %s465 = scalar_lea.vmem %s417, 73
        %v466 = vld [vmem:[%s465] ss:$2 sm:$0xff]
        %s467 = scalar_lea.vmem %s417, 109
        %v468 = vld [vmem:[%s467] ss:$2 sm:$0xff]
        %s469 = scalar_lea.vmem %s417, 145
        %v470 = vld [vmem:[%s469] ss:$2 sm:$0xff]
        %s471 = scalar_lea.vmem %s417, 181
        %v472 = vld [vmem:[%s471] ss:$2 sm:$0xff]
        %s473 = scalar_lea.vmem %s417, 217
        %v474 = vld [vmem:[%s473] ss:$2 sm:$0xff]
        %s475 = scalar_lea.vmem %s417, 253
        %v476 = vld [vmem:[%s475] ss:$2 sm:$0xff]
        %s477 = scalar_lea.vmem %s1, 128
        %v478 = vld [vmem:[%s477] sm:$0xff]
        %v479 = vld [vmem:[%s477 + $0x8] sm:$0xff]
        %v480 = vld [vmem:[%s477 + $0x10] sm:$0xff]
        %v481 = vld [vmem:[%s477 + $0x18] sm:$0xff]
        %v482 = vld [vmem:[%s477 + $0x20] sm:$0xff]
        %v483 = vld [vmem:[%s477 + $0x28] sm:$0xff]
        %v484 = vld [vmem:[%s477 + $0x30] sm:$0xff]
        %v485 = vld [vmem:[%s477 + $0x38] sm:$0xff]
        %v486 = vld [vmem:[%s477 + $0x40] sm:$0xff]
        %v487 = vld [vmem:[%s477 + $0x48] sm:$0xff]
        %v488 = vld [vmem:[%s477 + $0x50] sm:$0xff]
        %v489 = vld [vmem:[%s477 + $0x58] sm:$0xff]
        %v490 = vld [vmem:[%s477 + $0x60] sm:$0xff]
        %v491 = vld [vmem:[%s477 + $0x68] sm:$0xff]
        %v492 = vld [vmem:[%s477 + $0x70] sm:$0xff]
        %v493 = vld [vmem:[%s477 + $0x78] sm:$0xff]
        %494 = vmatpush.msra.mxu0 %v493
        %495 = vmatpush.msra.mxu0 %v492
        %496 = vmatpush.msra.mxu0 %v491
        %497 = vmatpush.msra.mxu0 %v490
        %498 = vmatpush.msra.mxu0 %v489
        %499 = vmatpush.msra.mxu0 %v488
        %500 = vmatpush.msra.mxu0 %v487
        %501 = vmatpush.msra.mxu0 %v486
        %502 = vmatpush.msra.mxu0 %v485
        %503 = vmatpush.msra.mxu0 %v484
        %504 = vmatpush.msra.mxu0 %v483
        %505 = vmatpush.msra.mxu0 %v482
        %506 = vmatpush.msra.mxu0 %v481
        %507 = vmatpush.msra.mxu0 %v480
        %508 = vmatpush.msra.mxu0 %v479
        %509 = vmatpush.msra.mxu0 %v478
        %510 = vmatmul.f32.gmra.mxu0 %v462
        %v511 = vpop.f32.mrf.mxu0
        %v512 = vadd.f32 0.0, %v511
        %513 = vmatmul.f32.gmra.mxu0 %v464
        %v514 = vpop.f32.mrf.mxu0
        %v515 = vadd.f32 0.0, %v514
        %516 = vmatmul.f32.gmra.mxu0 %v466
        %v517 = vpop.f32.mrf.mxu0
        %v518 = vadd.f32 0.0, %v517
        %519 = vmatmul.f32.gmra.mxu0 %v468
        %v520 = vpop.f32.mrf.mxu0
        %v521 = vadd.f32 0.0, %v520
        %522 = vmatmul.f32.gmra.mxu0 %v470
        %v523 = vpop.f32.mrf.mxu0
        %v524 = vadd.f32 0.0, %v523
        %525 = vmatmul.f32.gmra.mxu0 %v472
        %v526 = vpop.f32.mrf.mxu0
        %v527 = vadd.f32 0.0, %v526
        %528 = vmatmul.f32.gmra.mxu0 %v474
        %v529 = vpop.f32.mrf.mxu0
        %v530 = vadd.f32 0.0, %v529
        %531 = vmatmul.f32.gmra.mxu0 %v476
        %v532 = vpop.f32.mrf.mxu0
        %v533 = vadd.f32 0.0, %v532
        %534 = vdwg.mxu0
        %535 = vmatpush.msra.mxu0 %v460
        %536 = vmatpush.msra.mxu0 %v459
        %537 = vmatpush.msra.mxu0 %v458
        %538 = vmatpush.msra.mxu0 %v457
        %539 = vmatpush.msra.mxu0 %v456
        %540 = vmatpush.msra.mxu0 %v455
        %541 = vmatpush.msra.mxu0 %v454
        %542 = vmatpush.msra.mxu0 %v453
        %543 = vmatpush.msra.mxu0 %v452
        %544 = vmatpush.msra.mxu0 %v451
        %545 = vmatpush.msra.mxu0 %v450
        %546 = vmatpush.msra.mxu0 %v449
        %547 = vmatpush.msra.mxu0 %v448
        %548 = vmatpush.msra.mxu0 %v447
        %549 = vmatpush.msra.mxu0 %v446
        %550 = vmatpush.msra.mxu0 %v445
        %551 = vmatmul.f32.gmra.mxu0 %v430
        %v552 = vpop.f32.mrf.mxu0
        %v553 = vadd.f32 %v512, %v552
        %554 = vmatmul.f32.gmra.mxu0 %v432
        %v555 = vpop.f32.mrf.mxu0
        %v556 = vadd.f32 %v515, %v555
        %557 = vmatmul.f32.gmra.mxu0 %v434
        %v558 = vpop.f32.mrf.mxu0
        %v559 = vadd.f32 %v518, %v558
        %560 = vmatmul.f32.gmra.mxu0 %v436
        %v561 = vpop.f32.mrf.mxu0
        %v562 = vadd.f32 %v521, %v561
        %563 = vmatmul.f32.gmra.mxu0 %v438
        %v564 = vpop.f32.mrf.mxu0
        %v565 = vadd.f32 %v524, %v564
        %566 = vmatmul.f32.gmra.mxu0 %v440
        %v567 = vpop.f32.mrf.mxu0
        %v568 = vadd.f32 %v527, %v567
        %569 = vmatmul.f32.gmra.mxu0 %v442
        %v570 = vpop.f32.mrf.mxu0
        %v571 = vadd.f32 %v530, %v570
        %572 = vmatmul.f32.gmra.mxu0 %v444
        %v573 = vpop.f32.mrf.mxu0
        %v574 = vadd.f32 %v533, %v573
        %575 = vdwg.mxu0
        %s576 = scalar_lea.vmem %s417, 2
        %v577 = vld [vmem:[%s576] ss:$2 sm:$0xff]
        %s578 = scalar_lea.vmem %s417, 38
        %v579 = vld [vmem:[%s578] ss:$2 sm:$0xff]
        %s580 = scalar_lea.vmem %s417, 74
        %v581 = vld [vmem:[%s580] ss:$2 sm:$0xff]
        %s582 = scalar_lea.vmem %s417, 110
        %v583 = vld [vmem:[%s582] ss:$2 sm:$0xff]
        %s584 = scalar_lea.vmem %s417, 146
        %v585 = vld [vmem:[%s584] ss:$2 sm:$0xff]
        %s586 = scalar_lea.vmem %s417, 182
        %v587 = vld [vmem:[%s586] ss:$2 sm:$0xff]
        %s588 = scalar_lea.vmem %s417, 218
        %v589 = vld [vmem:[%s588] ss:$2 sm:$0xff]
        %s590 = scalar_lea.vmem %s417, 254
        %v591 = vld [vmem:[%s590] ss:$2 sm:$0xff]
        %s592 = scalar_lea.vmem %s1, 256
        %v593 = vld [vmem:[%s592] sm:$0xff]
        %v594 = vld [vmem:[%s592 + $0x8] sm:$0xff]
        %v595 = vld [vmem:[%s592 + $0x10] sm:$0xff]
        %v596 = vld [vmem:[%s592 + $0x18] sm:$0xff]
        %v597 = vld [vmem:[%s592 + $0x20] sm:$0xff]
        %v598 = vld [vmem:[%s592 + $0x28] sm:$0xff]
        %v599 = vld [vmem:[%s592 + $0x30] sm:$0xff]
        %v600 = vld [vmem:[%s592 + $0x38] sm:$0xff]
        %v601 = vld [vmem:[%s592 + $0x40] sm:$0xff]
        %v602 = vld [vmem:[%s592 + $0x48] sm:$0xff]
        %v603 = vld [vmem:[%s592 + $0x50] sm:$0xff]
        %v604 = vld [vmem:[%s592 + $0x58] sm:$0xff]
        %v605 = vld [vmem:[%s592 + $0x60] sm:$0xff]
        %v606 = vld [vmem:[%s592 + $0x68] sm:$0xff]
        %v607 = vld [vmem:[%s592 + $0x70] sm:$0xff]
        %v608 = vld [vmem:[%s592 + $0x78] sm:$0xff]
        %609 = vmatpush.msra.mxu0 %v608
        %610 = vmatpush.msra.mxu0 %v607
        %611 = vmatpush.msra.mxu0 %v606
        %612 = vmatpush.msra.mxu0 %v605
        %613 = vmatpush.msra.mxu0 %v604
        %614 = vmatpush.msra.mxu0 %v603
        %615 = vmatpush.msra.mxu0 %v602
        %616 = vmatpush.msra.mxu0 %v601
        %617 = vmatpush.msra.mxu0 %v600
        %618 = vmatpush.msra.mxu0 %v599
        %619 = vmatpush.msra.mxu0 %v598
        %620 = vmatpush.msra.mxu0 %v597
        %621 = vmatpush.msra.mxu0 %v596
        %622 = vmatpush.msra.mxu0 %v595
        %623 = vmatpush.msra.mxu0 %v594
        %624 = vmatpush.msra.mxu0 %v593
        %625 = vmatmul.f32.gmra.mxu0 %v577
        %v626 = vpop.f32.mrf.mxu0
        %v627 = vadd.f32 0.0, %v626
        %628 = vmatmul.f32.gmra.mxu0 %v579
        %v629 = vpop.f32.mrf.mxu0
        %v630 = vadd.f32 0.0, %v629
        %631 = vmatmul.f32.gmra.mxu0 %v581
        %v632 = vpop.f32.mrf.mxu0
        %v633 = vadd.f32 0.0, %v632
        %634 = vmatmul.f32.gmra.mxu0 %v583
        %v635 = vpop.f32.mrf.mxu0
        %v636 = vadd.f32 0.0, %v635
        %637 = vmatmul.f32.gmra.mxu0 %v585
        %v638 = vpop.f32.mrf.mxu0
        %v639 = vadd.f32 0.0, %v638
        %640 = vmatmul.f32.gmra.mxu0 %v587
        %v641 = vpop.f32.mrf.mxu0
        %v642 = vadd.f32 0.0, %v641
        %643 = vmatmul.f32.gmra.mxu0 %v589
        %v644 = vpop.f32.mrf.mxu0
        %v645 = vadd.f32 0.0, %v644
        %646 = vmatmul.f32.gmra.mxu0 %v591
        %v647 = vpop.f32.mrf.mxu0
        %v648 = vadd.f32 0.0, %v647
        %649 = vdwg.mxu0
        %v650 = vadd.f32 %v553, %v627
        %v651 = vadd.f32 %v556, %v630
        %v652 = vadd.f32 %v559, %v633
        %v653 = vadd.f32 %v562, %v636
        %v654 = vadd.f32 %v565, %v639
        %v655 = vadd.f32 %v568, %v642
        %v656 = vadd.f32 %v571, %v645
        %v657 = vadd.f32 %v574, %v648
        %s658 = scalar_lea.vmem %s417, 18
        %v659 = vld [vmem:[%s658] ss:$2 sm:$0xff]
        %s660 = scalar_lea.vmem %s417, 54
        %v661 = vld [vmem:[%s660] ss:$2 sm:$0xff]
        %s662 = scalar_lea.vmem %s417, 90
        %v663 = vld [vmem:[%s662] ss:$2 sm:$0xff]
        %s664 = scalar_lea.vmem %s417, 126
        %v665 = vld [vmem:[%s664] ss:$2 sm:$0xff]
        %s666 = scalar_lea.vmem %s417, 162
        %v667 = vld [vmem:[%s666] ss:$2 sm:$0xff]
        %s668 = scalar_lea.vmem %s417, 198
        %v669 = vld [vmem:[%s668] ss:$2 sm:$0xff]
        %s670 = scalar_lea.vmem %s417, 234
        %v671 = vld [vmem:[%s670] ss:$2 sm:$0xff]
        %s672 = scalar_lea.vmem %s417, 270
        %v673 = vld [vmem:[%s672] ss:$2 sm:$0xff]
        %s674 = scalar_lea.vmem %s1, 384
        %v675 = vld [vmem:[%s674] sm:$0xff]
        %v676 = vld [vmem:[%s674 + $0x8] sm:$0xff]
        %v677 = vld [vmem:[%s674 + $0x10] sm:$0xff]
        %v678 = vld [vmem:[%s674 + $0x18] sm:$0xff]
        %v679 = vld [vmem:[%s674 + $0x20] sm:$0xff]
        %v680 = vld [vmem:[%s674 + $0x28] sm:$0xff]
        %v681 = vld [vmem:[%s674 + $0x30] sm:$0xff]
        %v682 = vld [vmem:[%s674 + $0x38] sm:$0xff]
        %v683 = vld [vmem:[%s674 + $0x40] sm:$0xff]
        %v684 = vld [vmem:[%s674 + $0x48] sm:$0xff]
        %v685 = vld [vmem:[%s674 + $0x50] sm:$0xff]
        %v686 = vld [vmem:[%s674 + $0x58] sm:$0xff]
        %v687 = vld [vmem:[%s674 + $0x60] sm:$0xff]
        %v688 = vld [vmem:[%s674 + $0x68] sm:$0xff]
        %v689 = vld [vmem:[%s674 + $0x70] sm:$0xff]
        %v690 = vld [vmem:[%s674 + $0x78] sm:$0xff]
        %691 = vmatpush.msra.mxu0 %v690
        %692 = vmatpush.msra.mxu0 %v689
        %693 = vmatpush.msra.mxu0 %v688
        %694 = vmatpush.msra.mxu0 %v687
        %695 = vmatpush.msra.mxu0 %v686
        %696 = vmatpush.msra.mxu0 %v685
        %697 = vmatpush.msra.mxu0 %v684
        %698 = vmatpush.msra.mxu0 %v683
        %699 = vmatpush.msra.mxu0 %v682
        %700 = vmatpush.msra.mxu0 %v681
        %701 = vmatpush.msra.mxu0 %v680
        %702 = vmatpush.msra.mxu0 %v679
        %703 = vmatpush.msra.mxu0 %v678
        %704 = vmatpush.msra.mxu0 %v677
        %705 = vmatpush.msra.mxu0 %v676
        %706 = vmatpush.msra.mxu0 %v675
        %707 = vmatmul.f32.gmra.mxu0 %v659
        %v708 = vpop.f32.mrf.mxu0
        %v709 = vadd.f32 0.0, %v708
        %710 = vmatmul.f32.gmra.mxu0 %v661
        %v711 = vpop.f32.mrf.mxu0
        %v712 = vadd.f32 0.0, %v711
        %713 = vmatmul.f32.gmra.mxu0 %v663
        %v714 = vpop.f32.mrf.mxu0
        %v715 = vadd.f32 0.0, %v714
        %716 = vmatmul.f32.gmra.mxu0 %v665
        %v717 = vpop.f32.mrf.mxu0
        %v718 = vadd.f32 0.0, %v717
        %719 = vmatmul.f32.gmra.mxu0 %v667
        %v720 = vpop.f32.mrf.mxu0
        %v721 = vadd.f32 0.0, %v720
        %722 = vmatmul.f32.gmra.mxu0 %v669
        %v723 = vpop.f32.mrf.mxu0
        %v724 = vadd.f32 0.0, %v723
        %725 = vmatmul.f32.gmra.mxu0 %v671
        %v726 = vpop.f32.mrf.mxu0
        %v727 = vadd.f32 0.0, %v726
        %728 = vmatmul.f32.gmra.mxu0 %v673
        %v729 = vpop.f32.mrf.mxu0
        %v730 = vadd.f32 0.0, %v729
        %731 = vdwg.mxu0
        %v732 = vadd.f32 %v650, %v709
        %v733 = vadd.f32 %v651, %v712
        %v734 = vadd.f32 %v652, %v715
        %v735 = vadd.f32 %v653, %v718
        %v736 = vadd.f32 %v654, %v721
        %v737 = vadd.f32 %v655, %v724
        %v738 = vadd.f32 %v656, %v727
        %v739 = vadd.f32 %v657, %v730
        %s740 = scalar_lea.vmem %s417, 19
        %v741 = vld [vmem:[%s740] ss:$2 sm:$0xff]
        %s742 = scalar_lea.vmem %s417, 55
        %v743 = vld [vmem:[%s742] ss:$2 sm:$0xff]
        %s744 = scalar_lea.vmem %s417, 91
        %v745 = vld [vmem:[%s744] ss:$2 sm:$0xff]
        %s746 = scalar_lea.vmem %s417, 127
        %v747 = vld [vmem:[%s746] ss:$2 sm:$0xff]
        %s748 = scalar_lea.vmem %s417, 163
        %v749 = vld [vmem:[%s748] ss:$2 sm:$0xff]
        %s750 = scalar_lea.vmem %s417, 199
        %v751 = vld [vmem:[%s750] ss:$2 sm:$0xff]
        %s752 = scalar_lea.vmem %s417, 235
        %v753 = vld [vmem:[%s752] ss:$2 sm:$0xff]
        %s754 = scalar_lea.vmem %s417, 271
        %v755 = vld [vmem:[%s754] ss:$2 sm:$0xff]
        %s756 = scalar_lea.vmem %s1, 512
        %v757 = vld [vmem:[%s756] sm:$0xff]
        %v758 = vld [vmem:[%s756 + $0x8] sm:$0xff]
        %v759 = vld [vmem:[%s756 + $0x10] sm:$0xff]
        %v760 = vld [vmem:[%s756 + $0x18] sm:$0xff]
        %v761 = vld [vmem:[%s756 + $0x20] sm:$0xff]
        %v762 = vld [vmem:[%s756 + $0x28] sm:$0xff]
        %v763 = vld [vmem:[%s756 + $0x30] sm:$0xff]
        %v764 = vld [vmem:[%s756 + $0x38] sm:$0xff]
        %v765 = vld [vmem:[%s756 + $0x40] sm:$0xff]
        %v766 = vld [vmem:[%s756 + $0x48] sm:$0xff]
        %v767 = vld [vmem:[%s756 + $0x50] sm:$0xff]
        %v768 = vld [vmem:[%s756 + $0x58] sm:$0xff]
        %v769 = vld [vmem:[%s756 + $0x60] sm:$0xff]
        %v770 = vld [vmem:[%s756 + $0x68] sm:$0xff]
        %v771 = vld [vmem:[%s756 + $0x70] sm:$0xff]
        %v772 = vld [vmem:[%s756 + $0x78] sm:$0xff]
        %773 = vmatpush.msra.mxu0 %v772
        %774 = vmatpush.msra.mxu0 %v771
        %775 = vmatpush.msra.mxu0 %v770
        %776 = vmatpush.msra.mxu0 %v769
        %777 = vmatpush.msra.mxu0 %v768
        %778 = vmatpush.msra.mxu0 %v767
        %779 = vmatpush.msra.mxu0 %v766
        %780 = vmatpush.msra.mxu0 %v765
        %781 = vmatpush.msra.mxu0 %v764
        %782 = vmatpush.msra.mxu0 %v763
        %783 = vmatpush.msra.mxu0 %v762
        %784 = vmatpush.msra.mxu0 %v761
        %785 = vmatpush.msra.mxu0 %v760
        %786 = vmatpush.msra.mxu0 %v759
        %787 = vmatpush.msra.mxu0 %v758
        %788 = vmatpush.msra.mxu0 %v757
        %789 = vmatmul.f32.gmra.mxu0 %v741
        %v790 = vpop.f32.mrf.mxu0
        %v791 = vadd.f32 0.0, %v790
        %792 = vmatmul.f32.gmra.mxu0 %v743
        %v793 = vpop.f32.mrf.mxu0
        %v794 = vadd.f32 0.0, %v793
        %795 = vmatmul.f32.gmra.mxu0 %v745
        %v796 = vpop.f32.mrf.mxu0
        %v797 = vadd.f32 0.0, %v796
        %798 = vmatmul.f32.gmra.mxu0 %v747
        %v799 = vpop.f32.mrf.mxu0
        %v800 = vadd.f32 0.0, %v799
        %801 = vmatmul.f32.gmra.mxu0 %v749
        %v802 = vpop.f32.mrf.mxu0
        %v803 = vadd.f32 0.0, %v802
        %804 = vmatmul.f32.gmra.mxu0 %v751
        %v805 = vpop.f32.mrf.mxu0
        %v806 = vadd.f32 0.0, %v805
        %807 = vmatmul.f32.gmra.mxu0 %v753
        %v808 = vpop.f32.mrf.mxu0
        %v809 = vadd.f32 0.0, %v808
        %810 = vmatmul.f32.gmra.mxu0 %v755
        %v811 = vpop.f32.mrf.mxu0
        %v812 = vadd.f32 0.0, %v811
        %813 = vdwg.mxu0
        %v814 = vadd.f32 %v732, %v791
        %v815 = vadd.f32 %v733, %v794
        %v816 = vadd.f32 %v734, %v797
        %v817 = vadd.f32 %v735, %v800
        %v818 = vadd.f32 %v736, %v803
        %v819 = vadd.f32 %v737, %v806
        %v820 = vadd.f32 %v738, %v809
        %v821 = vadd.f32 %v739, %v812
        %s822 = scalar_lea.vmem %s417, 20
        %v823 = vld [vmem:[%s822] ss:$2 sm:$0xff]
        %s824 = scalar_lea.vmem %s417, 56
        %v825 = vld [vmem:[%s824] ss:$2 sm:$0xff]
        %s826 = scalar_lea.vmem %s417, 92
        %v827 = vld [vmem:[%s826] ss:$2 sm:$0xff]
        %s828 = scalar_lea.vmem %s417, 128
        %v829 = vld [vmem:[%s828] ss:$2 sm:$0xff]
        %s830 = scalar_lea.vmem %s417, 164
        %v831 = vld [vmem:[%s830] ss:$2 sm:$0xff]
        %s832 = scalar_lea.vmem %s417, 200
        %v833 = vld [vmem:[%s832] ss:$2 sm:$0xff]
        %s834 = scalar_lea.vmem %s417, 236
        %v835 = vld [vmem:[%s834] ss:$2 sm:$0xff]
        %s836 = scalar_lea.vmem %s417, 272
        %v837 = vld [vmem:[%s836] ss:$2 sm:$0xff]
        %s838 = scalar_lea.vmem %s1, 640
        %v839 = vld [vmem:[%s838] sm:$0xff]
        %v840 = vld [vmem:[%s838 + $0x8] sm:$0xff]
        %v841 = vld [vmem:[%s838 + $0x10] sm:$0xff]
        %v842 = vld [vmem:[%s838 + $0x18] sm:$0xff]
        %v843 = vld [vmem:[%s838 + $0x20] sm:$0xff]
        %v844 = vld [vmem:[%s838 + $0x28] sm:$0xff]
        %v845 = vld [vmem:[%s838 + $0x30] sm:$0xff]
        %v846 = vld [vmem:[%s838 + $0x38] sm:$0xff]
        %v847 = vld [vmem:[%s838 + $0x40] sm:$0xff]
        %v848 = vld [vmem:[%s838 + $0x48] sm:$0xff]
        %v849 = vld [vmem:[%s838 + $0x50] sm:$0xff]
        %v850 = vld [vmem:[%s838 + $0x58] sm:$0xff]
        %v851 = vld [vmem:[%s838 + $0x60] sm:$0xff]
        %v852 = vld [vmem:[%s838 + $0x68] sm:$0xff]
        %v853 = vld [vmem:[%s838 + $0x70] sm:$0xff]
        %v854 = vld [vmem:[%s838 + $0x78] sm:$0xff]
        %855 = vmatpush.msra.mxu0 %v854
        %856 = vmatpush.msra.mxu0 %v853
        %857 = vmatpush.msra.mxu0 %v852
        %858 = vmatpush.msra.mxu0 %v851
        %859 = vmatpush.msra.mxu0 %v850
        %860 = vmatpush.msra.mxu0 %v849
        %861 = vmatpush.msra.mxu0 %v848
        %862 = vmatpush.msra.mxu0 %v847
        %863 = vmatpush.msra.mxu0 %v846
        %864 = vmatpush.msra.mxu0 %v845
        %865 = vmatpush.msra.mxu0 %v844
        %866 = vmatpush.msra.mxu0 %v843
        %867 = vmatpush.msra.mxu0 %v842
        %868 = vmatpush.msra.mxu0 %v841
        %869 = vmatpush.msra.mxu0 %v840
        %870 = vmatpush.msra.mxu0 %v839
        %871 = vmatmul.f32.gmra.mxu0 %v823
        %v872 = vpop.f32.mrf.mxu0
        %v873 = vadd.f32 0.0, %v872
        %874 = vmatmul.f32.gmra.mxu0 %v825
        %v875 = vpop.f32.mrf.mxu0
        %v876 = vadd.f32 0.0, %v875
        %877 = vmatmul.f32.gmra.mxu0 %v827
        %v878 = vpop.f32.mrf.mxu0
        %v879 = vadd.f32 0.0, %v878
        %880 = vmatmul.f32.gmra.mxu0 %v829
        %v881 = vpop.f32.mrf.mxu0
        %v882 = vadd.f32 0.0, %v881
        %883 = vmatmul.f32.gmra.mxu0 %v831
        %v884 = vpop.f32.mrf.mxu0
        %v885 = vadd.f32 0.0, %v884
        %886 = vmatmul.f32.gmra.mxu0 %v833
        %v887 = vpop.f32.mrf.mxu0
        %v888 = vadd.f32 0.0, %v887
        %889 = vmatmul.f32.gmra.mxu0 %v835
        %v890 = vpop.f32.mrf.mxu0
        %v891 = vadd.f32 0.0, %v890
        %892 = vmatmul.f32.gmra.mxu0 %v837
        %v893 = vpop.f32.mrf.mxu0
        %v894 = vadd.f32 0.0, %v893
        %895 = vdwg.mxu0
        %v896 = vadd.f32 %v814, %v873
        %v897 = vadd.f32 %v815, %v876
        %v898 = vadd.f32 %v816, %v879
        %v899 = vadd.f32 %v817, %v882
        %v900 = vadd.f32 %v818, %v885
        %v901 = vadd.f32 %v819, %v888
        %v902 = vadd.f32 %v820, %v891
        %v903 = vadd.f32 %v821, %v894
        %s904 = scalar_lea.vmem %s417, 288
        %v905 = vld [vmem:[%s904] ss:$2 sm:$0xff]
        %s906 = scalar_lea.vmem %s1, 768
        %v907 = vld [vmem:[%s906] sm:$0xff]
        %v908 = vld [vmem:[%s906 + $0x8] sm:$0xff]
        %v909 = vld [vmem:[%s906 + $0x10] sm:$0xff]
        %v910 = vld [vmem:[%s906 + $0x18] sm:$0xff]
        %v911 = vld [vmem:[%s906 + $0x20] sm:$0xff]
        %v912 = vld [vmem:[%s906 + $0x28] sm:$0xff]
        %v913 = vld [vmem:[%s906 + $0x30] sm:$0xff]
        %v914 = vld [vmem:[%s906 + $0x38] sm:$0xff]
        %v915 = vld [vmem:[%s906 + $0x40] sm:$0xff]
        %v916 = vld [vmem:[%s906 + $0x48] sm:$0xff]
        %v917 = vld [vmem:[%s906 + $0x50] sm:$0xff]
        %v918 = vld [vmem:[%s906 + $0x58] sm:$0xff]
        %v919 = vld [vmem:[%s906 + $0x60] sm:$0xff]
        %v920 = vld [vmem:[%s906 + $0x68] sm:$0xff]
        %v921 = vld [vmem:[%s906 + $0x70] sm:$0xff]
        %v922 = vld [vmem:[%s906 + $0x78] sm:$0xff]
        %923 = vmatpush.msra.mxu0 %v922
        %924 = vmatpush.msra.mxu0 %v921
        %925 = vmatpush.msra.mxu0 %v920
        %926 = vmatpush.msra.mxu0 %v919
        %927 = vmatpush.msra.mxu0 %v918
        %928 = vmatpush.msra.mxu0 %v917
        %929 = vmatpush.msra.mxu0 %v916
        %930 = vmatpush.msra.mxu0 %v915
        %931 = vmatpush.msra.mxu0 %v914
        %932 = vmatpush.msra.mxu0 %v913
        %933 = vmatpush.msra.mxu0 %v912
        %934 = vmatpush.msra.mxu0 %v911
        %935 = vmatpush.msra.mxu0 %v910
        %936 = vmatpush.msra.mxu0 %v909
        %937 = vmatpush.msra.mxu0 %v908
        %938 = vmatpush.msra.mxu0 %v907
        %939 = vmatmul.f32.gmra.mxu0 %v432
        %v940 = vpop.f32.mrf.mxu0
        %v941 = vadd.f32 0.0, %v940
        %942 = vmatmul.f32.gmra.mxu0 %v434
        %v943 = vpop.f32.mrf.mxu0
        %v944 = vadd.f32 0.0, %v943
        %945 = vmatmul.f32.gmra.mxu0 %v436
        %v946 = vpop.f32.mrf.mxu0
        %v947 = vadd.f32 0.0, %v946
        %948 = vmatmul.f32.gmra.mxu0 %v438
        %v949 = vpop.f32.mrf.mxu0
        %v950 = vadd.f32 0.0, %v949
        %951 = vmatmul.f32.gmra.mxu0 %v440
        %v952 = vpop.f32.mrf.mxu0
        %v953 = vadd.f32 0.0, %v952
        %954 = vmatmul.f32.gmra.mxu0 %v442
        %v955 = vpop.f32.mrf.mxu0
        %v956 = vadd.f32 0.0, %v955
        %957 = vmatmul.f32.gmra.mxu0 %v444
        %v958 = vpop.f32.mrf.mxu0
        %v959 = vadd.f32 0.0, %v958
        %960 = vmatmul.f32.gmra.mxu0 %v905
        %v961 = vpop.f32.mrf.mxu0
        %v962 = vadd.f32 0.0, %v961
        %963 = vdwg.mxu0
        %v964 = vadd.f32 %v896, %v941
        %v965 = vadd.f32 %v897, %v944
        %v966 = vadd.f32 %v898, %v947
        %v967 = vadd.f32 %v899, %v950
        %v968 = vadd.f32 %v900, %v953
        %v969 = vadd.f32 %v901, %v956
        %v970 = vadd.f32 %v902, %v959
        %v971 = vadd.f32 %v903, %v962
        %s972 = scalar_lea.vmem %s417, 289
        %v973 = vld [vmem:[%s972] ss:$2 sm:$0xff]
        %s974 = scalar_lea.vmem %s1, 896
        %v975 = vld [vmem:[%s974] sm:$0xff]
        %v976 = vld [vmem:[%s974 + $0x8] sm:$0xff]
        %v977 = vld [vmem:[%s974 + $0x10] sm:$0xff]
        %v978 = vld [vmem:[%s974 + $0x18] sm:$0xff]
        %v979 = vld [vmem:[%s974 + $0x20] sm:$0xff]
        %v980 = vld [vmem:[%s974 + $0x28] sm:$0xff]
        %v981 = vld [vmem:[%s974 + $0x30] sm:$0xff]
        %v982 = vld [vmem:[%s974 + $0x38] sm:$0xff]
        %v983 = vld [vmem:[%s974 + $0x40] sm:$0xff]
        %v984 = vld [vmem:[%s974 + $0x48] sm:$0xff]
        %v985 = vld [vmem:[%s974 + $0x50] sm:$0xff]
        %v986 = vld [vmem:[%s974 + $0x58] sm:$0xff]
        %v987 = vld [vmem:[%s974 + $0x60] sm:$0xff]
        %v988 = vld [vmem:[%s974 + $0x68] sm:$0xff]
        %v989 = vld [vmem:[%s974 + $0x70] sm:$0xff]
        %v990 = vld [vmem:[%s974 + $0x78] sm:$0xff]
        %991 = vmatpush.msra.mxu0 %v990
        %992 = vmatpush.msra.mxu0 %v989
        %993 = vmatpush.msra.mxu0 %v988
        %994 = vmatpush.msra.mxu0 %v987
        %995 = vmatpush.msra.mxu0 %v986
        %996 = vmatpush.msra.mxu0 %v985
        %997 = vmatpush.msra.mxu0 %v984
        %998 = vmatpush.msra.mxu0 %v983
        %999 = vmatpush.msra.mxu0 %v982
        %1000 = vmatpush.msra.mxu0 %v981
        %1001 = vmatpush.msra.mxu0 %v980
        %1002 = vmatpush.msra.mxu0 %v979
        %1003 = vmatpush.msra.mxu0 %v978
        %1004 = vmatpush.msra.mxu0 %v977
        %1005 = vmatpush.msra.mxu0 %v976
        %1006 = vmatpush.msra.mxu0 %v975
        %1007 = vmatmul.f32.gmra.mxu0 %v464
        %v1008 = vpop.f32.mrf.mxu0
        %v1009 = vadd.f32 0.0, %v1008
        %1010 = vmatmul.f32.gmra.mxu0 %v466
        %v1011 = vpop.f32.mrf.mxu0
        %v1012 = vadd.f32 0.0, %v1011
        %1013 = vmatmul.f32.gmra.mxu0 %v468
        %v1014 = vpop.f32.mrf.mxu0
        %v1015 = vadd.f32 0.0, %v1014
        %1016 = vmatmul.f32.gmra.mxu0 %v470
        %v1017 = vpop.f32.mrf.mxu0
        %v1018 = vadd.f32 0.0, %v1017
        %1019 = vmatmul.f32.gmra.mxu0 %v472
        %v1020 = vpop.f32.mrf.mxu0
        %v1021 = vadd.f32 0.0, %v1020
        %1022 = vmatmul.f32.gmra.mxu0 %v474
        %v1023 = vpop.f32.mrf.mxu0
        %v1024 = vadd.f32 0.0, %v1023
        %1025 = vmatmul.f32.gmra.mxu0 %v476
        %v1026 = vpop.f32.mrf.mxu0
        %v1027 = vadd.f32 0.0, %v1026
        %1028 = vmatmul.f32.gmra.mxu0 %v973
        %v1029 = vpop.f32.mrf.mxu0
        %v1030 = vadd.f32 0.0, %v1029
        %1031 = vdwg.mxu0
        %v1032 = vadd.f32 %v964, %v1009
        %v1033 = vadd.f32 %v965, %v1012
        %v1034 = vadd.f32 %v966, %v1015
        %v1035 = vadd.f32 %v967, %v1018
        %v1036 = vadd.f32 %v968, %v1021
        %v1037 = vadd.f32 %v969, %v1024
        %v1038 = vadd.f32 %v970, %v1027
        %v1039 = vadd.f32 %v971, %v1030
        %s1040 = scalar_lea.vmem %s417, 290
        %v1041 = vld [vmem:[%s1040] ss:$2 sm:$0xff]
        %s1042 = scalar_lea.vmem %s1, 1024
        %v1043 = vld [vmem:[%s1042] sm:$0xff]
        %v1044 = vld [vmem:[%s1042 + $0x8] sm:$0xff]
        %v1045 = vld [vmem:[%s1042 + $0x10] sm:$0xff]
        %v1046 = vld [vmem:[%s1042 + $0x18] sm:$0xff]
        %v1047 = vld [vmem:[%s1042 + $0x20] sm:$0xff]
        %v1048 = vld [vmem:[%s1042 + $0x28] sm:$0xff]
        %v1049 = vld [vmem:[%s1042 + $0x30] sm:$0xff]
        %v1050 = vld [vmem:[%s1042 + $0x38] sm:$0xff]
        %v1051 = vld [vmem:[%s1042 + $0x40] sm:$0xff]
        %v1052 = vld [vmem:[%s1042 + $0x48] sm:$0xff]
        %v1053 = vld [vmem:[%s1042 + $0x50] sm:$0xff]
        %v1054 = vld [vmem:[%s1042 + $0x58] sm:$0xff]
        %v1055 = vld [vmem:[%s1042 + $0x60] sm:$0xff]
        %v1056 = vld [vmem:[%s1042 + $0x68] sm:$0xff]
        %v1057 = vld [vmem:[%s1042 + $0x70] sm:$0xff]
        %v1058 = vld [vmem:[%s1042 + $0x78] sm:$0xff]
        %1059 = vmatpush.msra.mxu0 %v1058
        %1060 = vmatpush.msra.mxu0 %v1057
        %1061 = vmatpush.msra.mxu0 %v1056
        %1062 = vmatpush.msra.mxu0 %v1055
        %1063 = vmatpush.msra.mxu0 %v1054
        %1064 = vmatpush.msra.mxu0 %v1053
        %1065 = vmatpush.msra.mxu0 %v1052
        %1066 = vmatpush.msra.mxu0 %v1051
        %1067 = vmatpush.msra.mxu0 %v1050
        %1068 = vmatpush.msra.mxu0 %v1049
        %1069 = vmatpush.msra.mxu0 %v1048
        %1070 = vmatpush.msra.mxu0 %v1047
        %1071 = vmatpush.msra.mxu0 %v1046
        %1072 = vmatpush.msra.mxu0 %v1045
        %1073 = vmatpush.msra.mxu0 %v1044
        %1074 = vmatpush.msra.mxu0 %v1043
        %1075 = vmatmul.f32.gmra.mxu0 %v579
        %v1076 = vpop.f32.mrf.mxu0
        %v1077 = vadd.f32 0.0, %v1076
        %1078 = vmatmul.f32.gmra.mxu0 %v581
        %v1079 = vpop.f32.mrf.mxu0
        %v1080 = vadd.f32 0.0, %v1079
        %1081 = vmatmul.f32.gmra.mxu0 %v583
        %v1082 = vpop.f32.mrf.mxu0
        %v1083 = vadd.f32 0.0, %v1082
        %1084 = vmatmul.f32.gmra.mxu0 %v585
        %v1085 = vpop.f32.mrf.mxu0
        %v1086 = vadd.f32 0.0, %v1085
        %1087 = vmatmul.f32.gmra.mxu0 %v587
        %v1088 = vpop.f32.mrf.mxu0
        %v1089 = vadd.f32 0.0, %v1088
        %1090 = vmatmul.f32.gmra.mxu0 %v589
        %v1091 = vpop.f32.mrf.mxu0
        %v1092 = vadd.f32 0.0, %v1091
        %1093 = vmatmul.f32.gmra.mxu0 %v591
        %v1094 = vpop.f32.mrf.mxu0
        %v1095 = vadd.f32 0.0, %v1094
        %1096 = vmatmul.f32.gmra.mxu0 %v1041
        %v1097 = vpop.f32.mrf.mxu0
        %v1098 = vadd.f32 0.0, %v1097
        %1099 = vdwg.mxu0
        %v1100 = vadd.f32 %v1032, %v1077
        %v1101 = vadd.f32 %v1033, %v1080
        %v1102 = vadd.f32 %v1034, %v1083
        %v1103 = vadd.f32 %v1035, %v1086
        %v1104 = vadd.f32 %v1036, %v1089
        %v1105 = vadd.f32 %v1037, %v1092
        %v1106 = vadd.f32 %v1038, %v1095
        %v1107 = vadd.f32 %v1039, %v1098
        %v1109 = vperm.slane %v429, 0
        %v1111 = vadd.f32 %v1100, %v1109
        %v1112 = vadd.f32 %v1101, %v1109
        %v1113 = vadd.f32 %v1102, %v1109
        %v1114 = vadd.f32 %v1103, %v1109
        %v1115 = vadd.f32 %v1104, %v1109
        %v1116 = vadd.f32 %v1105, %v1109
        %v1117 = vadd.f32 %v1106, %v1109
        %v1118 = vadd.f32 %v1107, %v1109
        %vm1119 = vcmp.ge.f32.partialorder %v1111, 0.0
        %vm1120 = vcmp.ge.f32.partialorder %v1112, 0.0
        %vm1121 = vcmp.ge.f32.partialorder %v1113, 0.0
        %vm1122 = vcmp.ge.f32.partialorder %v1114, 0.0
        %vm1123 = vcmp.ge.f32.partialorder %v1115, 0.0
        %vm1124 = vcmp.ge.f32.partialorder %v1116, 0.0
        %vm1125 = vcmp.ge.f32.partialorder %v1117, 0.0
        %vm1126 = vcmp.ge.f32.partialorder %v1118, 0.0
        %v1127 = vmul.f32 %v1111, 0.01
        %v1128 = vmul.f32 %v1112, 0.01
        %v1129 = vmul.f32 %v1113, 0.01
        %v1130 = vmul.f32 %v1114, 0.01
        %v1131 = vmul.f32 %v1115, 0.01
        %v1132 = vmul.f32 %v1116, 0.01
        %v1133 = vmul.f32 %v1117, 0.01
        %v1134 = vmul.f32 %v1118, 0.01
        %v1135 = vsel %vm1119, %v1111, %v1127
        %v1136 = vsel %vm1120, %v1112, %v1128
        %v1137 = vsel %vm1121, %v1113, %v1129
        %v1138 = vsel %vm1122, %v1114, %v1130
        %v1139 = vsel %vm1123, %v1115, %v1131
        %v1140 = vsel %vm1124, %v1116, %v1132
        %v1141 = vsel %vm1125, %v1117, %v1133
        %v1142 = vsel %vm1126, %v1118, %v1134
        %1143 = vst [vmem:[#allocation2 + $0xb] sm:$0xff] %v1135
        %1144 = vst [vmem:[#allocation2 + $0x15] sm:$0xff] %v1136
        %1145 = vst [vmem:[#allocation2 + $0x1f] sm:$0xff] %v1137
        %1146 = vst [vmem:[#allocation2 + $0x29] sm:$0xff] %v1138
        %1147 = vst [vmem:[#allocation2 + $0x33] sm:$0xff] %v1139
        %1148 = vst [vmem:[#allocation2 + $0x3d] sm:$0xff] %v1140
        %1149 = vst [vmem:[#allocation2 + $0x47] sm:$0xff] %v1141
        %1150 = vst [vmem:[#allocation2 + $0x51] sm:$0xff] %v1142
        %1151 = vst [vmem:[#allocation3] sm:$0x7f] 0.0
        %1152 = vst [vmem:[#allocation3 + $0xb] sm:$0x3] 0.0
        %1153 = vst [vmem:[#allocation3 + $0x11] sm:$0x3] 0.0
        %1154 = vst [vmem:[#allocation3 + $0x17] sm:$0x3] 0.0
        %1155 = vst [vmem:[#allocation3 + $0x1d] sm:$0x7f] 0.0
        %v1156 = vld [vmem:[%s4] sm:$0x1]
        %v1157 = vld [vmem:[#allocation2] ss:$2 sm:$0xf]
        %s1158 = scalar_lea.vmem [#allocation2], 20
        %v1159 = vld [vmem:[%s1158] ss:$2 sm:$0xf]
        %s1160 = scalar_lea.vmem [#allocation2], 40
        %v1161 = vld [vmem:[%s1160] ss:$2 sm:$0xf]
        %s1162 = scalar_lea.vmem [#allocation2], 60
        %v1163 = vld [vmem:[%s1162] ss:$2 sm:$0xf]
        %v1165 = vrot.slane %v1159, 4
        %v1168 = vrot.slane %v1163, 4
        %vm1170 = vcmask 1043456
        %v1171 = vsel %vm1170, %v1157, %v1165
        %v1172 = vsel %vm1170, %v1161, %v1168
        %v1173 = vld [vmem:[%s3] sm:$0xff]
        %v1174 = vld [vmem:[%s3 + $0x8] sm:$0xff]
        %v1175 = vld [vmem:[%s3 + $0x10] sm:$0xff]
        %v1176 = vld [vmem:[%s3 + $0x18] sm:$0xff]
        %v1177 = vld [vmem:[%s3 + $0x20] sm:$0xff]
        %v1178 = vld [vmem:[%s3 + $0x28] sm:$0xff]
        %v1179 = vld [vmem:[%s3 + $0x30] sm:$0xff]
        %v1180 = vld [vmem:[%s3 + $0x38] sm:$0xff]
        %v1181 = vld [vmem:[%s3 + $0x40] sm:$0xff]
        %v1182 = vld [vmem:[%s3 + $0x48] sm:$0xff]
        %v1183 = vld [vmem:[%s3 + $0x50] sm:$0xff]
        %v1184 = vld [vmem:[%s3 + $0x58] sm:$0xff]
        %v1185 = vld [vmem:[%s3 + $0x60] sm:$0xff]
        %v1186 = vld [vmem:[%s3 + $0x68] sm:$0xff]
        %v1187 = vld [vmem:[%s3 + $0x70] sm:$0xff]
        %v1188 = vld [vmem:[%s3 + $0x78] sm:$0xff]
        %s1189 = scalar_lea.vmem [#allocation2], 1
        %v1190 = vld [vmem:[%s1189] ss:$2 sm:$0xf]
        %s1191 = scalar_lea.vmem [#allocation2], 21
        %v1192 = vld [vmem:[%s1191] ss:$2 sm:$0xf]
        %s1193 = scalar_lea.vmem [#allocation2], 41
        %v1194 = vld [vmem:[%s1193] ss:$2 sm:$0xf]
        %s1195 = scalar_lea.vmem [#allocation2], 61
        %v1196 = vld [vmem:[%s1195] ss:$2 sm:$0xf]
        %v1198 = vrot.slane %v1192, 4
        %v1201 = vrot.slane %v1196, 4
        %v1203 = vsel %vm1170, %v1190, %v1198
        %v1204 = vsel %vm1170, %v1194, %v1201
        %s1205 = scalar_lea.vmem %s3, 128
        %v1206 = vld [vmem:[%s1205] sm:$0xff]
        %v1207 = vld [vmem:[%s1205 + $0x8] sm:$0xff]
        %v1208 = vld [vmem:[%s1205 + $0x10] sm:$0xff]
        %v1209 = vld [vmem:[%s1205 + $0x18] sm:$0xff]
        %v1210 = vld [vmem:[%s1205 + $0x20] sm:$0xff]
        %v1211 = vld [vmem:[%s1205 + $0x28] sm:$0xff]
        %v1212 = vld [vmem:[%s1205 + $0x30] sm:$0xff]
        %v1213 = vld [vmem:[%s1205 + $0x38] sm:$0xff]
        %v1214 = vld [vmem:[%s1205 + $0x40] sm:$0xff]
        %v1215 = vld [vmem:[%s1205 + $0x48] sm:$0xff]
        %v1216 = vld [vmem:[%s1205 + $0x50] sm:$0xff]
        %v1217 = vld [vmem:[%s1205 + $0x58] sm:$0xff]
        %v1218 = vld [vmem:[%s1205 + $0x60] sm:$0xff]
        %v1219 = vld [vmem:[%s1205 + $0x68] sm:$0xff]
        %v1220 = vld [vmem:[%s1205 + $0x70] sm:$0xff]
        %v1221 = vld [vmem:[%s1205 + $0x78] sm:$0xff]
        %1222 = vmatpush.msra.mxu0 %v1221
        %1223 = vmatpush.msra.mxu0 %v1220
        %1224 = vmatpush.msra.mxu0 %v1219
        %1225 = vmatpush.msra.mxu0 %v1218
        %1226 = vmatpush.msra.mxu0 %v1217
        %1227 = vmatpush.msra.mxu0 %v1216
        %1228 = vmatpush.msra.mxu0 %v1215
        %1229 = vmatpush.msra.mxu0 %v1214
        %1230 = vmatpush.msra.mxu0 %v1213
        %1231 = vmatpush.msra.mxu0 %v1212
        %1232 = vmatpush.msra.mxu0 %v1211
        %1233 = vmatpush.msra.mxu0 %v1210
        %1234 = vmatpush.msra.mxu0 %v1209
        %1235 = vmatpush.msra.mxu0 %v1208
        %1236 = vmatpush.msra.mxu0 %v1207
        %1237 = vmatpush.msra.mxu0 %v1206
        %1238 = vmatmul.f32.gmra.mxu0 %v1203
        %v1239 = vpop.f32.mrf.mxu0
        %v1240 = vadd.f32 0.0, %v1239
        %1241 = vmatmul.f32.gmra.mxu0 %v1204
        %v1242 = vpop.f32.mrf.mxu0
        %v1243 = vadd.f32 0.0, %v1242
        %1244 = vdwg.mxu0
        %1245 = vmatpush.msra.mxu0 %v1188
        %1246 = vmatpush.msra.mxu0 %v1187
        %1247 = vmatpush.msra.mxu0 %v1186
        %1248 = vmatpush.msra.mxu0 %v1185
        %1249 = vmatpush.msra.mxu0 %v1184
        %1250 = vmatpush.msra.mxu0 %v1183
        %1251 = vmatpush.msra.mxu0 %v1182
        %1252 = vmatpush.msra.mxu0 %v1181
        %1253 = vmatpush.msra.mxu0 %v1180
        %1254 = vmatpush.msra.mxu0 %v1179
        %1255 = vmatpush.msra.mxu0 %v1178
        %1256 = vmatpush.msra.mxu0 %v1177
        %1257 = vmatpush.msra.mxu0 %v1176
        %1258 = vmatpush.msra.mxu0 %v1175
        %1259 = vmatpush.msra.mxu0 %v1174
        %1260 = vmatpush.msra.mxu0 %v1173
        %1261 = vmatmul.f32.gmra.mxu0 %v1171
        %v1262 = vpop.f32.mrf.mxu0
        %v1263 = vadd.f32 %v1240, %v1262
        %1264 = vmatmul.f32.gmra.mxu0 %v1172
        %v1265 = vpop.f32.mrf.mxu0
        %v1266 = vadd.f32 %v1243, %v1265
        %1267 = vdwg.mxu0
        %s1268 = scalar_lea.vmem [#allocation2], 2
        %v1269 = vld [vmem:[%s1268] ss:$2 sm:$0xf]
        %s1270 = scalar_lea.vmem [#allocation2], 22
        %v1271 = vld [vmem:[%s1270] ss:$2 sm:$0xf]
        %s1272 = scalar_lea.vmem [#allocation2], 42
        %v1273 = vld [vmem:[%s1272] ss:$2 sm:$0xf]
        %s1274 = scalar_lea.vmem [#allocation2], 62
        %v1275 = vld [vmem:[%s1274] ss:$2 sm:$0xf]
        %v1277 = vrot.slane %v1271, 4
        %v1280 = vrot.slane %v1275, 4
        %v1282 = vsel %vm1170, %v1269, %v1277
        %v1283 = vsel %vm1170, %v1273, %v1280
        %s1284 = scalar_lea.vmem %s3, 256
        %v1285 = vld [vmem:[%s1284] sm:$0xff]
        %v1286 = vld [vmem:[%s1284 + $0x8] sm:$0xff]
        %v1287 = vld [vmem:[%s1284 + $0x10] sm:$0xff]
        %v1288 = vld [vmem:[%s1284 + $0x18] sm:$0xff]
        %v1289 = vld [vmem:[%s1284 + $0x20] sm:$0xff]
        %v1290 = vld [vmem:[%s1284 + $0x28] sm:$0xff]
        %v1291 = vld [vmem:[%s1284 + $0x30] sm:$0xff]
        %v1292 = vld [vmem:[%s1284 + $0x38] sm:$0xff]
        %v1293 = vld [vmem:[%s1284 + $0x40] sm:$0xff]
        %v1294 = vld [vmem:[%s1284 + $0x48] sm:$0xff]
        %v1295 = vld [vmem:[%s1284 + $0x50] sm:$0xff]
        %v1296 = vld [vmem:[%s1284 + $0x58] sm:$0xff]
        %v1297 = vld [vmem:[%s1284 + $0x60] sm:$0xff]
        %v1298 = vld [vmem:[%s1284 + $0x68] sm:$0xff]
        %v1299 = vld [vmem:[%s1284 + $0x70] sm:$0xff]
        %v1300 = vld [vmem:[%s1284 + $0x78] sm:$0xff]
        %1301 = vmatpush.msra.mxu0 %v1300
        %1302 = vmatpush.msra.mxu0 %v1299
        %1303 = vmatpush.msra.mxu0 %v1298
        %1304 = vmatpush.msra.mxu0 %v1297
        %1305 = vmatpush.msra.mxu0 %v1296
        %1306 = vmatpush.msra.mxu0 %v1295
        %1307 = vmatpush.msra.mxu0 %v1294
        %1308 = vmatpush.msra.mxu0 %v1293
        %1309 = vmatpush.msra.mxu0 %v1292
        %1310 = vmatpush.msra.mxu0 %v1291
        %1311 = vmatpush.msra.mxu0 %v1290
        %1312 = vmatpush.msra.mxu0 %v1289
        %1313 = vmatpush.msra.mxu0 %v1288
        %1314 = vmatpush.msra.mxu0 %v1287
        %1315 = vmatpush.msra.mxu0 %v1286
        %1316 = vmatpush.msra.mxu0 %v1285
        %1317 = vmatmul.f32.gmra.mxu0 %v1282
        %v1318 = vpop.f32.mrf.mxu0
        %v1319 = vadd.f32 0.0, %v1318
        %1320 = vmatmul.f32.gmra.mxu0 %v1283
        %v1321 = vpop.f32.mrf.mxu0
        %v1322 = vadd.f32 0.0, %v1321
        %1323 = vdwg.mxu0
        %v1324 = vadd.f32 %v1263, %v1319
        %v1325 = vadd.f32 %v1266, %v1322
        %s1326 = scalar_lea.vmem [#allocation2], 10
        %v1327 = vld [vmem:[%s1326] ss:$2 sm:$0xf]
        %s1328 = scalar_lea.vmem [#allocation2], 30
        %v1329 = vld [vmem:[%s1328] ss:$2 sm:$0xf]
        %s1330 = scalar_lea.vmem [#allocation2], 50
        %v1331 = vld [vmem:[%s1330] ss:$2 sm:$0xf]
        %s1332 = scalar_lea.vmem [#allocation2], 70
        %v1333 = vld [vmem:[%s1332] ss:$2 sm:$0xf]
        %v1335 = vrot.slane %v1329, 4
        %v1338 = vrot.slane %v1333, 4
        %v1340 = vsel %vm1170, %v1327, %v1335
        %v1341 = vsel %vm1170, %v1331, %v1338
        %s1342 = scalar_lea.vmem %s3, 384
        %v1343 = vld [vmem:[%s1342] sm:$0xff]
        %v1344 = vld [vmem:[%s1342 + $0x8] sm:$0xff]
        %v1345 = vld [vmem:[%s1342 + $0x10] sm:$0xff]
        %v1346 = vld [vmem:[%s1342 + $0x18] sm:$0xff]
        %v1347 = vld [vmem:[%s1342 + $0x20] sm:$0xff]
        %v1348 = vld [vmem:[%s1342 + $0x28] sm:$0xff]
        %v1349 = vld [vmem:[%s1342 + $0x30] sm:$0xff]
        %v1350 = vld [vmem:[%s1342 + $0x38] sm:$0xff]
        %v1351 = vld [vmem:[%s1342 + $0x40] sm:$0xff]
        %v1352 = vld [vmem:[%s1342 + $0x48] sm:$0xff]
        %v1353 = vld [vmem:[%s1342 + $0x50] sm:$0xff]
        %v1354 = vld [vmem:[%s1342 + $0x58] sm:$0xff]
        %v1355 = vld [vmem:[%s1342 + $0x60] sm:$0xff]
        %v1356 = vld [vmem:[%s1342 + $0x68] sm:$0xff]
        %v1357 = vld [vmem:[%s1342 + $0x70] sm:$0xff]
        %v1358 = vld [vmem:[%s1342 + $0x78] sm:$0xff]
        %1359 = vmatpush.msra.mxu0 %v1358
        %1360 = vmatpush.msra.mxu0 %v1357
        %1361 = vmatpush.msra.mxu0 %v1356
        %1362 = vmatpush.msra.mxu0 %v1355
        %1363 = vmatpush.msra.mxu0 %v1354
        %1364 = vmatpush.msra.mxu0 %v1353
        %1365 = vmatpush.msra.mxu0 %v1352
        %1366 = vmatpush.msra.mxu0 %v1351
        %1367 = vmatpush.msra.mxu0 %v1350
        %1368 = vmatpush.msra.mxu0 %v1349
        %1369 = vmatpush.msra.mxu0 %v1348
        %1370 = vmatpush.msra.mxu0 %v1347
        %1371 = vmatpush.msra.mxu0 %v1346
        %1372 = vmatpush.msra.mxu0 %v1345
        %1373 = vmatpush.msra.mxu0 %v1344
        %1374 = vmatpush.msra.mxu0 %v1343
        %1375 = vmatmul.f32.gmra.mxu0 %v1340
        %v1376 = vpop.f32.mrf.mxu0
        %v1377 = vadd.f32 0.0, %v1376
        %1378 = vmatmul.f32.gmra.mxu0 %v1341
        %v1379 = vpop.f32.mrf.mxu0
        %v1380 = vadd.f32 0.0, %v1379
        %1381 = vdwg.mxu0
        %v1382 = vadd.f32 %v1324, %v1377
        %v1383 = vadd.f32 %v1325, %v1380
        %s1384 = scalar_lea.vmem [#allocation2], 11
        %v1385 = vld [vmem:[%s1384] ss:$2 sm:$0xf]
        %s1386 = scalar_lea.vmem [#allocation2], 31
        %v1387 = vld [vmem:[%s1386] ss:$2 sm:$0xf]
        %s1388 = scalar_lea.vmem [#allocation2], 51
        %v1389 = vld [vmem:[%s1388] ss:$2 sm:$0xf]
        %s1390 = scalar_lea.vmem [#allocation2], 71
        %v1391 = vld [vmem:[%s1390] ss:$2 sm:$0xf]
        %v1393 = vrot.slane %v1387, 4
        %v1396 = vrot.slane %v1391, 4
        %v1398 = vsel %vm1170, %v1385, %v1393
        %v1399 = vsel %vm1170, %v1389, %v1396
        %s1400 = scalar_lea.vmem %s3, 512
        %v1401 = vld [vmem:[%s1400] sm:$0xff]
        %v1402 = vld [vmem:[%s1400 + $0x8] sm:$0xff]
        %v1403 = vld [vmem:[%s1400 + $0x10] sm:$0xff]
        %v1404 = vld [vmem:[%s1400 + $0x18] sm:$0xff]
        %v1405 = vld [vmem:[%s1400 + $0x20] sm:$0xff]
        %v1406 = vld [vmem:[%s1400 + $0x28] sm:$0xff]
        %v1407 = vld [vmem:[%s1400 + $0x30] sm:$0xff]
        %v1408 = vld [vmem:[%s1400 + $0x38] sm:$0xff]
        %v1409 = vld [vmem:[%s1400 + $0x40] sm:$0xff]
        %v1410 = vld [vmem:[%s1400 + $0x48] sm:$0xff]
        %v1411 = vld [vmem:[%s1400 + $0x50] sm:$0xff]
        %v1412 = vld [vmem:[%s1400 + $0x58] sm:$0xff]
        %v1413 = vld [vmem:[%s1400 + $0x60] sm:$0xff]
        %v1414 = vld [vmem:[%s1400 + $0x68] sm:$0xff]
        %v1415 = vld [vmem:[%s1400 + $0x70] sm:$0xff]
        %v1416 = vld [vmem:[%s1400 + $0x78] sm:$0xff]
        %1417 = vmatpush.msra.mxu0 %v1416
        %1418 = vmatpush.msra.mxu0 %v1415
        %1419 = vmatpush.msra.mxu0 %v1414
        %1420 = vmatpush.msra.mxu0 %v1413
        %1421 = vmatpush.msra.mxu0 %v1412
        %1422 = vmatpush.msra.mxu0 %v1411
        %1423 = vmatpush.msra.mxu0 %v1410
        %1424 = vmatpush.msra.mxu0 %v1409
        %1425 = vmatpush.msra.mxu0 %v1408
        %1426 = vmatpush.msra.mxu0 %v1407
        %1427 = vmatpush.msra.mxu0 %v1406
        %1428 = vmatpush.msra.mxu0 %v1405
        %1429 = vmatpush.msra.mxu0 %v1404
        %1430 = vmatpush.msra.mxu0 %v1403
        %1431 = vmatpush.msra.mxu0 %v1402
        %1432 = vmatpush.msra.mxu0 %v1401
        %1433 = vmatmul.f32.gmra.mxu0 %v1398
        %v1434 = vpop.f32.mrf.mxu0
        %v1435 = vadd.f32 0.0, %v1434
        %1436 = vmatmul.f32.gmra.mxu0 %v1399
        %v1437 = vpop.f32.mrf.mxu0
        %v1438 = vadd.f32 0.0, %v1437
        %1439 = vdwg.mxu0
        %v1440 = vadd.f32 %v1382, %v1435
        %v1441 = vadd.f32 %v1383, %v1438
        %s1442 = scalar_lea.vmem [#allocation2], 12
        %v1443 = vld [vmem:[%s1442] ss:$2 sm:$0xf]
        %s1444 = scalar_lea.vmem [#allocation2], 32
        %v1445 = vld [vmem:[%s1444] ss:$2 sm:$0xf]
        %s1446 = scalar_lea.vmem [#allocation2], 52
        %v1447 = vld [vmem:[%s1446] ss:$2 sm:$0xf]
        %s1448 = scalar_lea.vmem [#allocation2], 72
        %v1449 = vld [vmem:[%s1448] ss:$2 sm:$0xf]
        %v1451 = vrot.slane %v1445, 4
        %v1454 = vrot.slane %v1449, 4
        %v1456 = vsel %vm1170, %v1443, %v1451
        %v1457 = vsel %vm1170, %v1447, %v1454
        %s1458 = scalar_lea.vmem %s3, 640
        %v1459 = vld [vmem:[%s1458] sm:$0xff]
        %v1460 = vld [vmem:[%s1458 + $0x8] sm:$0xff]
        %v1461 = vld [vmem:[%s1458 + $0x10] sm:$0xff]
        %v1462 = vld [vmem:[%s1458 + $0x18] sm:$0xff]
        %v1463 = vld [vmem:[%s1458 + $0x20] sm:$0xff]
        %v1464 = vld [vmem:[%s1458 + $0x28] sm:$0xff]
        %v1465 = vld [vmem:[%s1458 + $0x30] sm:$0xff]
        %v1466 = vld [vmem:[%s1458 + $0x38] sm:$0xff]
        %v1467 = vld [vmem:[%s1458 + $0x40] sm:$0xff]
        %v1468 = vld [vmem:[%s1458 + $0x48] sm:$0xff]
        %v1469 = vld [vmem:[%s1458 + $0x50] sm:$0xff]
        %v1470 = vld [vmem:[%s1458 + $0x58] sm:$0xff]
        %v1471 = vld [vmem:[%s1458 + $0x60] sm:$0xff]
        %v1472 = vld [vmem:[%s1458 + $0x68] sm:$0xff]
        %v1473 = vld [vmem:[%s1458 + $0x70] sm:$0xff]
        %v1474 = vld [vmem:[%s1458 + $0x78] sm:$0xff]
        %1475 = vmatpush.msra.mxu0 %v1474
        %1476 = vmatpush.msra.mxu0 %v1473
        %1477 = vmatpush.msra.mxu0 %v1472
        %1478 = vmatpush.msra.mxu0 %v1471
        %1479 = vmatpush.msra.mxu0 %v1470
        %1480 = vmatpush.msra.mxu0 %v1469
        %1481 = vmatpush.msra.mxu0 %v1468
        %1482 = vmatpush.msra.mxu0 %v1467
        %1483 = vmatpush.msra.mxu0 %v1466
        %1484 = vmatpush.msra.mxu0 %v1465
        %1485 = vmatpush.msra.mxu0 %v1464
        %1486 = vmatpush.msra.mxu0 %v1463
        %1487 = vmatpush.msra.mxu0 %v1462
        %1488 = vmatpush.msra.mxu0 %v1461
        %1489 = vmatpush.msra.mxu0 %v1460
        %1490 = vmatpush.msra.mxu0 %v1459
        %1491 = vmatmul.f32.gmra.mxu0 %v1456
        %v1492 = vpop.f32.mrf.mxu0
        %v1493 = vadd.f32 0.0, %v1492
        %1494 = vmatmul.f32.gmra.mxu0 %v1457
        %v1495 = vpop.f32.mrf.mxu0
        %v1496 = vadd.f32 0.0, %v1495
        %1497 = vdwg.mxu0
        %v1498 = vadd.f32 %v1440, %v1493
        %v1499 = vadd.f32 %v1441, %v1496
        %s1500 = scalar_lea.vmem [#allocation2], 80
        %v1501 = vld [vmem:[%s1500] ss:$2 sm:$0xf]
        %v1503 = vrot.slane %v1161, 4
        %v1506 = vrot.slane %v1501, 4
        %v1508 = vsel %vm1170, %v1159, %v1503
        %v1509 = vsel %vm1170, %v1163, %v1506
        %s1510 = scalar_lea.vmem %s3, 768
        %v1511 = vld [vmem:[%s1510] sm:$0xff]
        %v1512 = vld [vmem:[%s1510 + $0x8] sm:$0xff]
        %v1513 = vld [vmem:[%s1510 + $0x10] sm:$0xff]
        %v1514 = vld [vmem:[%s1510 + $0x18] sm:$0xff]
        %v1515 = vld [vmem:[%s1510 + $0x20] sm:$0xff]
        %v1516 = vld [vmem:[%s1510 + $0x28] sm:$0xff]
        %v1517 = vld [vmem:[%s1510 + $0x30] sm:$0xff]
        %v1518 = vld [vmem:[%s1510 + $0x38] sm:$0xff]
        %v1519 = vld [vmem:[%s1510 + $0x40] sm:$0xff]
        %v1520 = vld [vmem:[%s1510 + $0x48] sm:$0xff]
        %v1521 = vld [vmem:[%s1510 + $0x50] sm:$0xff]
        %v1522 = vld [vmem:[%s1510 + $0x58] sm:$0xff]
        %v1523 = vld [vmem:[%s1510 + $0x60] sm:$0xff]
        %v1524 = vld [vmem:[%s1510 + $0x68] sm:$0xff]
        %v1525 = vld [vmem:[%s1510 + $0x70] sm:$0xff]
        %v1526 = vld [vmem:[%s1510 + $0x78] sm:$0xff]
        %1527 = vmatpush.msra.mxu0 %v1526
        %1528 = vmatpush.msra.mxu0 %v1525
        %1529 = vmatpush.msra.mxu0 %v1524
        %1530 = vmatpush.msra.mxu0 %v1523
        %1531 = vmatpush.msra.mxu0 %v1522
        %1532 = vmatpush.msra.mxu0 %v1521
        %1533 = vmatpush.msra.mxu0 %v1520
        %1534 = vmatpush.msra.mxu0 %v1519
        %1535 = vmatpush.msra.mxu0 %v1518
        %1536 = vmatpush.msra.mxu0 %v1517
        %1537 = vmatpush.msra.mxu0 %v1516
        %1538 = vmatpush.msra.mxu0 %v1515
        %1539 = vmatpush.msra.mxu0 %v1514
        %1540 = vmatpush.msra.mxu0 %v1513
        %1541 = vmatpush.msra.mxu0 %v1512
        %1542 = vmatpush.msra.mxu0 %v1511
        %1543 = vmatmul.f32.gmra.mxu0 %v1508
        %v1544 = vpop.f32.mrf.mxu0
        %v1545 = vadd.f32 0.0, %v1544
        %1546 = vmatmul.f32.gmra.mxu0 %v1509
        %v1547 = vpop.f32.mrf.mxu0
        %v1548 = vadd.f32 0.0, %v1547
        %1549 = vdwg.mxu0
        %v1550 = vadd.f32 %v1498, %v1545
        %v1551 = vadd.f32 %v1499, %v1548
        %s1552 = scalar_lea.vmem [#allocation2], 81
        %v1553 = vld [vmem:[%s1552] ss:$2 sm:$0xf]
        %v1555 = vrot.slane %v1194, 4
        %v1558 = vrot.slane %v1553, 4
        %v1560 = vsel %vm1170, %v1192, %v1555
        %v1561 = vsel %vm1170, %v1196, %v1558
        %s1562 = scalar_lea.vmem %s3, 896
        %v1563 = vld [vmem:[%s1562] sm:$0xff]
        %v1564 = vld [vmem:[%s1562 + $0x8] sm:$0xff]
        %v1565 = vld [vmem:[%s1562 + $0x10] sm:$0xff]
        %v1566 = vld [vmem:[%s1562 + $0x18] sm:$0xff]
        %v1567 = vld [vmem:[%s1562 + $0x20] sm:$0xff]
        %v1568 = vld [vmem:[%s1562 + $0x28] sm:$0xff]
        %v1569 = vld [vmem:[%s1562 + $0x30] sm:$0xff]
        %v1570 = vld [vmem:[%s1562 + $0x38] sm:$0xff]
        %v1571 = vld [vmem:[%s1562 + $0x40] sm:$0xff]
        %v1572 = vld [vmem:[%s1562 + $0x48] sm:$0xff]
        %v1573 = vld [vmem:[%s1562 + $0x50] sm:$0xff]
        %v1574 = vld [vmem:[%s1562 + $0x58] sm:$0xff]
        %v1575 = vld [vmem:[%s1562 + $0x60] sm:$0xff]
        %v1576 = vld [vmem:[%s1562 + $0x68] sm:$0xff]
        %v1577 = vld [vmem:[%s1562 + $0x70] sm:$0xff]
        %v1578 = vld [vmem:[%s1562 + $0x78] sm:$0xff]
        %1579 = vmatpush.msra.mxu0 %v1578
        %1580 = vmatpush.msra.mxu0 %v1577
        %1581 = vmatpush.msra.mxu0 %v1576
        %1582 = vmatpush.msra.mxu0 %v1575
        %1583 = vmatpush.msra.mxu0 %v1574
        %1584 = vmatpush.msra.mxu0 %v1573
        %1585 = vmatpush.msra.mxu0 %v1572
        %1586 = vmatpush.msra.mxu0 %v1571
        %1587 = vmatpush.msra.mxu0 %v1570
        %1588 = vmatpush.msra.mxu0 %v1569
        %1589 = vmatpush.msra.mxu0 %v1568
        %1590 = vmatpush.msra.mxu0 %v1567
        %1591 = vmatpush.msra.mxu0 %v1566
        %1592 = vmatpush.msra.mxu0 %v1565
        %1593 = vmatpush.msra.mxu0 %v1564
        %1594 = vmatpush.msra.mxu0 %v1563
        %1595 = vmatmul.f32.gmra.mxu0 %v1560
        %v1596 = vpop.f32.mrf.mxu0
        %v1597 = vadd.f32 0.0, %v1596
        %1598 = vmatmul.f32.gmra.mxu0 %v1561
        %v1599 = vpop.f32.mrf.mxu0
        %v1600 = vadd.f32 0.0, %v1599
        %1601 = vdwg.mxu0
        %v1602 = vadd.f32 %v1550, %v1597
        %v1603 = vadd.f32 %v1551, %v1600
        %s1604 = scalar_lea.vmem [#allocation2], 82
        %v1605 = vld [vmem:[%s1604] ss:$2 sm:$0xf]
        %v1607 = vrot.slane %v1273, 4
        %v1610 = vrot.slane %v1605, 4
        %v1612 = vsel %vm1170, %v1271, %v1607
        %v1613 = vsel %vm1170, %v1275, %v1610
        %s1614 = scalar_lea.vmem %s3, 1024
        %v1615 = vld [vmem:[%s1614] sm:$0xff]
        %v1616 = vld [vmem:[%s1614 + $0x8] sm:$0xff]
        %v1617 = vld [vmem:[%s1614 + $0x10] sm:$0xff]
        %v1618 = vld [vmem:[%s1614 + $0x18] sm:$0xff]
        %v1619 = vld [vmem:[%s1614 + $0x20] sm:$0xff]
        %v1620 = vld [vmem:[%s1614 + $0x28] sm:$0xff]
        %v1621 = vld [vmem:[%s1614 + $0x30] sm:$0xff]
        %v1622 = vld [vmem:[%s1614 + $0x38] sm:$0xff]
        %v1623 = vld [vmem:[%s1614 + $0x40] sm:$0xff]
        %v1624 = vld [vmem:[%s1614 + $0x48] sm:$0xff]
        %v1625 = vld [vmem:[%s1614 + $0x50] sm:$0xff]
        %v1626 = vld [vmem:[%s1614 + $0x58] sm:$0xff]
        %v1627 = vld [vmem:[%s1614 + $0x60] sm:$0xff]
        %v1628 = vld [vmem:[%s1614 + $0x68] sm:$0xff]
        %v1629 = vld [vmem:[%s1614 + $0x70] sm:$0xff]
        %v1630 = vld [vmem:[%s1614 + $0x78] sm:$0xff]
        %1631 = vmatpush.msra.mxu0 %v1630
        %1632 = vmatpush.msra.mxu0 %v1629
        %1633 = vmatpush.msra.mxu0 %v1628
        %1634 = vmatpush.msra.mxu0 %v1627
        %1635 = vmatpush.msra.mxu0 %v1626
        %1636 = vmatpush.msra.mxu0 %v1625
        %1637 = vmatpush.msra.mxu0 %v1624
        %1638 = vmatpush.msra.mxu0 %v1623
        %1639 = vmatpush.msra.mxu0 %v1622
        %1640 = vmatpush.msra.mxu0 %v1621
        %1641 = vmatpush.msra.mxu0 %v1620
        %1642 = vmatpush.msra.mxu0 %v1619
        %1643 = vmatpush.msra.mxu0 %v1618
        %1644 = vmatpush.msra.mxu0 %v1617
        %1645 = vmatpush.msra.mxu0 %v1616
        %1646 = vmatpush.msra.mxu0 %v1615
        %1647 = vmatmul.f32.gmra.mxu0 %v1612
        %v1648 = vpop.f32.mrf.mxu0
        %v1649 = vadd.f32 0.0, %v1648
        %1650 = vmatmul.f32.gmra.mxu0 %v1613
        %v1651 = vpop.f32.mrf.mxu0
        %v1652 = vadd.f32 0.0, %v1651
        %1653 = vdwg.mxu0
        %v1654 = vadd.f32 %v1602, %v1649
        %v1655 = vadd.f32 %v1603, %v1652
        %v1657 = vperm.slane %v1156, 0
        %v1659 = vadd.f32 %v1654, %v1657
        %v1660 = vadd.f32 %v1655, %v1657
        %vm1661 = vcmp.ge.f32.partialorder %v1659, 0.0
        %vm1662 = vcmp.ge.f32.partialorder %v1660, 0.0
        %v1663 = vmul.f32 %v1659, 0.01
        %v1664 = vmul.f32 %v1660, 0.01
        %v1665 = vsel %vm1661, %v1659, %v1663
        %v1666 = vsel %vm1662, %v1660, %v1664
        %1667 = vst [vmem:[#allocation3 + $0x7] sm:$0xf] %v1665
        %1668 = vst [vmem:[#allocation3 + $0x9] sm:$0xf0] %v1665
        %1669 = vst [vmem:[#allocation3 + $0x13] sm:$0xf] %v1666
        %1670 = vst [vmem:[#allocation3 + $0x15] sm:$0xf0] %v1666
        %1671 = vst [vmem:[#allocation4] sm:$0x1f] 0.0
        %1672 = vst [vmem:[#allocation4 + $0x7] sm:$0x3] 0.0
        %1673 = vst [vmem:[#allocation4 + $0xb] sm:$0x1f] 0.0
        %v1674 = vld [vmem:[%s6] sm:$0x1]
        %v1675 = vld [vmem:[#allocation3] ss:$2 sm:$0x3]
        %s1676 = scalar_lea.vmem [#allocation3], 12
        %v1677 = vld [vmem:[%s1676] ss:$2 sm:$0x3]
        %v1679 = vrot.slane %v1677, 6
        %vm1681 = vcmask 1041408
        %v1682 = vsel %vm1681, %v1675, %v1679
        %v1683 = vld [vmem:[#allocation6] sm:$0xff]
        %v1684 = vld [vmem:[#allocation6 + $0x8] sm:$0xff]
        %v1685 = vld [vmem:[#allocation6 + $0x10] sm:$0xff]
        %v1686 = vld [vmem:[#allocation6 + $0x18] sm:$0xff]
        %v1687 = vld [vmem:[#allocation6 + $0x20] sm:$0xff]
        %v1688 = vld [vmem:[#allocation6 + $0x28] sm:$0xff]
        %v1689 = vld [vmem:[#allocation6 + $0x30] sm:$0xff]
        %v1690 = vld [vmem:[#allocation6 + $0x38] sm:$0xff]
        %v1691 = vld [vmem:[#allocation6 + $0x40] sm:$0xff]
        %v1692 = vld [vmem:[#allocation6 + $0x48] sm:$0xff]
        %v1693 = vld [vmem:[#allocation6 + $0x50] sm:$0xff]
        %v1694 = vld [vmem:[#allocation6 + $0x58] sm:$0xff]
        %v1695 = vld [vmem:[#allocation6 + $0x60] sm:$0xff]
        %v1696 = vld [vmem:[#allocation6 + $0x68] sm:$0xff]
        %v1697 = vld [vmem:[#allocation6 + $0x70] sm:$0xff]
        %v1698 = vld [vmem:[#allocation6 + $0x78] sm:$0xff]
        %s1699 = scalar_lea.vmem [#allocation3], 1
        %v1700 = vld [vmem:[%s1699] ss:$2 sm:$0x3]
        %s1701 = scalar_lea.vmem [#allocation3], 13
        %v1702 = vld [vmem:[%s1701] ss:$2 sm:$0x3]
        %v1704 = vrot.slane %v1702, 6
        %v1706 = vsel %vm1681, %v1700, %v1704
        %s1707 = scalar_lea.vmem [#allocation6], 128
        %v1708 = vld [vmem:[%s1707] sm:$0xff]
        %v1709 = vld [vmem:[%s1707 + $0x8] sm:$0xff]
        %v1710 = vld [vmem:[%s1707 + $0x10] sm:$0xff]
        %v1711 = vld [vmem:[%s1707 + $0x18] sm:$0xff]
        %v1712 = vld [vmem:[%s1707 + $0x20] sm:$0xff]
        %v1713 = vld [vmem:[%s1707 + $0x28] sm:$0xff]
        %v1714 = vld [vmem:[%s1707 + $0x30] sm:$0xff]
        %v1715 = vld [vmem:[%s1707 + $0x38] sm:$0xff]
        %v1716 = vld [vmem:[%s1707 + $0x40] sm:$0xff]
        %v1717 = vld [vmem:[%s1707 + $0x48] sm:$0xff]
        %v1718 = vld [vmem:[%s1707 + $0x50] sm:$0xff]
        %v1719 = vld [vmem:[%s1707 + $0x58] sm:$0xff]
        %v1720 = vld [vmem:[%s1707 + $0x60] sm:$0xff]
        %v1721 = vld [vmem:[%s1707 + $0x68] sm:$0xff]
        %v1722 = vld [vmem:[%s1707 + $0x70] sm:$0xff]
        %v1723 = vld [vmem:[%s1707 + $0x78] sm:$0xff]
        %1724 = vmatpush.msra.mxu0 %v1723
        %1725 = vmatpush.msra.mxu0 %v1722
        %1726 = vmatpush.msra.mxu0 %v1721
        %1727 = vmatpush.msra.mxu0 %v1720
        %1728 = vmatpush.msra.mxu0 %v1719
        %1729 = vmatpush.msra.mxu0 %v1718
        %1730 = vmatpush.msra.mxu0 %v1717
        %1731 = vmatpush.msra.mxu0 %v1716
        %1732 = vmatpush.msra.mxu0 %v1715
        %1733 = vmatpush.msra.mxu0 %v1714
        %1734 = vmatpush.msra.mxu0 %v1713
        %1735 = vmatpush.msra.mxu0 %v1712
        %1736 = vmatpush.msra.mxu0 %v1711
        %1737 = vmatpush.msra.mxu0 %v1710
        %1738 = vmatpush.msra.mxu0 %v1709
        %1739 = vmatpush.msra.mxu0 %v1708
        %1740 = vmatmul.f32.gmra.mxu0 %v1706
        %v1741 = vpop.f32.mrf.mxu0
        %v1742 = vadd.f32 0.0, %v1741
        %1743 = vdwg.mxu0
        %1744 = vmatpush.msra.mxu0 %v1698
        %1745 = vmatpush.msra.mxu0 %v1697
        %1746 = vmatpush.msra.mxu0 %v1696
        %1747 = vmatpush.msra.mxu0 %v1695
        %1748 = vmatpush.msra.mxu0 %v1694
        %1749 = vmatpush.msra.mxu0 %v1693
        %1750 = vmatpush.msra.mxu0 %v1692
        %1751 = vmatpush.msra.mxu0 %v1691
        %1752 = vmatpush.msra.mxu0 %v1690
        %1753 = vmatpush.msra.mxu0 %v1689
        %1754 = vmatpush.msra.mxu0 %v1688
        %1755 = vmatpush.msra.mxu0 %v1687
        %1756 = vmatpush.msra.mxu0 %v1686
        %1757 = vmatpush.msra.mxu0 %v1685
        %1758 = vmatpush.msra.mxu0 %v1684
        %1759 = vmatpush.msra.mxu0 %v1683
        %1760 = vmatmul.f32.gmra.mxu0 %v1682
        %v1761 = vpop.f32.mrf.mxu0
        %v1762 = vadd.f32 %v1742, %v1761
        %1763 = vdwg.mxu0
        %s1764 = scalar_lea.vmem [#allocation3], 2
        %v1765 = vld [vmem:[%s1764] ss:$2 sm:$0x3]
        %s1766 = scalar_lea.vmem [#allocation3], 14
        %v1767 = vld [vmem:[%s1766] ss:$2 sm:$0x3]
        %v1769 = vrot.slane %v1767, 6
        %v1771 = vsel %vm1681, %v1765, %v1769
        %s1772 = scalar_lea.vmem [#allocation6], 256
        %v1773 = vld [vmem:[%s1772] sm:$0xff]
        %v1774 = vld [vmem:[%s1772 + $0x8] sm:$0xff]
        %v1775 = vld [vmem:[%s1772 + $0x10] sm:$0xff]
        %v1776 = vld [vmem:[%s1772 + $0x18] sm:$0xff]
        %v1777 = vld [vmem:[%s1772 + $0x20] sm:$0xff]
        %v1778 = vld [vmem:[%s1772 + $0x28] sm:$0xff]
        %v1779 = vld [vmem:[%s1772 + $0x30] sm:$0xff]
        %v1780 = vld [vmem:[%s1772 + $0x38] sm:$0xff]
        %v1781 = vld [vmem:[%s1772 + $0x40] sm:$0xff]
        %v1782 = vld [vmem:[%s1772 + $0x48] sm:$0xff]
        %v1783 = vld [vmem:[%s1772 + $0x50] sm:$0xff]
        %v1784 = vld [vmem:[%s1772 + $0x58] sm:$0xff]
        %v1785 = vld [vmem:[%s1772 + $0x60] sm:$0xff]
        %v1786 = vld [vmem:[%s1772 + $0x68] sm:$0xff]
        %v1787 = vld [vmem:[%s1772 + $0x70] sm:$0xff]
        %v1788 = vld [vmem:[%s1772 + $0x78] sm:$0xff]
        %1789 = vmatpush.msra.mxu0 %v1788
        %1790 = vmatpush.msra.mxu0 %v1787
        %1791 = vmatpush.msra.mxu0 %v1786
        %1792 = vmatpush.msra.mxu0 %v1785
        %1793 = vmatpush.msra.mxu0 %v1784
        %1794 = vmatpush.msra.mxu0 %v1783
        %1795 = vmatpush.msra.mxu0 %v1782
        %1796 = vmatpush.msra.mxu0 %v1781
        %1797 = vmatpush.msra.mxu0 %v1780
        %1798 = vmatpush.msra.mxu0 %v1779
        %1799 = vmatpush.msra.mxu0 %v1778
        %1800 = vmatpush.msra.mxu0 %v1777
        %1801 = vmatpush.msra.mxu0 %v1776
        %1802 = vmatpush.msra.mxu0 %v1775
        %1803 = vmatpush.msra.mxu0 %v1774
        %1804 = vmatpush.msra.mxu0 %v1773
        %1805 = vmatmul.f32.gmra.mxu0 %v1771
        %v1806 = vpop.f32.mrf.mxu0
        %v1807 = vadd.f32 0.0, %v1806
        %1808 = vdwg.mxu0
        %v1809 = vadd.f32 %v1762, %v1807
        %s1810 = scalar_lea.vmem [#allocation3], 6
        %v1811 = vld [vmem:[%s1810] ss:$2 sm:$0x3]
        %s1812 = scalar_lea.vmem [#allocation3], 18
        %v1813 = vld [vmem:[%s1812] ss:$2 sm:$0x3]
        %v1815 = vrot.slane %v1813, 6
        %v1817 = vsel %vm1681, %v1811, %v1815
        %s1818 = scalar_lea.vmem [#allocation6], 384
        %v1819 = vld [vmem:[%s1818] sm:$0xff]
        %v1820 = vld [vmem:[%s1818 + $0x8] sm:$0xff]
        %v1821 = vld [vmem:[%s1818 + $0x10] sm:$0xff]
        %v1822 = vld [vmem:[%s1818 + $0x18] sm:$0xff]
        %v1823 = vld [vmem:[%s1818 + $0x20] sm:$0xff]
        %v1824 = vld [vmem:[%s1818 + $0x28] sm:$0xff]
        %v1825 = vld [vmem:[%s1818 + $0x30] sm:$0xff]
        %v1826 = vld [vmem:[%s1818 + $0x38] sm:$0xff]
        %v1827 = vld [vmem:[%s1818 + $0x40] sm:$0xff]
        %v1828 = vld [vmem:[%s1818 + $0x48] sm:$0xff]
        %v1829 = vld [vmem:[%s1818 + $0x50] sm:$0xff]
        %v1830 = vld [vmem:[%s1818 + $0x58] sm:$0xff]
        %v1831 = vld [vmem:[%s1818 + $0x60] sm:$0xff]
        %v1832 = vld [vmem:[%s1818 + $0x68] sm:$0xff]
        %v1833 = vld [vmem:[%s1818 + $0x70] sm:$0xff]
        %v1834 = vld [vmem:[%s1818 + $0x78] sm:$0xff]
        %1835 = vmatpush.msra.mxu0 %v1834
        %1836 = vmatpush.msra.mxu0 %v1833
        %1837 = vmatpush.msra.mxu0 %v1832
        %1838 = vmatpush.msra.mxu0 %v1831
        %1839 = vmatpush.msra.mxu0 %v1830
        %1840 = vmatpush.msra.mxu0 %v1829
        %1841 = vmatpush.msra.mxu0 %v1828
        %1842 = vmatpush.msra.mxu0 %v1827
        %1843 = vmatpush.msra.mxu0 %v1826
        %1844 = vmatpush.msra.mxu0 %v1825
        %1845 = vmatpush.msra.mxu0 %v1824
        %1846 = vmatpush.msra.mxu0 %v1823
        %1847 = vmatpush.msra.mxu0 %v1822
        %1848 = vmatpush.msra.mxu0 %v1821
        %1849 = vmatpush.msra.mxu0 %v1820
        %1850 = vmatpush.msra.mxu0 %v1819
        %1851 = vmatmul.f32.gmra.mxu0 %v1817
        %v1852 = vpop.f32.mrf.mxu0
        %v1853 = vadd.f32 0.0, %v1852
        %1854 = vdwg.mxu0
        %v1855 = vadd.f32 %v1809, %v1853
        %s1856 = scalar_lea.vmem [#allocation3], 7
        %v1857 = vld [vmem:[%s1856] ss:$2 sm:$0x3]
        %s1858 = scalar_lea.vmem [#allocation3], 19
        %v1859 = vld [vmem:[%s1858] ss:$2 sm:$0x3]
        %v1861 = vrot.slane %v1859, 6
        %v1863 = vsel %vm1681, %v1857, %v1861
        %s1864 = scalar_lea.vmem [#allocation6], 512
        %v1865 = vld [vmem:[%s1864] sm:$0xff]
        %v1866 = vld [vmem:[%s1864 + $0x8] sm:$0xff]
        %v1867 = vld [vmem:[%s1864 + $0x10] sm:$0xff]
        %v1868 = vld [vmem:[%s1864 + $0x18] sm:$0xff]
        %v1869 = vld [vmem:[%s1864 + $0x20] sm:$0xff]
        %v1870 = vld [vmem:[%s1864 + $0x28] sm:$0xff]
        %v1871 = vld [vmem:[%s1864 + $0x30] sm:$0xff]
        %v1872 = vld [vmem:[%s1864 + $0x38] sm:$0xff]
        %v1873 = vld [vmem:[%s1864 + $0x40] sm:$0xff]
        %v1874 = vld [vmem:[%s1864 + $0x48] sm:$0xff]
        %v1875 = vld [vmem:[%s1864 + $0x50] sm:$0xff]
        %v1876 = vld [vmem:[%s1864 + $0x58] sm:$0xff]
        %v1877 = vld [vmem:[%s1864 + $0x60] sm:$0xff]
        %v1878 = vld [vmem:[%s1864 + $0x68] sm:$0xff]
        %v1879 = vld [vmem:[%s1864 + $0x70] sm:$0xff]
        %v1880 = vld [vmem:[%s1864 + $0x78] sm:$0xff]
        %1881 = vmatpush.msra.mxu0 %v1880
        %1882 = vmatpush.msra.mxu0 %v1879
        %1883 = vmatpush.msra.mxu0 %v1878
        %1884 = vmatpush.msra.mxu0 %v1877
        %1885 = vmatpush.msra.mxu0 %v1876
        %1886 = vmatpush.msra.mxu0 %v1875
        %1887 = vmatpush.msra.mxu0 %v1874
        %1888 = vmatpush.msra.mxu0 %v1873
        %1889 = vmatpush.msra.mxu0 %v1872
        %1890 = vmatpush.msra.mxu0 %v1871
        %1891 = vmatpush.msra.mxu0 %v1870
        %1892 = vmatpush.msra.mxu0 %v1869
        %1893 = vmatpush.msra.mxu0 %v1868
        %1894 = vmatpush.msra.mxu0 %v1867
        %1895 = vmatpush.msra.mxu0 %v1866
        %1896 = vmatpush.msra.mxu0 %v1865
        %1897 = vmatmul.f32.gmra.mxu0 %v1863
        %v1898 = vpop.f32.mrf.mxu0
        %v1899 = vadd.f32 0.0, %v1898
        %1900 = vdwg.mxu0
        %v1901 = vadd.f32 %v1855, %v1899
        %s1902 = scalar_lea.vmem [#allocation3], 8
        %v1903 = vld [vmem:[%s1902] ss:$2 sm:$0x3]
        %s1904 = scalar_lea.vmem [#allocation3], 20
        %v1905 = vld [vmem:[%s1904] ss:$2 sm:$0x3]
        %v1907 = vrot.slane %v1905, 6
        %v1909 = vsel %vm1681, %v1903, %v1907
        %s1910 = scalar_lea.vmem [#allocation6], 640
        %v1911 = vld [vmem:[%s1910] sm:$0xff]
        %v1912 = vld [vmem:[%s1910 + $0x8] sm:$0xff]
        %v1913 = vld [vmem:[%s1910 + $0x10] sm:$0xff]
        %v1914 = vld [vmem:[%s1910 + $0x18] sm:$0xff]
        %v1915 = vld [vmem:[%s1910 + $0x20] sm:$0xff]
        %v1916 = vld [vmem:[%s1910 + $0x28] sm:$0xff]
        %v1917 = vld [vmem:[%s1910 + $0x30] sm:$0xff]
        %v1918 = vld [vmem:[%s1910 + $0x38] sm:$0xff]
        %v1919 = vld [vmem:[%s1910 + $0x40] sm:$0xff]
        %v1920 = vld [vmem:[%s1910 + $0x48] sm:$0xff]
        %v1921 = vld [vmem:[%s1910 + $0x50] sm:$0xff]
        %v1922 = vld [vmem:[%s1910 + $0x58] sm:$0xff]
        %v1923 = vld [vmem:[%s1910 + $0x60] sm:$0xff]
        %v1924 = vld [vmem:[%s1910 + $0x68] sm:$0xff]
        %v1925 = vld [vmem:[%s1910 + $0x70] sm:$0xff]
        %v1926 = vld [vmem:[%s1910 + $0x78] sm:$0xff]
        %1927 = vmatpush.msra.mxu0 %v1926
        %1928 = vmatpush.msra.mxu0 %v1925
        %1929 = vmatpush.msra.mxu0 %v1924
        %1930 = vmatpush.msra.mxu0 %v1923
        %1931 = vmatpush.msra.mxu0 %v1922
        %1932 = vmatpush.msra.mxu0 %v1921
        %1933 = vmatpush.msra.mxu0 %v1920
        %1934 = vmatpush.msra.mxu0 %v1919
        %1935 = vmatpush.msra.mxu0 %v1918
        %1936 = vmatpush.msra.mxu0 %v1917
        %1937 = vmatpush.msra.mxu0 %v1916
        %1938 = vmatpush.msra.mxu0 %v1915
        %1939 = vmatpush.msra.mxu0 %v1914
        %1940 = vmatpush.msra.mxu0 %v1913
        %1941 = vmatpush.msra.mxu0 %v1912
        %1942 = vmatpush.msra.mxu0 %v1911
        %1943 = vmatmul.f32.gmra.mxu0 %v1909
        %v1944 = vpop.f32.mrf.mxu0
        %v1945 = vadd.f32 0.0, %v1944
        %1946 = vdwg.mxu0
        %v1947 = vadd.f32 %v1901, %v1945
        %s1948 = scalar_lea.vmem [#allocation3], 24
        %v1949 = vld [vmem:[%s1948] ss:$2 sm:$0x3]
        %v1951 = vrot.slane %v1949, 6
        %v1953 = vsel %vm1681, %v1677, %v1951
        %s1954 = scalar_lea.vmem [#allocation6], 768
        %v1955 = vld [vmem:[%s1954] sm:$0xff]
        %v1956 = vld [vmem:[%s1954 + $0x8] sm:$0xff]
        %v1957 = vld [vmem:[%s1954 + $0x10] sm:$0xff]
        %v1958 = vld [vmem:[%s1954 + $0x18] sm:$0xff]
        %v1959 = vld [vmem:[%s1954 + $0x20] sm:$0xff]
        %v1960 = vld [vmem:[%s1954 + $0x28] sm:$0xff]
        %v1961 = vld [vmem:[%s1954 + $0x30] sm:$0xff]
        %v1962 = vld [vmem:[%s1954 + $0x38] sm:$0xff]
        %v1963 = vld [vmem:[%s1954 + $0x40] sm:$0xff]
        %v1964 = vld [vmem:[%s1954 + $0x48] sm:$0xff]
        %v1965 = vld [vmem:[%s1954 + $0x50] sm:$0xff]
        %v1966 = vld [vmem:[%s1954 + $0x58] sm:$0xff]
        %v1967 = vld [vmem:[%s1954 + $0x60] sm:$0xff]
        %v1968 = vld [vmem:[%s1954 + $0x68] sm:$0xff]
        %v1969 = vld [vmem:[%s1954 + $0x70] sm:$0xff]
        %v1970 = vld [vmem:[%s1954 + $0x78] sm:$0xff]
        %1971 = vmatpush.msra.mxu0 %v1970
        %1972 = vmatpush.msra.mxu0 %v1969
        %1973 = vmatpush.msra.mxu0 %v1968
        %1974 = vmatpush.msra.mxu0 %v1967
        %1975 = vmatpush.msra.mxu0 %v1966
        %1976 = vmatpush.msra.mxu0 %v1965
        %1977 = vmatpush.msra.mxu0 %v1964
        %1978 = vmatpush.msra.mxu0 %v1963
        %1979 = vmatpush.msra.mxu0 %v1962
        %1980 = vmatpush.msra.mxu0 %v1961
        %1981 = vmatpush.msra.mxu0 %v1960
        %1982 = vmatpush.msra.mxu0 %v1959
        %1983 = vmatpush.msra.mxu0 %v1958
        %1984 = vmatpush.msra.mxu0 %v1957
        %1985 = vmatpush.msra.mxu0 %v1956
        %1986 = vmatpush.msra.mxu0 %v1955
        %1987 = vmatmul.f32.gmra.mxu0 %v1953
        %v1988 = vpop.f32.mrf.mxu0
        %v1989 = vadd.f32 0.0, %v1988
        %1990 = vdwg.mxu0
        %v1991 = vadd.f32 %v1947, %v1989
        %s1992 = scalar_lea.vmem [#allocation3], 25
        %v1993 = vld [vmem:[%s1992] ss:$2 sm:$0x3]
        %v1995 = vrot.slane %v1993, 6
        %v1997 = vsel %vm1681, %v1702, %v1995
        %s1998 = scalar_lea.vmem [#allocation6], 896
        %v1999 = vld [vmem:[%s1998] sm:$0xff]
        %v2000 = vld [vmem:[%s1998 + $0x8] sm:$0xff]
        %v2001 = vld [vmem:[%s1998 + $0x10] sm:$0xff]
        %v2002 = vld [vmem:[%s1998 + $0x18] sm:$0xff]
        %v2003 = vld [vmem:[%s1998 + $0x20] sm:$0xff]
        %v2004 = vld [vmem:[%s1998 + $0x28] sm:$0xff]
        %v2005 = vld [vmem:[%s1998 + $0x30] sm:$0xff]
        %v2006 = vld [vmem:[%s1998 + $0x38] sm:$0xff]
        %v2007 = vld [vmem:[%s1998 + $0x40] sm:$0xff]
        %v2008 = vld [vmem:[%s1998 + $0x48] sm:$0xff]
        %v2009 = vld [vmem:[%s1998 + $0x50] sm:$0xff]
        %v2010 = vld [vmem:[%s1998 + $0x58] sm:$0xff]
        %v2011 = vld [vmem:[%s1998 + $0x60] sm:$0xff]
        %v2012 = vld [vmem:[%s1998 + $0x68] sm:$0xff]
        %v2013 = vld [vmem:[%s1998 + $0x70] sm:$0xff]
        %v2014 = vld [vmem:[%s1998 + $0x78] sm:$0xff]
        %2015 = vmatpush.msra.mxu0 %v2014
        %2016 = vmatpush.msra.mxu0 %v2013
        %2017 = vmatpush.msra.mxu0 %v2012
        %2018 = vmatpush.msra.mxu0 %v2011
        %2019 = vmatpush.msra.mxu0 %v2010
        %2020 = vmatpush.msra.mxu0 %v2009
        %2021 = vmatpush.msra.mxu0 %v2008
        %2022 = vmatpush.msra.mxu0 %v2007
        %2023 = vmatpush.msra.mxu0 %v2006
        %2024 = vmatpush.msra.mxu0 %v2005
        %2025 = vmatpush.msra.mxu0 %v2004
        %2026 = vmatpush.msra.mxu0 %v2003
        %2027 = vmatpush.msra.mxu0 %v2002
        %2028 = vmatpush.msra.mxu0 %v2001
        %2029 = vmatpush.msra.mxu0 %v2000
        %2030 = vmatpush.msra.mxu0 %v1999
        %2031 = vmatmul.f32.gmra.mxu0 %v1997
        %v2032 = vpop.f32.mrf.mxu0
        %v2033 = vadd.f32 0.0, %v2032
        %2034 = vdwg.mxu0
        %v2035 = vadd.f32 %v1991, %v2033
        %s2036 = scalar_lea.vmem [#allocation3], 26
        %v2037 = vld [vmem:[%s2036] ss:$2 sm:$0x3]
        %v2039 = vrot.slane %v2037, 6
        %v2041 = vsel %vm1681, %v1767, %v2039
        %s2042 = scalar_lea.vmem [#allocation6], 1024
        %v2043 = vld [vmem:[%s2042] sm:$0xff]
        %v2044 = vld [vmem:[%s2042 + $0x8] sm:$0xff]
        %v2045 = vld [vmem:[%s2042 + $0x10] sm:$0xff]
        %v2046 = vld [vmem:[%s2042 + $0x18] sm:$0xff]
        %v2047 = vld [vmem:[%s2042 + $0x20] sm:$0xff]
        %v2048 = vld [vmem:[%s2042 + $0x28] sm:$0xff]
        %v2049 = vld [vmem:[%s2042 + $0x30] sm:$0xff]
        %v2050 = vld [vmem:[%s2042 + $0x38] sm:$0xff]
        %v2051 = vld [vmem:[%s2042 + $0x40] sm:$0xff]
        %v2052 = vld [vmem:[%s2042 + $0x48] sm:$0xff]
        %v2053 = vld [vmem:[%s2042 + $0x50] sm:$0xff]
        %v2054 = vld [vmem:[%s2042 + $0x58] sm:$0xff]
        %v2055 = vld [vmem:[%s2042 + $0x60] sm:$0xff]
        %v2056 = vld [vmem:[%s2042 + $0x68] sm:$0xff]
        %v2057 = vld [vmem:[%s2042 + $0x70] sm:$0xff]
        %v2058 = vld [vmem:[%s2042 + $0x78] sm:$0xff]
        %2059 = vmatpush.msra.mxu0 %v2058
        %2060 = vmatpush.msra.mxu0 %v2057
        %2061 = vmatpush.msra.mxu0 %v2056
        %2062 = vmatpush.msra.mxu0 %v2055
        %2063 = vmatpush.msra.mxu0 %v2054
        %2064 = vmatpush.msra.mxu0 %v2053
        %2065 = vmatpush.msra.mxu0 %v2052
        %2066 = vmatpush.msra.mxu0 %v2051
        %2067 = vmatpush.msra.mxu0 %v2050
        %2068 = vmatpush.msra.mxu0 %v2049
        %2069 = vmatpush.msra.mxu0 %v2048
        %2070 = vmatpush.msra.mxu0 %v2047
        %2071 = vmatpush.msra.mxu0 %v2046
        %2072 = vmatpush.msra.mxu0 %v2045
        %2073 = vmatpush.msra.mxu0 %v2044
        %2074 = vmatpush.msra.mxu0 %v2043
        %2075 = vmatmul.f32.gmra.mxu0 %v2041
        %v2076 = vpop.f32.mrf.mxu0
        %v2077 = vadd.f32 0.0, %v2076
        %2078 = vdwg.mxu0
        %v2079 = vadd.f32 %v2035, %v2077
        %v2081 = vperm.slane %v1674, 0
        %v2083 = vadd.f32 %v2079, %v2081
        %vm2084 = vcmp.ge.f32.partialorder %v2083, 0.0
        %v2085 = vmul.f32 %v2083, 0.01
        %v2086 = vsel %vm2084, %v2083, %v2085
        %2087 = vst [vmem:[#allocation4 + $0x5] sm:$0x3] %v2086
        %2088 = vst [vmem:[#allocation4 + $0x7] sm:$0xc] %v2086
        %2089 = vst [vmem:[#allocation5] sm:$0xf] 0.0
        %2090 = vst [vmem:[#allocation5 + $0x5] sm:$0xf] 0.0
        %v2091 = vld [vmem:[%s8] sm:$0x1]
        %v2092 = vld [vmem:[#allocation4] sm:$0x1]
        %v2093 = vld [vmem:[#allocation9] sm:$0xff]
        %v2094 = vld [vmem:[#allocation9 + $0x8] sm:$0xff]
        %v2095 = vld [vmem:[#allocation9 + $0x10] sm:$0xff]
        %v2096 = vld [vmem:[#allocation9 + $0x18] sm:$0xff]
        %v2097 = vld [vmem:[#allocation9 + $0x20] sm:$0xff]
        %v2098 = vld [vmem:[#allocation9 + $0x28] sm:$0xff]
        %v2099 = vld [vmem:[#allocation9 + $0x30] sm:$0xff]
        %v2100 = vld [vmem:[#allocation9 + $0x38] sm:$0xff]
        %v2101 = vld [vmem:[#allocation9 + $0x40] sm:$0xff]
        %v2102 = vld [vmem:[#allocation9 + $0x48] sm:$0xff]
        %v2103 = vld [vmem:[#allocation9 + $0x50] sm:$0xff]
        %v2104 = vld [vmem:[#allocation9 + $0x58] sm:$0xff]
        %v2105 = vld [vmem:[#allocation9 + $0x60] sm:$0xff]
        %v2106 = vld [vmem:[#allocation9 + $0x68] sm:$0xff]
        %v2107 = vld [vmem:[#allocation9 + $0x70] sm:$0xff]
        %v2108 = vld [vmem:[#allocation9 + $0x78] sm:$0xff]
        %v2109 = vld [vmem:[#allocation4 + $0x1] sm:$0x1]
        %s2110 = scalar_lea.vmem [#allocation9], 128
        %v2111 = vld [vmem:[%s2110] sm:$0xff]
        %v2112 = vld [vmem:[%s2110 + $0x8] sm:$0xff]
        %v2113 = vld [vmem:[%s2110 + $0x10] sm:$0xff]
        %v2114 = vld [vmem:[%s2110 + $0x18] sm:$0xff]
        %v2115 = vld [vmem:[%s2110 + $0x20] sm:$0xff]
        %v2116 = vld [vmem:[%s2110 + $0x28] sm:$0xff]
        %v2117 = vld [vmem:[%s2110 + $0x30] sm:$0xff]
        %v2118 = vld [vmem:[%s2110 + $0x38] sm:$0xff]
        %v2119 = vld [vmem:[%s2110 + $0x40] sm:$0xff]
        %v2120 = vld [vmem:[%s2110 + $0x48] sm:$0xff]
        %v2121 = vld [vmem:[%s2110 + $0x50] sm:$0xff]
        %v2122 = vld [vmem:[%s2110 + $0x58] sm:$0xff]
        %v2123 = vld [vmem:[%s2110 + $0x60] sm:$0xff]
        %v2124 = vld [vmem:[%s2110 + $0x68] sm:$0xff]
        %v2125 = vld [vmem:[%s2110 + $0x70] sm:$0xff]
        %v2126 = vld [vmem:[%s2110 + $0x78] sm:$0xff]
        %2127 = vmatpush.msra.mxu0 %v2126
        %2128 = vmatpush.msra.mxu0 %v2125
        %2129 = vmatpush.msra.mxu0 %v2124
        %2130 = vmatpush.msra.mxu0 %v2123
        %2131 = vmatpush.msra.mxu0 %v2122
        %2132 = vmatpush.msra.mxu0 %v2121
        %2133 = vmatpush.msra.mxu0 %v2120
        %2134 = vmatpush.msra.mxu0 %v2119
        %2135 = vmatpush.msra.mxu0 %v2118
        %2136 = vmatpush.msra.mxu0 %v2117
        %2137 = vmatpush.msra.mxu0 %v2116
        %2138 = vmatpush.msra.mxu0 %v2115
        %2139 = vmatpush.msra.mxu0 %v2114
        %2140 = vmatpush.msra.mxu0 %v2113
        %2141 = vmatpush.msra.mxu0 %v2112
        %2142 = vmatpush.msra.mxu0 %v2111
        %2143 = vmatmul.f32.gmra.mxu0 %v2109
        %v2144 = vpop.f32.mrf.mxu0
        %v2145 = vadd.f32 0.0, %v2144
        %2146 = vdwg.mxu0
        %2147 = vmatpush.msra.mxu0 %v2108
        %2148 = vmatpush.msra.mxu0 %v2107
        %2149 = vmatpush.msra.mxu0 %v2106
        %2150 = vmatpush.msra.mxu0 %v2105
        %2151 = vmatpush.msra.mxu0 %v2104
        %2152 = vmatpush.msra.mxu0 %v2103
        %2153 = vmatpush.msra.mxu0 %v2102
        %2154 = vmatpush.msra.mxu0 %v2101
        %2155 = vmatpush.msra.mxu0 %v2100
        %2156 = vmatpush.msra.mxu0 %v2099
        %2157 = vmatpush.msra.mxu0 %v2098
        %2158 = vmatpush.msra.mxu0 %v2097
        %2159 = vmatpush.msra.mxu0 %v2096
        %2160 = vmatpush.msra.mxu0 %v2095
        %2161 = vmatpush.msra.mxu0 %v2094
        %2162 = vmatpush.msra.mxu0 %v2093
        %2163 = vmatmul.f32.gmra.mxu0 %v2092
        %v2164 = vpop.f32.mrf.mxu0
        %v2165 = vadd.f32 %v2145, %v2164
        %2166 = vdwg.mxu0
        %v2167 = vld [vmem:[#allocation4 + $0x2] sm:$0x1]
        %s2168 = scalar_lea.vmem [#allocation9], 256
        %v2169 = vld [vmem:[%s2168] sm:$0xff]
        %v2170 = vld [vmem:[%s2168 + $0x8] sm:$0xff]
        %v2171 = vld [vmem:[%s2168 + $0x10] sm:$0xff]
        %v2172 = vld [vmem:[%s2168 + $0x18] sm:$0xff]
        %v2173 = vld [vmem:[%s2168 + $0x20] sm:$0xff]
        %v2174 = vld [vmem:[%s2168 + $0x28] sm:$0xff]
        %v2175 = vld [vmem:[%s2168 + $0x30] sm:$0xff]
        %v2176 = vld [vmem:[%s2168 + $0x38] sm:$0xff]
        %v2177 = vld [vmem:[%s2168 + $0x40] sm:$0xff]
        %v2178 = vld [vmem:[%s2168 + $0x48] sm:$0xff]
        %v2179 = vld [vmem:[%s2168 + $0x50] sm:$0xff]
        %v2180 = vld [vmem:[%s2168 + $0x58] sm:$0xff]
        %v2181 = vld [vmem:[%s2168 + $0x60] sm:$0xff]
        %v2182 = vld [vmem:[%s2168 + $0x68] sm:$0xff]
        %v2183 = vld [vmem:[%s2168 + $0x70] sm:$0xff]
        %v2184 = vld [vmem:[%s2168 + $0x78] sm:$0xff]
        %2185 = vmatpush.msra.mxu0 %v2184
        %2186 = vmatpush.msra.mxu0 %v2183
        %2187 = vmatpush.msra.mxu0 %v2182
        %2188 = vmatpush.msra.mxu0 %v2181
        %2189 = vmatpush.msra.mxu0 %v2180
        %2190 = vmatpush.msra.mxu0 %v2179
        %2191 = vmatpush.msra.mxu0 %v2178
        %2192 = vmatpush.msra.mxu0 %v2177
        %2193 = vmatpush.msra.mxu0 %v2176
        %2194 = vmatpush.msra.mxu0 %v2175
        %2195 = vmatpush.msra.mxu0 %v2174
        %2196 = vmatpush.msra.mxu0 %v2173
        %2197 = vmatpush.msra.mxu0 %v2172
        %2198 = vmatpush.msra.mxu0 %v2171
        %2199 = vmatpush.msra.mxu0 %v2170
        %2200 = vmatpush.msra.mxu0 %v2169
        %2201 = vmatmul.f32.gmra.mxu0 %v2167
        %v2202 = vpop.f32.mrf.mxu0
        %v2203 = vadd.f32 0.0, %v2202
        %2204 = vdwg.mxu0
        %v2205 = vadd.f32 %v2165, %v2203
        %v2206 = vld [vmem:[#allocation4 + $0x4] sm:$0x1]
        %s2207 = scalar_lea.vmem [#allocation9], 384
        %v2208 = vld [vmem:[%s2207] sm:$0xff]
        %v2209 = vld [vmem:[%s2207 + $0x8] sm:$0xff]
        %v2210 = vld [vmem:[%s2207 + $0x10] sm:$0xff]
        %v2211 = vld [vmem:[%s2207 + $0x18] sm:$0xff]
        %v2212 = vld [vmem:[%s2207 + $0x20] sm:$0xff]
        %v2213 = vld [vmem:[%s2207 + $0x28] sm:$0xff]
        %v2214 = vld [vmem:[%s2207 + $0x30] sm:$0xff]
        %v2215 = vld [vmem:[%s2207 + $0x38] sm:$0xff]
        %v2216 = vld [vmem:[%s2207 + $0x40] sm:$0xff]
        %v2217 = vld [vmem:[%s2207 + $0x48] sm:$0xff]
        %v2218 = vld [vmem:[%s2207 + $0x50] sm:$0xff]
        %v2219 = vld [vmem:[%s2207 + $0x58] sm:$0xff]
        %v2220 = vld [vmem:[%s2207 + $0x60] sm:$0xff]
        %v2221 = vld [vmem:[%s2207 + $0x68] sm:$0xff]
        %v2222 = vld [vmem:[%s2207 + $0x70] sm:$0xff]
        %v2223 = vld [vmem:[%s2207 + $0x78] sm:$0xff]
        %2224 = vmatpush.msra.mxu0 %v2223
        %2225 = vmatpush.msra.mxu0 %v2222
        %2226 = vmatpush.msra.mxu0 %v2221
        %2227 = vmatpush.msra.mxu0 %v2220
        %2228 = vmatpush.msra.mxu0 %v2219
        %2229 = vmatpush.msra.mxu0 %v2218
        %2230 = vmatpush.msra.mxu0 %v2217
        %2231 = vmatpush.msra.mxu0 %v2216
        %2232 = vmatpush.msra.mxu0 %v2215
        %2233 = vmatpush.msra.mxu0 %v2214
        %2234 = vmatpush.msra.mxu0 %v2213
        %2235 = vmatpush.msra.mxu0 %v2212
        %2236 = vmatpush.msra.mxu0 %v2211
        %2237 = vmatpush.msra.mxu0 %v2210
        %2238 = vmatpush.msra.mxu0 %v2209
        %2239 = vmatpush.msra.mxu0 %v2208
        %2240 = vmatmul.f32.gmra.mxu0 %v2206
        %v2241 = vpop.f32.mrf.mxu0
        %v2242 = vadd.f32 0.0, %v2241
        %2243 = vdwg.mxu0
        %v2244 = vadd.f32 %v2205, %v2242
        %v2245 = vld [vmem:[#allocation4 + $0x5] sm:$0x1]
        %s2246 = scalar_lea.vmem [#allocation9], 512
        %v2247 = vld [vmem:[%s2246] sm:$0xff]
        %v2248 = vld [vmem:[%s2246 + $0x8] sm:$0xff]
        %v2249 = vld [vmem:[%s2246 + $0x10] sm:$0xff]
        %v2250 = vld [vmem:[%s2246 + $0x18] sm:$0xff]
        %v2251 = vld [vmem:[%s2246 + $0x20] sm:$0xff]
        %v2252 = vld [vmem:[%s2246 + $0x28] sm:$0xff]
        %v2253 = vld [vmem:[%s2246 + $0x30] sm:$0xff]
        %v2254 = vld [vmem:[%s2246 + $0x38] sm:$0xff]
        %v2255 = vld [vmem:[%s2246 + $0x40] sm:$0xff]
        %v2256 = vld [vmem:[%s2246 + $0x48] sm:$0xff]
        %v2257 = vld [vmem:[%s2246 + $0x50] sm:$0xff]
        %v2258 = vld [vmem:[%s2246 + $0x58] sm:$0xff]
        %v2259 = vld [vmem:[%s2246 + $0x60] sm:$0xff]
        %v2260 = vld [vmem:[%s2246 + $0x68] sm:$0xff]
        %v2261 = vld [vmem:[%s2246 + $0x70] sm:$0xff]
        %v2262 = vld [vmem:[%s2246 + $0x78] sm:$0xff]
        %2263 = vmatpush.msra.mxu0 %v2262
        %2264 = vmatpush.msra.mxu0 %v2261
        %2265 = vmatpush.msra.mxu0 %v2260
        %2266 = vmatpush.msra.mxu0 %v2259
        %2267 = vmatpush.msra.mxu0 %v2258
        %2268 = vmatpush.msra.mxu0 %v2257
        %2269 = vmatpush.msra.mxu0 %v2256
        %2270 = vmatpush.msra.mxu0 %v2255
        %2271 = vmatpush.msra.mxu0 %v2254
        %2272 = vmatpush.msra.mxu0 %v2253
        %2273 = vmatpush.msra.mxu0 %v2252
        %2274 = vmatpush.msra.mxu0 %v2251
        %2275 = vmatpush.msra.mxu0 %v2250
        %2276 = vmatpush.msra.mxu0 %v2249
        %2277 = vmatpush.msra.mxu0 %v2248
        %2278 = vmatpush.msra.mxu0 %v2247
        %2279 = vmatmul.f32.gmra.mxu0 %v2245
        %v2280 = vpop.f32.mrf.mxu0
        %v2281 = vadd.f32 0.0, %v2280
        %2282 = vdwg.mxu0
        %v2283 = vadd.f32 %v2244, %v2281
        %v2284 = vld [vmem:[#allocation4 + $0x6] sm:$0x1]
        %s2285 = scalar_lea.vmem [#allocation9], 640
        %v2286 = vld [vmem:[%s2285] sm:$0xff]
        %v2287 = vld [vmem:[%s2285 + $0x8] sm:$0xff]
        %v2288 = vld [vmem:[%s2285 + $0x10] sm:$0xff]
        %v2289 = vld [vmem:[%s2285 + $0x18] sm:$0xff]
        %v2290 = vld [vmem:[%s2285 + $0x20] sm:$0xff]
        %v2291 = vld [vmem:[%s2285 + $0x28] sm:$0xff]
        %v2292 = vld [vmem:[%s2285 + $0x30] sm:$0xff]
        %v2293 = vld [vmem:[%s2285 + $0x38] sm:$0xff]
        %v2294 = vld [vmem:[%s2285 + $0x40] sm:$0xff]
        %v2295 = vld [vmem:[%s2285 + $0x48] sm:$0xff]
        %v2296 = vld [vmem:[%s2285 + $0x50] sm:$0xff]
        %v2297 = vld [vmem:[%s2285 + $0x58] sm:$0xff]
        %v2298 = vld [vmem:[%s2285 + $0x60] sm:$0xff]
        %v2299 = vld [vmem:[%s2285 + $0x68] sm:$0xff]
        %v2300 = vld [vmem:[%s2285 + $0x70] sm:$0xff]
        %v2301 = vld [vmem:[%s2285 + $0x78] sm:$0xff]
        %2302 = vmatpush.msra.mxu0 %v2301
        %2303 = vmatpush.msra.mxu0 %v2300
        %2304 = vmatpush.msra.mxu0 %v2299
        %2305 = vmatpush.msra.mxu0 %v2298
        %2306 = vmatpush.msra.mxu0 %v2297
        %2307 = vmatpush.msra.mxu0 %v2296
        %2308 = vmatpush.msra.mxu0 %v2295
        %2309 = vmatpush.msra.mxu0 %v2294
        %2310 = vmatpush.msra.mxu0 %v2293
        %2311 = vmatpush.msra.mxu0 %v2292
        %2312 = vmatpush.msra.mxu0 %v2291
        %2313 = vmatpush.msra.mxu0 %v2290
        %2314 = vmatpush.msra.mxu0 %v2289
        %2315 = vmatpush.msra.mxu0 %v2288
        %2316 = vmatpush.msra.mxu0 %v2287
        %2317 = vmatpush.msra.mxu0 %v2286
        %2318 = vmatmul.f32.gmra.mxu0 %v2284
        %v2319 = vpop.f32.mrf.mxu0
        %v2320 = vadd.f32 0.0, %v2319
        %2321 = vdwg.mxu0
        %v2322 = vadd.f32 %v2283, %v2320
        %v2323 = vld [vmem:[#allocation4 + $0x8] sm:$0x1]
        %s2324 = scalar_lea.vmem [#allocation9], 768
        %v2325 = vld [vmem:[%s2324] sm:$0xff]
        %v2326 = vld [vmem:[%s2324 + $0x8] sm:$0xff]
        %v2327 = vld [vmem:[%s2324 + $0x10] sm:$0xff]
        %v2328 = vld [vmem:[%s2324 + $0x18] sm:$0xff]
        %v2329 = vld [vmem:[%s2324 + $0x20] sm:$0xff]
        %v2330 = vld [vmem:[%s2324 + $0x28] sm:$0xff]
        %v2331 = vld [vmem:[%s2324 + $0x30] sm:$0xff]
        %v2332 = vld [vmem:[%s2324 + $0x38] sm:$0xff]
        %v2333 = vld [vmem:[%s2324 + $0x40] sm:$0xff]
        %v2334 = vld [vmem:[%s2324 + $0x48] sm:$0xff]
        %v2335 = vld [vmem:[%s2324 + $0x50] sm:$0xff]
        %v2336 = vld [vmem:[%s2324 + $0x58] sm:$0xff]
        %v2337 = vld [vmem:[%s2324 + $0x60] sm:$0xff]
        %v2338 = vld [vmem:[%s2324 + $0x68] sm:$0xff]
        %v2339 = vld [vmem:[%s2324 + $0x70] sm:$0xff]
        %v2340 = vld [vmem:[%s2324 + $0x78] sm:$0xff]
        %2341 = vmatpush.msra.mxu0 %v2340
        %2342 = vmatpush.msra.mxu0 %v2339
        %2343 = vmatpush.msra.mxu0 %v2338
        %2344 = vmatpush.msra.mxu0 %v2337
        %2345 = vmatpush.msra.mxu0 %v2336
        %2346 = vmatpush.msra.mxu0 %v2335
        %2347 = vmatpush.msra.mxu0 %v2334
        %2348 = vmatpush.msra.mxu0 %v2333
        %2349 = vmatpush.msra.mxu0 %v2332
        %2350 = vmatpush.msra.mxu0 %v2331
        %2351 = vmatpush.msra.mxu0 %v2330
        %2352 = vmatpush.msra.mxu0 %v2329
        %2353 = vmatpush.msra.mxu0 %v2328
        %2354 = vmatpush.msra.mxu0 %v2327
        %2355 = vmatpush.msra.mxu0 %v2326
        %2356 = vmatpush.msra.mxu0 %v2325
        %2357 = vmatmul.f32.gmra.mxu0 %v2323
        %v2358 = vpop.f32.mrf.mxu0
        %v2359 = vadd.f32 0.0, %v2358
        %2360 = vdwg.mxu0
        %v2361 = vadd.f32 %v2322, %v2359
        %v2362 = vld [vmem:[#allocation4 + $0x9] sm:$0x1]
        %s2363 = scalar_lea.vmem [#allocation9], 896
        %v2364 = vld [vmem:[%s2363] sm:$0xff]
        %v2365 = vld [vmem:[%s2363 + $0x8] sm:$0xff]
        %v2366 = vld [vmem:[%s2363 + $0x10] sm:$0xff]
        %v2367 = vld [vmem:[%s2363 + $0x18] sm:$0xff]
        %v2368 = vld [vmem:[%s2363 + $0x20] sm:$0xff]
        %v2369 = vld [vmem:[%s2363 + $0x28] sm:$0xff]
        %v2370 = vld [vmem:[%s2363 + $0x30] sm:$0xff]
        %v2371 = vld [vmem:[%s2363 + $0x38] sm:$0xff]
        %v2372 = vld [vmem:[%s2363 + $0x40] sm:$0xff]
        %v2373 = vld [vmem:[%s2363 + $0x48] sm:$0xff]
        %v2374 = vld [vmem:[%s2363 + $0x50] sm:$0xff]
        %v2375 = vld [vmem:[%s2363 + $0x58] sm:$0xff]
        %v2376 = vld [vmem:[%s2363 + $0x60] sm:$0xff]
        %v2377 = vld [vmem:[%s2363 + $0x68] sm:$0xff]
        %v2378 = vld [vmem:[%s2363 + $0x70] sm:$0xff]
        %v2379 = vld [vmem:[%s2363 + $0x78] sm:$0xff]
        %2380 = vmatpush.msra.mxu0 %v2379
        %2381 = vmatpush.msra.mxu0 %v2378
        %2382 = vmatpush.msra.mxu0 %v2377
        %2383 = vmatpush.msra.mxu0 %v2376
        %2384 = vmatpush.msra.mxu0 %v2375
        %2385 = vmatpush.msra.mxu0 %v2374
        %2386 = vmatpush.msra.mxu0 %v2373
        %2387 = vmatpush.msra.mxu0 %v2372
        %2388 = vmatpush.msra.mxu0 %v2371
        %2389 = vmatpush.msra.mxu0 %v2370
        %2390 = vmatpush.msra.mxu0 %v2369
        %2391 = vmatpush.msra.mxu0 %v2368
        %2392 = vmatpush.msra.mxu0 %v2367
        %2393 = vmatpush.msra.mxu0 %v2366
        %2394 = vmatpush.msra.mxu0 %v2365
        %2395 = vmatpush.msra.mxu0 %v2364
        %2396 = vmatmul.f32.gmra.mxu0 %v2362
        %v2397 = vpop.f32.mrf.mxu0
        %v2398 = vadd.f32 0.0, %v2397
        %2399 = vdwg.mxu0
        %v2400 = vadd.f32 %v2361, %v2398
        %v2401 = vld [vmem:[#allocation4 + $0xa] sm:$0x1]
        %s2402 = scalar_lea.vmem [#allocation9], 1024
        %v2403 = vld [vmem:[%s2402] sm:$0xff]
        %v2404 = vld [vmem:[%s2402 + $0x8] sm:$0xff]
        %v2405 = vld [vmem:[%s2402 + $0x10] sm:$0xff]
        %v2406 = vld [vmem:[%s2402 + $0x18] sm:$0xff]
        %v2407 = vld [vmem:[%s2402 + $0x20] sm:$0xff]
        %v2408 = vld [vmem:[%s2402 + $0x28] sm:$0xff]
        %v2409 = vld [vmem:[%s2402 + $0x30] sm:$0xff]
        %v2410 = vld [vmem:[%s2402 + $0x38] sm:$0xff]
        %v2411 = vld [vmem:[%s2402 + $0x40] sm:$0xff]
        %v2412 = vld [vmem:[%s2402 + $0x48] sm:$0xff]
        %v2413 = vld [vmem:[%s2402 + $0x50] sm:$0xff]
        %v2414 = vld [vmem:[%s2402 + $0x58] sm:$0xff]
        %v2415 = vld [vmem:[%s2402 + $0x60] sm:$0xff]
        %v2416 = vld [vmem:[%s2402 + $0x68] sm:$0xff]
        %v2417 = vld [vmem:[%s2402 + $0x70] sm:$0xff]
        %v2418 = vld [vmem:[%s2402 + $0x78] sm:$0xff]
        %2419 = vmatpush.msra.mxu0 %v2418
        %2420 = vmatpush.msra.mxu0 %v2417
        %2421 = vmatpush.msra.mxu0 %v2416
        %2422 = vmatpush.msra.mxu0 %v2415
        %2423 = vmatpush.msra.mxu0 %v2414
        %2424 = vmatpush.msra.mxu0 %v2413
        %2425 = vmatpush.msra.mxu0 %v2412
        %2426 = vmatpush.msra.mxu0 %v2411
        %2427 = vmatpush.msra.mxu0 %v2410
        %2428 = vmatpush.msra.mxu0 %v2409
        %2429 = vmatpush.msra.mxu0 %v2408
        %2430 = vmatpush.msra.mxu0 %v2407
        %2431 = vmatpush.msra.mxu0 %v2406
        %2432 = vmatpush.msra.mxu0 %v2405
        %2433 = vmatpush.msra.mxu0 %v2404
        %2434 = vmatpush.msra.mxu0 %v2403
        %2435 = vmatmul.f32.gmra.mxu0 %v2401
        %v2436 = vpop.f32.mrf.mxu0
        %v2437 = vadd.f32 0.0, %v2436
        %2438 = vdwg.mxu0
        %v2439 = vadd.f32 %v2400, %v2437
        %v2440 = vadd.f32 %v2439, %v2091
        %vm2441 = vcmp.ge.f32.partialorder %v2440, 0.0
        %v2442 = vmul.f32 %v2440, 0.01
        %v2443 = vsel %vm2441, %v2440, %v2442
        %2444 = vst [vmem:[#allocation5 + $0x4] sm:$0x1] %v2443
        %v2445 = vld [vmem:[#allocation5 + $0x4] sm:$0x1]
        %v2446 = vld [vmem:[%s9] sm:$0xff]
        %v2447 = vld [vmem:[%s9 + $0x8] sm:$0xff]
        %v2448 = vld [vmem:[%s9 + $0x10] sm:$0xff]
        %v2449 = vld [vmem:[%s9 + $0x18] sm:$0xff]
        %v2450 = vld [vmem:[%s9 + $0x20] sm:$0xff]
        %v2451 = vld [vmem:[%s9 + $0x28] sm:$0xff]
        %v2452 = vld [vmem:[%s9 + $0x30] sm:$0xff]
        %v2453 = vld [vmem:[%s9 + $0x38] sm:$0xff]
        %v2454 = vld [vmem:[%s9 + $0x40] sm:$0xff]
        %v2455 = vld [vmem:[%s9 + $0x48] sm:$0xff]
        %v2456 = vld [vmem:[%s9 + $0x50] sm:$0xff]
        %v2457 = vld [vmem:[%s9 + $0x58] sm:$0xff]
        %v2458 = vld [vmem:[%s9 + $0x60] sm:$0xff]
        %v2459 = vld [vmem:[%s9 + $0x68] sm:$0xff]
        %v2460 = vld [vmem:[%s9 + $0x70] sm:$0xff]
        %v2461 = vld [vmem:[%s9 + $0x78] sm:$0xff]
        %v2462 = vld [vmem:[%s10] sm:$0x1]
        %2463 = vmatpush.msra.mxu0 %v2461
        %2464 = vmatpush.msra.mxu0 %v2460
        %2465 = vmatpush.msra.mxu0 %v2459
        %2466 = vmatpush.msra.mxu0 %v2458
        %2467 = vmatpush.msra.mxu0 %v2457
        %2468 = vmatpush.msra.mxu0 %v2456
        %2469 = vmatpush.msra.mxu0 %v2455
        %2470 = vmatpush.msra.mxu0 %v2454
        %2471 = vmatpush.msra.mxu0 %v2453
        %2472 = vmatpush.msra.mxu0 %v2452
        %2473 = vmatpush.msra.mxu0 %v2451
        %2474 = vmatpush.msra.mxu0 %v2450
        %2475 = vmatpush.msra.mxu0 %v2449
        %2476 = vmatpush.msra.mxu0 %v2448
        %2477 = vmatpush.msra.mxu0 %v2447
        %2478 = vmatpush.msra.mxu0 %v2446
        %2479 = vmatmul.f32.gmra.mxu0 %v2445
        %v2480 = vpop.f32.mrf.mxu0
        %v2481 = vadd.f32 %v2462, %v2480
        %2482 = vdwg.mxu0
        %2483 = vst [vmem:[%s412] sm:$0x1] %v2481
        %s2484 = sand.u32 %s271, 1
        %s2485 = scalar_lea.sflag [#allocation8], %s2484
        %s2486 = sand.u32 %s271, 1
        %s2487 = scalar_lea.vmem [#allocation11], %s2486
        // Predicated region
        $region73: #{gradual_style_block_forward.1} parent=63 // pred_check
          %p2488 = pneg %p281
        $region74: #{gradual_style_block_forward.1} parent=63 // pred_check_branch
          %2490 = sbr.rel (%p2488) target = $region76
        $region75: #{gradual_style_block_forward.1} parent=63 // pred_region
          %2492 = vsyncadd %s2485, 0
          %s2493 = scalar_lea.hbm %s11, %s27
          %s2495 = sshll.u32 %s2487, 4
          %s2496 = int_to_ptr.vmem [resolvable:$true] %s2495
          %s2497 = sshll.u32 %s2493, 4
          %s2498 = int_to_ptr.hbm [resolvable:$true] %s2497
          %2500 = dma.vmem_to_hbm [thread:$0]  %s2496, 16, %s2498, %s2485
        $region76: #{gradual_style_block_forward.1} parent=63 // pred_fallthru
          _
      $region64: #{gradual_style_block_forward.1} parent=5 // pred_fallthru
        _
      %p2501 = scmp.le.s32.totalorder 2, %s22
      // Predicated region
      $region77: #{gradual_style_block_forward.1} parent=5 // pred_check
        %p2502 = pneg %p2501
      $region78: #{gradual_style_block_forward.1} parent=5 // pred_check_branch
        %2504 = sbr.rel (%p2502) target = $region80
      $region79: #{gradual_style_block_forward.1} parent=5 // pred_region
        %s2505 = ssub.s32 %s22, 2
        // Predicated region
        $region81: #{gradual_style_block_forward.1} parent=79 // pred_check
          %p2506 = pneg %p287
        $region82: #{gradual_style_block_forward.1} parent=79 // pred_check_branch
          %2508 = sbr.rel (%p2506) target = $region84
        $region83: #{gradual_style_block_forward.1} parent=79 // pred_region
          %s2509 = sand.u32 %s272, 1
          %s2510 = scalar_lea.sflag [#allocation8], %s2509
          %s2511 = sand.u32 %s272, 1
          %s2512 = scalar_lea.vmem [#allocation11], %s2511
          %2514 = dma.done %s2510, 16
        $region84: #{gradual_style_block_forward.1} parent=79 // pred_fallthru
          _
      $region80: #{gradual_style_block_forward.1} parent=5 // pred_fallthru
        _
    $region6: #{gradual_style_block_forward.1} parent=1 // loop_footer
      %s26 = sadd.s32 1, %s22
    $region7: #{gradual_style_block_forward.1} parent=1 // loop_footer_branch
      %21 = sbr.rel target = $region3
    $region8: #{gradual_style_block_forward.1} parent=1 // loop_exit
      _
    %2515 = vsyncpa [#allocation7], 1
    %s2516 = scalar_lea.sflag [#allocation7], 1
    %2517 = vsyncpa %s2516, 1
    %2518 = vsyncpa [#allocation10], 1
    %2519 = vsyncpa [#allocation8], 1
    %s2520 = scalar_lea.sflag [#allocation8], 1
    %2521 = vsyncpa %s2520, 1

</llo_original>
